<compile_context>
chip_gen: v7x
topology: tpu7x:2x2x1
jax: 0.10.0
libtpu: 0.0.40
codegen_flags: <defaults>
</compile_context>

<pallas_src>
import functools

import numpy as np
import jax
import jax.numpy as jnp
from jax.experimental import pallas as pl
from jax.experimental.pallas import tpu as pltpu


def _round_up(x, m):
    return ((x + m - 1) // m) * m


def _cdiv(a, b):
    return -(-a // b)


def _default_act_dtype():
    """bf16 activations on v6e / v7x (bf16-native EUP/VPU); f32 elsewhere (incl. v5e)."""
    try:
        kind = jax.devices()[0].device_kind.lower()
    except Exception:
        return jnp.float32
    if ("v6" in kind) or ("v7" in kind) or ("tpu7" in kind):
        return jnp.bfloat16
    return jnp.float32


def _silu(x):
    # silu(x) = x * sigmoid(x) = 0.5 * x * (1 + tanh(x/2)) : exact, single EUP transcendental.
    return 0.5 * x * (1.0 + jnp.tanh(0.5 * x))


def igr_kernel(pts_ref, center_ref, inv_ref,
               w0p_ref, w0s_ref, w0c_ref, b0_ref,
               w1_ref, b1_ref,
               w2x_ref, w2p_ref, w2s_ref, w2c_ref, b2_ref,
               w3_ref, b3_ref,
               out_ref, *, act_dtype):
    pts = pts_ref[...].astype(jnp.float32)                 # (3, TN)  points on lanes
    scaled = (pts - center_ref[...]) * inv_ref[...]        # (3,1) lane-broadcast -> (3, TN)

    # inside_bbox: sum((s<=1) + (s>=-1), coord axis) == 6   (same arithmetic as torch, f32)
    ind = (scaled <= 1.0).astype(jnp.float32) + (scaled >= -1.0).astype(jnp.float32)
    inside = jnp.sum(ind, axis=0, keepdims=True) == 6.0    # (1, TN)

    # run_approx (output_dim == 1): ||p||_2 - 0.045   (f32)
    dist_approx = jnp.sqrt(jnp.sum(pts * pts, axis=0, keepdims=True)) - 0.045   # (1, TN)

    # embedding pieces: [scaled, sin(pi*scaled), cos(pi*scaled)]
    # (sin/cos evaluated on the f32 angle for accuracy, results cast to the activation dtype)
    sc_a = scaled.astype(act_dtype)
    sin_e = jnp.sin(jnp.pi * scaled).astype(act_dtype)
    cos_e = jnp.cos(jnp.pi * scaled).astype(act_dtype)

    f32 = jnp.float32

    # layer 0: silu(W0^T @ embed + b0)  (W0^T split into three (H,3) blocks)
    h = (jnp.dot(w0p_ref[...], sc_a, preferred_element_type=f32)
         + jnp.dot(w0s_ref[...], sin_e, preferred_element_type=f32)
         + jnp.dot(w0c_ref[...], cos_e, preferred_element_type=f32)
         + b0_ref[...])
    h = _silu(h.astype(act_dtype))                          # (H, TN) in act_dtype

    # layer 1
    h = _silu((jnp.dot(w1_ref[...], h, preferred_element_type=f32)
               + b1_ref[...]).astype(act_dtype))

    # layer 2 (skip connection): the 1/sqrt(2) scale is pre-folded into the w2* blocks.
    h = (jnp.dot(w2x_ref[...], h, preferred_element_type=f32)
         + jnp.dot(w2p_ref[...], sc_a, preferred_element_type=f32)
         + jnp.dot(w2s_ref[...], sin_e, preferred_element_type=f32)
         + jnp.dot(w2c_ref[...], cos_e, preferred_element_type=f32)
         + b2_ref[...])
    h = _silu(h.astype(act_dtype))

    # layer 3 (final linear, no activation): (1, H) @ (H, TN) -> (1, TN) f32
    y = jnp.dot(w3_ref[...], h, preferred_element_type=f32) + b3_ref[...]

    # x[inside_bbox] = mlp ; elsewhere run_approx distance
    out_ref[...] = jnp.where(inside, y, dist_approx)


def igr_forward(points, params, center, inv_edge, *, tn=8192, act_dtype=None,
                transposed=False):
    """Pallas wrapper.

    points: (N, 3) f32 (module convention), or (3, N) f32 with transposed=True — the
    latter skips the only remaining non-kernel HBM pass (the transpose).
    """
    if act_dtype is None:
        act_dtype = _default_act_dtype()

    if transposed:
        assert points.shape[0] == 3, "transposed=True expects points of shape (3, N)"
        pts_t = points.astype(jnp.float32)                            # (3, N) lane-dense
        N = points.shape[1]
    else:
        assert points.shape[1] == 3, "expects points of shape (N, 3)"
        N = points.shape[0]
        pts_t = points.astype(jnp.float32).T                          # one tiny XLA transpose

    w0, b0, w1, b1, w2, b2, w3, b3 = params
    H = w1.shape[0]

    # --- host-side layout plumbing: transpose weights, fold 1/sqrt(2), column biases ---
    inv_sqrt2 = np.float32(1.0 / np.sqrt(2.0))
    w0_t = jnp.asarray(w0, jnp.float32).T                             # (H, 9)
    w0p, w0s, w0c = w0_t[:, 0:3], w0_t[:, 3:6], w0_t[:, 6:9]
    w1_t = jnp.asarray(w1, jnp.float32).T                             # (H, H)
    w2_t = jnp.asarray(w2, jnp.float32).T * inv_sqrt2                 # (H, H+9), pre-scaled
    w2x, w2p, w2s, w2c = (w2_t[:, :H], w2_t[:, H:H + 3],
                          w2_t[:, H + 3:H + 6], w2_t[:, H + 6:H + 9])
    w3_t = jnp.asarray(w3, jnp.float32).T                             # (1, H)
    # weights feed the MXU in the activation dtype; biases stay f32 (added post-dot)
    w0p = w0p.astype(act_dtype); w0s = w0s.astype(act_dtype); w0c = w0c.astype(act_dtype)
    w1_c = w1_t.astype(act_dtype)
    w2x = w2x.astype(act_dtype); w2p = w2p.astype(act_dtype)
    w2s = w2s.astype(act_dtype); w2c = w2c.astype(act_dtype)
    w3_c = w3_t.astype(act_dtype)
    b0c = jnp.asarray(b0, jnp.float32).reshape(H, 1)
    b1c = jnp.asarray(b1, jnp.float32).reshape(H, 1)
    b2c = jnp.asarray(b2, jnp.float32).reshape(H, 1)
    b3c = jnp.asarray(b3, jnp.float32).reshape(-1, 1)                 # (1, 1)
    center_c = jnp.asarray(center, jnp.float32).reshape(3, 1)
    inv_c = jnp.asarray(inv_edge, jnp.float32).reshape(3, 1)

    # --- tile size: large (amortize ~0.35 us/step), multiple of 128, capped at ~N ---
    tn = max(128, (int(tn) // 128) * 128)
    tn = min(tn, max(128, _round_up(N, 128)))
    grid_n = _cdiv(N, tn)
    # v7x megacore: prefer an even number of grid steps (>1) so the two TensorCores split
    # the point stream evenly (costs at most one extra ~0.35 us step elsewhere).
    if grid_n > 1 and grid_n % 2 == 1:
        tn_even = max(128, _round_up(_cdiv(N, grid_n + 1), 128))
        if _cdiv(N, tn_even) % 2 == 0:
            tn = tn_even
            grid_n = _cdiv(N, tn)

    # Explicit scoped-VMEM limit: keeps large tiles safe under v5e's 16 MiB default while
    # staying comfortably below every chip's physical VMEM (64 MiB on v7x).
    vmem_limit = int(min(40 * 1024 * 1024, max(20 * 1024 * 1024, 3 * 1024 * tn)))

    def full(arr):
        nd = arr.ndim
        return pl.BlockSpec(arr.shape, lambda i, _nd=nd: (0,) * _nd)

    kernel = functools.partial(igr_kernel, act_dtype=act_dtype)

    out = pl.pallas_call(
        kernel,
        out_shape=jax.ShapeDtypeStruct((1, N), jnp.float32),
        grid_spec=pltpu.PrefetchScalarGridSpec(
            num_scalar_prefetch=0,
            grid=(grid_n,),
            in_specs=[
                pl.BlockSpec((3, tn), lambda i: (0, i)),   # points tile (3, TN)
                full(center_c), full(inv_c),
                full(w0p), full(w0s), full(w0c), full(b0c),
                full(w1_c), full(b1c),
                full(w2x), full(w2p), full(w2s), full(w2c), full(b2c),
                full(w3_c), full(b3c),
            ],
            out_specs=pl.BlockSpec((1, tn), lambda i: (0, i)),
        ),
        compiler_params=pltpu.CompilerParams(
            dimension_semantics=("parallel",),
            vmem_limit_bytes=vmem_limit),
    )(pts_t, center_c, inv_c,
      w0p, w0s, w0c, b0c,
      w1_c, b1c,
      w2x, w2p, w2s, w2c, b2c,
      w3_c, b3c)

    # (1, N) -> (N, 1): contiguous reshape, essentially free.
    return out.reshape(N, 1)


def igr_forward_ref(points, params, center, inv_edge):
    """Pure-JAX f32 reference mirroring the PyTorch forward (output_dim=1, no template_sdf)."""
    w0, b0, w1, b1, w2, b2, w3, b3 = params
    scaled = (points - center) * inv_edge
    ind = (scaled <= 1.0).astype(jnp.float32) + (scaled >= -1.0).astype(jnp.float32)
    inside = jnp.sum(ind, axis=-1, keepdims=True) == 6.0
    dist = jnp.linalg.norm(points, axis=-1, keepdims=True) - 0.045
    embed = jnp.concatenate(
        [scaled, jnp.sin(jnp.pi * scaled), jnp.cos(jnp.pi * scaled)], axis=-1)
    x = jax.nn.silu(embed @ w0 + b0)
    x = jax.nn.silu(x @ w1 + b1)
    x = jnp.concatenate([x, embed], axis=-1) / np.sqrt(2.0)
    x = jax.nn.silu(x @ w2 + b2)
    x = x @ w3 + b3
    return jnp.where(inside, x, dist)


def init_params(key):
    """Geometric init matching IGRModel.__init__ (dims = [9,32,32,32,1], skip at layer 2)."""
    dims = [9, 32, 32, 32, 1]
    skip = {2}
    embedding_dim = 9
    keys = jax.random.split(key, len(dims) - 1)
    params = []
    for layer in range(len(dims) - 1):
        in_dim = dims[layer]
        out_dim = dims[layer + 1]
        if layer in skip:
            in_dim += embedding_dim
        if layer == len(dims) - 2:  # last layer
            w = (np.sqrt(np.pi) / np.sqrt(dims[layer])
                 + 1e-5 * jax.random.normal(keys[layer], (in_dim, out_dim)))
            b = jnp.full((out_dim,), -1.0)  # -radius_init
        else:
            w = (np.sqrt(2.0) / np.sqrt(out_dim)) * jax.random.normal(
                keys[layer], (in_dim, out_dim))
            b = jnp.zeros((out_dim,))
        params += [w.astype(jnp.float32), b.astype(jnp.float32)]
    return tuple(params)


if __name__ == "__main__":
    N = 1000  # deliberately not a multiple of 128 / tn: exercises partial boundary blocks
    key = jax.random.PRNGKey(0)
    kp, kw = jax.random.split(key)

    # bbox = (bbmin, bbmax)
    bbmin = jnp.array([-0.5, -0.5, -0.5], jnp.float32)
    bbmax = jnp.array([0.5, 0.5, 0.5], jnp.float32)
    center = 0.5 * (bbmin + bbmax)
    inv_edge = 2.0 / (bbmax - bbmin)

    # points span beyond the bbox so both the MLP branch and run_approx branch are exercised
    points = jax.random.uniform(kp, (N, 3), jnp.float32, minval=-0.8, maxval=0.8)
    params = init_params(kw)

    ref = igr_forward_ref(points, params, center, inv_edge)

    act_dtype = _default_act_dtype()
    # bf16 activations (v6e/v7x) need a relaxed tolerance vs. the f32 reference.
    tol = 1e-4 if act_dtype == jnp.float32 else 5e-2

    # Module-convention (N, 3) input; default large tile (single grid step at this small N).
    out = jax.block_until_ready(igr_forward(points, params, center, inv_edge))
    assert out.shape == (N, 1)
    err = float(jnp.max(jnp.abs(out - ref)))
    assert jnp.allclose(out, ref, atol=tol, rtol=tol), ("(N,3) path max_err", err)

    # Pre-transposed (3, N) fast path (no host transpose) with a small tile, so the
    # multi-step grid + even-grid nudge + partial last block are also exercised.
    out_t = jax.block_until_ready(
        igr_forward(points.T, params, center, inv_edge, tn=384, transposed=True))
    err_t = float(jnp.max(jnp.abs(out_t - ref)))
    assert jnp.allclose(out_t, ref, atol=tol, rtol=tol), ("(3,N) path max_err", err_t)

    print("KERNEL_OK")
</pallas_src>

<mosaic_0001>
module attributes {stable_mosaic.version = 11 : i64} {
  func.func @igr_kernel(%arg0: i32, %arg1: memref<3x1024xf32, #tpu.memory_space<vmem>>, %arg2: memref<3x1xf32, #tpu.memory_space<vmem>>, %arg3: memref<3x1xf32, #tpu.memory_space<vmem>>, %arg4: memref<32x3xf32, #tpu.memory_space<vmem>>, %arg5: memref<32x3xf32, #tpu.memory_space<vmem>>, %arg6: memref<32x3xf32, #tpu.memory_space<vmem>>, %arg7: memref<32x1xf32, #tpu.memory_space<vmem>>, %arg8: memref<32x32xf32, #tpu.memory_space<vmem>>, %arg9: memref<32x1xf32, #tpu.memory_space<vmem>>, %arg10: memref<32x32xf32, #tpu.memory_space<vmem>>, %arg11: memref<32x3xf32, #tpu.memory_space<vmem>>, %arg12: memref<32x3xf32, #tpu.memory_space<vmem>>, %arg13: memref<32x3xf32, #tpu.memory_space<vmem>>, %arg14: memref<32x1xf32, #tpu.memory_space<vmem>>, %arg15: memref<1x32xf32, #tpu.memory_space<vmem>>, %arg16: memref<1x1xf32, #tpu.memory_space<vmem>>, %arg17: memref<1x1024xf32, #tpu.memory_space<vmem>>) attributes {dimension_semantics = [#tpu.dimension_semantics<parallel>], iteration_bounds = array<i64: 1>, scalar_prefetch = 0 : i64, scratch_operands = 0 : i64, tpu.core_type = #tpu.core_type<tc>, window_params = [{transform_indices = @transform_0, window_bounds = array<i64: 3, 1024>}, {pipeline_mode = #tpu.pipeline_mode<synchronous>, transform_indices = @transform_1, window_bounds = array<i64: 3, 1>}, {pipeline_mode = #tpu.pipeline_mode<synchronous>, transform_indices = @transform_2, window_bounds = array<i64: 3, 1>}, {pipeline_mode = #tpu.pipeline_mode<synchronous>, transform_indices = @transform_3, window_bounds = array<i64: 32, 3>}, {pipeline_mode = #tpu.pipeline_mode<synchronous>, transform_indices = @transform_4, window_bounds = array<i64: 32, 3>}, {pipeline_mode = #tpu.pipeline_mode<synchronous>, transform_indices = @transform_5, window_bounds = array<i64: 32, 3>}, {pipeline_mode = #tpu.pipeline_mode<synchronous>, transform_indices = @transform_6, window_bounds = array<i64: 32, 1>}, {pipeline_mode = #tpu.pipeline_mode<synchronous>, transform_indices = @transform_7, window_bounds = array<i64: 32, 32>}, {pipeline_mode = #tpu.pipeline_mode<synchronous>, transform_indices = @transform_8, window_bounds = array<i64: 32, 1>}, {pipeline_mode = #tpu.pipeline_mode<synchronous>, transform_indices = @transform_9, window_bounds = array<i64: 32, 32>}, {pipeline_mode = #tpu.pipeline_mode<synchronous>, transform_indices = @transform_10, window_bounds = array<i64: 32, 3>}, {pipeline_mode = #tpu.pipeline_mode<synchronous>, transform_indices = @transform_11, window_bounds = array<i64: 32, 3>}, {pipeline_mode = #tpu.pipeline_mode<synchronous>, transform_indices = @transform_12, window_bounds = array<i64: 32, 3>}, {pipeline_mode = #tpu.pipeline_mode<synchronous>, transform_indices = @transform_13, window_bounds = array<i64: 32, 1>}, {pipeline_mode = #tpu.pipeline_mode<synchronous>, transform_indices = @transform_14, window_bounds = array<i64: 1, 32>}, {pipeline_mode = #tpu.pipeline_mode<synchronous>, transform_indices = @transform_15, window_bounds = array<i64: 1, 1>}, {transform_indices = @transform_16, window_bounds = array<i64: 1, 1024>}]} {
    %c0 = arith.constant 0 : index
    %c0_0 = arith.constant 0 : index
    %0 = vector.load %arg1[%c0, %c0_0] : memref<3x1024xf32, #tpu.memory_space<vmem>>, vector<3x1024xf32>
    %c0_1 = arith.constant 0 : index
    %c0_2 = arith.constant 0 : index
    %1 = vector.load %arg2[%c0_1, %c0_2] : memref<3x1xf32, #tpu.memory_space<vmem>>, vector<3x1xf32>
    %2 = vector.broadcast %1 : vector<3x1xf32> to vector<3x1024xf32>
    %3 = arith.subf %0, %2 : vector<3x1024xf32>
    %c0_3 = arith.constant 0 : index
    %c0_4 = arith.constant 0 : index
    %4 = vector.load %arg3[%c0_3, %c0_4] : memref<3x1xf32, #tpu.memory_space<vmem>>, vector<3x1xf32>
    %5 = vector.broadcast %4 : vector<3x1xf32> to vector<3x1024xf32>
    %6 = arith.mulf %3, %5 : vector<3x1024xf32>
    %cst = arith.constant 1.000000e+00 : f32
    %7 = vector.broadcast %cst : f32 to vector<3x1024xf32>
    %8 = arith.cmpf ole, %6, %7 : vector<3x1024xf32>
    %9 = arith.extui %8 : vector<3x1024xi1> to vector<3x1024xi32>
    %10 = arith.sitofp %9 : vector<3x1024xi32> to vector<3x1024xf32>
    %cst_5 = arith.constant -1.000000e+00 : f32
    %11 = vector.broadcast %cst_5 : f32 to vector<3x1024xf32>
    %12 = arith.cmpf oge, %6, %11 : vector<3x1024xf32>
    %13 = arith.extui %12 : vector<3x1024xi1> to vector<3x1024xi32>
    %14 = arith.sitofp %13 : vector<3x1024xi32> to vector<3x1024xf32>
    %15 = arith.addf %10, %14 : vector<3x1024xf32>
    %cst_6 = arith.constant dense<0.000000e+00> : vector<1024xf32>
    %16 = vector.multi_reduction <add>, %15, %cst_6 [0] : vector<3x1024xf32> to vector<1024xf32>
    %17 = vector.shape_cast %16 : vector<1024xf32> to vector<1x1024xf32>
    %cst_7 = arith.constant 6.000000e+00 : f32
    %18 = vector.broadcast %cst_7 : f32 to vector<1x1024xf32>
    %19 = arith.cmpf oeq, %17, %18 : vector<1x1024xf32>
    %20 = arith.mulf %0, %0 : vector<3x1024xf32>
    %cst_8 = arith.constant dense<0.000000e+00> : vector<1024xf32>
    %21 = vector.multi_reduction <add>, %20, %cst_8 [0] : vector<3x1024xf32> to vector<1024xf32>
    %22 = vector.shape_cast %21 : vector<1024xf32> to vector<1x1024xf32>
    %23 = math.sqrt %22 : vector<1x1024xf32>
    %cst_9 = arith.constant 4.500000e-02 : f32
    %24 = vector.broadcast %cst_9 : f32 to vector<1x1024xf32>
    %25 = arith.subf %23, %24 : vector<1x1024xf32>
    %cst_10 = arith.constant 3.14159274 : f32
    %26 = vector.broadcast %cst_10 : f32 to vector<3x1024xf32>
    %27 = arith.mulf %26, %6 : vector<3x1024xf32>
    %28 = math.sin %27 : vector<3x1024xf32>
    %cst_11 = arith.constant 3.14159274 : f32
    %29 = vector.broadcast %cst_11 : f32 to vector<3x1024xf32>
    %30 = arith.mulf %29, %6 : vector<3x1024xf32>
    %31 = math.cos %30 : vector<3x1024xf32>
    %c0_12 = arith.constant 0 : index
    %c0_13 = arith.constant 0 : index
    %32 = vector.load %arg4[%c0_12, %c0_13] : memref<32x3xf32, #tpu.memory_space<vmem>>, vector<32x3xf32>
    %cst_14 = arith.constant dense<0.000000e+00> : vector<32x1024xf32>
    %33 = tpu.matmul %32, %6, %cst_14 {dimension_numbers = #tpu.dot_dimension_numbers<[1], [0], [0], [1], [0, 0, 1, 1], [], []>} : vector<32x3xf32>, vector<3x1024xf32>, vector<32x1024xf32> -> vector<32x1024xf32>
    %c0_15 = arith.constant 0 : index
    %c0_16 = arith.constant 0 : index
    %34 = vector.load %arg5[%c0_15, %c0_16] : memref<32x3xf32, #tpu.memory_space<vmem>>, vector<32x3xf32>
    %cst_17 = arith.constant dense<0.000000e+00> : vector<32x1024xf32>
    %35 = tpu.matmul %34, %28, %cst_17 {dimension_numbers = #tpu.dot_dimension_numbers<[1], [0], [0], [1], [0, 0, 1, 1], [], []>} : vector<32x3xf32>, vector<3x1024xf32>, vector<32x1024xf32> -> vector<32x1024xf32>
    %36 = arith.addf %33, %35 : vector<32x1024xf32>
    %c0_18 = arith.constant 0 : index
    %c0_19 = arith.constant 0 : index
    %37 = vector.load %arg6[%c0_18, %c0_19] : memref<32x3xf32, #tpu.memory_space<vmem>>, vector<32x3xf32>
    %cst_20 = arith.constant dense<0.000000e+00> : vector<32x1024xf32>
    %38 = tpu.matmul %37, %31, %cst_20 {dimension_numbers = #tpu.dot_dimension_numbers<[1], [0], [0], [1], [0, 0, 1, 1], [], []>} : vector<32x3xf32>, vector<3x1024xf32>, vector<32x1024xf32> -> vector<32x1024xf32>
    %39 = arith.addf %36, %38 : vector<32x1024xf32>
    %c0_21 = arith.constant 0 : index
    %c0_22 = arith.constant 0 : index
    %40 = vector.load %arg7[%c0_21, %c0_22] : memref<32x1xf32, #tpu.memory_space<vmem>>, vector<32x1xf32>
    %41 = vector.broadcast %40 : vector<32x1xf32> to vector<32x1024xf32>
    %42 = arith.addf %39, %41 : vector<32x1024xf32>
    %cst_23 = arith.constant 5.000000e-01 : f32
    %43 = vector.broadcast %cst_23 : f32 to vector<32x1024xf32>
    %44 = arith.mulf %43, %42 : vector<32x1024xf32>
    %cst_24 = arith.constant 5.000000e-01 : f32
    %45 = vector.broadcast %cst_24 : f32 to vector<32x1024xf32>
    %46 = arith.mulf %45, %42 : vector<32x1024xf32>
    %47 = math.tanh %46 : vector<32x1024xf32>
    %cst_25 = arith.constant 1.000000e+00 : f32
    %48 = vector.broadcast %cst_25 : f32 to vector<32x1024xf32>
    %49 = arith.addf %48, %47 : vector<32x1024xf32>
    %50 = arith.mulf %44, %49 : vector<32x1024xf32>
    %c0_26 = arith.constant 0 : index
    %c0_27 = arith.constant 0 : index
    %51 = vector.load %arg8[%c0_26, %c0_27] : memref<32x32xf32, #tpu.memory_space<vmem>>, vector<32x32xf32>
    %cst_28 = arith.constant dense<0.000000e+00> : vector<32x1024xf32>
    %52 = tpu.matmul %51, %50, %cst_28 {dimension_numbers = #tpu.dot_dimension_numbers<[1], [0], [0], [1], [0, 0, 1, 1], [], []>} : vector<32x32xf32>, vector<32x1024xf32>, vector<32x1024xf32> -> vector<32x1024xf32>
    %c0_29 = arith.constant 0 : index
    %c0_30 = arith.constant 0 : index
    %53 = vector.load %arg9[%c0_29, %c0_30] : memref<32x1xf32, #tpu.memory_space<vmem>>, vector<32x1xf32>
    %54 = vector.broadcast %53 : vector<32x1xf32> to vector<32x1024xf32>
    %55 = arith.addf %52, %54 : vector<32x1024xf32>
    %cst_31 = arith.constant 5.000000e-01 : f32
    %56 = vector.broadcast %cst_31 : f32 to vector<32x1024xf32>
    %57 = arith.mulf %56, %55 : vector<32x1024xf32>
    %cst_32 = arith.constant 5.000000e-01 : f32
    %58 = vector.broadcast %cst_32 : f32 to vector<32x1024xf32>
    %59 = arith.mulf %58, %55 : vector<32x1024xf32>
    %60 = math.tanh %59 : vector<32x1024xf32>
    %cst_33 = arith.constant 1.000000e+00 : f32
    %61 = vector.broadcast %cst_33 : f32 to vector<32x1024xf32>
    %62 = arith.addf %61, %60 : vector<32x1024xf32>
    %63 = arith.mulf %57, %62 : vector<32x1024xf32>
    %c0_34 = arith.constant 0 : index
    %c0_35 = arith.constant 0 : index
    %64 = vector.load %arg10[%c0_34, %c0_35] : memref<32x32xf32, #tpu.memory_space<vmem>>, vector<32x32xf32>
    %cst_36 = arith.constant dense<0.000000e+00> : vector<32x1024xf32>
    %65 = tpu.matmul %64, %63, %cst_36 {dimension_numbers = #tpu.dot_dimension_numbers<[1], [0], [0], [1], [0, 0, 1, 1], [], []>} : vector<32x32xf32>, vector<32x1024xf32>, vector<32x1024xf32> -> vector<32x1024xf32>
    %c0_37 = arith.constant 0 : index
    %c0_38 = arith.constant 0 : index
    %66 = vector.load %arg11[%c0_37, %c0_38] : memref<32x3xf32, #tpu.memory_space<vmem>>, vector<32x3xf32>
    %cst_39 = arith.constant dense<0.000000e+00> : vector<32x1024xf32>
    %67 = tpu.matmul %66, %6, %cst_39 {dimension_numbers = #tpu.dot_dimension_numbers<[1], [0], [0], [1], [0, 0, 1, 1], [], []>} : vector<32x3xf32>, vector<3x1024xf32>, vector<32x1024xf32> -> vector<32x1024xf32>
    %68 = arith.addf %65, %67 : vector<32x1024xf32>
    %c0_40 = arith.constant 0 : index
    %c0_41 = arith.constant 0 : index
    %69 = vector.load %arg12[%c0_40, %c0_41] : memref<32x3xf32, #tpu.memory_space<vmem>>, vector<32x3xf32>
    %cst_42 = arith.constant dense<0.000000e+00> : vector<32x1024xf32>
    %70 = tpu.matmul %69, %28, %cst_42 {dimension_numbers = #tpu.dot_dimension_numbers<[1], [0], [0], [1], [0, 0, 1, 1], [], []>} : vector<32x3xf32>, vector<3x1024xf32>, vector<32x1024xf32> -> vector<32x1024xf32>
    %71 = arith.addf %68, %70 : vector<32x1024xf32>
    %c0_43 = arith.constant 0 : index
    %c0_44 = arith.constant 0 : index
    %72 = vector.load %arg13[%c0_43, %c0_44] : memref<32x3xf32, #tpu.memory_space<vmem>>, vector<32x3xf32>
    %cst_45 = arith.constant dense<0.000000e+00> : vector<32x1024xf32>
    %73 = tpu.matmul %72, %31, %cst_45 {dimension_numbers = #tpu.dot_dimension_numbers<[1], [0], [0], [1], [0, 0, 1, 1], [], []>} : vector<32x3xf32>, vector<3x1024xf32>, vector<32x1024xf32> -> vector<32x1024xf32>
    %74 = arith.addf %71, %73 : vector<32x1024xf32>
    %c0_46 = arith.constant 0 : index
    %c0_47 = arith.constant 0 : index
    %75 = vector.load %arg14[%c0_46, %c0_47] : memref<32x1xf32, #tpu.memory_space<vmem>>, vector<32x1xf32>
    %76 = vector.broadcast %75 : vector<32x1xf32> to vector<32x1024xf32>
    %77 = arith.addf %74, %76 : vector<32x1024xf32>
    %cst_48 = arith.constant 5.000000e-01 : f32
    %78 = vector.broadcast %cst_48 : f32 to vector<32x1024xf32>
    %79 = arith.mulf %78, %77 : vector<32x1024xf32>
    %cst_49 = arith.constant 5.000000e-01 : f32
    %80 = vector.broadcast %cst_49 : f32 to vector<32x1024xf32>
    %81 = arith.mulf %80, %77 : vector<32x1024xf32>
    %82 = math.tanh %81 : vector<32x1024xf32>
    %cst_50 = arith.constant 1.000000e+00 : f32
    %83 = vector.broadcast %cst_50 : f32 to vector<32x1024xf32>
    %84 = arith.addf %83, %82 : vector<32x1024xf32>
    %85 = arith.mulf %79, %84 : vector<32x1024xf32>
    %c0_51 = arith.constant 0 : index
    %c0_52 = arith.constant 0 : index
    %86 = vector.load %arg15[%c0_51, %c0_52] : memref<1x32xf32, #tpu.memory_space<vmem>>, vector<1x32xf32>
    %cst_53 = arith.constant dense<0.000000e+00> : vector<1x1024xf32>
    %87 = tpu.matmul %86, %85, %cst_53 {dimension_numbers = #tpu.dot_dimension_numbers<[1], [0], [0], [1], [0, 0, 1, 1], [], []>} : vector<1x32xf32>, vector<32x1024xf32>, vector<1x1024xf32> -> vector<1x1024xf32>
    %c0_54 = arith.constant 0 : index
    %c0_55 = arith.constant 0 : index
    %88 = vector.load %arg16[%c0_54, %c0_55] : memref<1x1xf32, #tpu.memory_space<vmem>>, vector<1x1xf32>
    %89 = vector.broadcast %88 : vector<1x1xf32> to vector<1x1024xf32>
    %90 = arith.addf %87, %89 : vector<1x1024xf32>
    %91 = arith.select %19, %90, %25 : vector<1x1024xi1>, vector<1x1024xf32>
    %c0_56 = arith.constant 0 : index
    %c0_57 = arith.constant 0 : index
    %92 = vector.load %arg17[%c0_56, %c0_57] : memref<1x1024xf32, #tpu.memory_space<vmem>>, vector<1x1024xf32>
    tpu.vector_store %arg17[%c0_56, %c0_57], %91 {strides = array<i32>} : memref<1x1024xf32, #tpu.memory_space<vmem>>, vector<1x1024xf32>,
    return
  }
  func.func @transform_0(%arg0: i32) -> (i32, i32) {
    %c0_i32 = arith.constant 0 : i32
    %c0_i32_0 = arith.constant 0 : i32
    return %c0_i32, %arg0 : i32, i32
  }
  func.func @transform_1(%arg0: i32) -> (i32, i32) {
    %c0_i32 = arith.constant 0 : i32
    %c0_i32_0 = arith.constant 0 : i32
    %c0_i32_1 = arith.constant 0 : i32
    return %c0_i32, %c0_i32_0 : i32, i32
  }
  func.func @transform_2(%arg0: i32) -> (i32, i32) {
    %c0_i32 = arith.constant 0 : i32
    %c0_i32_0 = arith.constant 0 : i32
    %c0_i32_1 = arith.constant 0 : i32
    return %c0_i32, %c0_i32_0 : i32, i32
  }
  func.func @transform_3(%arg0: i32) -> (i32, i32) {
    %c0_i32 = arith.constant 0 : i32
    %c0_i32_0 = arith.constant 0 : i32
    %c0_i32_1 = arith.constant 0 : i32
    return %c0_i32, %c0_i32_0 : i32, i32
  }
  func.func @transform_4(%arg0: i32) -> (i32, i32) {
    %c0_i32 = arith.constant 0 : i32
    %c0_i32_0 = arith.constant 0 : i32
    %c0_i32_1 = arith.constant 0 : i32
    return %c0_i32, %c0_i32_0 : i32, i32
  }
  func.func @transform_5(%arg0: i32) -> (i32, i32) {
    %c0_i32 = arith.constant 0 : i32
    %c0_i32_0 = arith.constant 0 : i32
    %c0_i32_1 = arith.constant 0 : i32
    return %c0_i32, %c0_i32_0 : i32, i32
  }
  func.func @transform_6(%arg0: i32) -> (i32, i32) {
    %c0_i32 = arith.constant 0 : i32
    %c0_i32_0 = arith.constant 0 : i32
    %c0_i32_1 = arith.constant 0 : i32
    return %c0_i32, %c0_i32_0 : i32, i32
  }
  func.func @transform_7(%arg0: i32) -> (i32, i32) {
    %c0_i32 = arith.constant 0 : i32
    %c0_i32_0 = arith.constant 0 : i32
    %c0_i32_1 = arith.constant 0 : i32
    return %c0_i32, %c0_i32_0 : i32, i32
  }
  func.func @transform_8(%arg0: i32) -> (i32, i32) {
    %c0_i32 = arith.constant 0 : i32
    %c0_i32_0 = arith.constant 0 : i32
    %c0_i32_1 = arith.constant 0 : i32
    return %c0_i32, %c0_i32_0 : i32, i32
  }
  func.func @transform_9(%arg0: i32) -> (i32, i32) {
    %c0_i32 = arith.constant 0 : i32
    %c0_i32_0 = arith.constant 0 : i32
    %c0_i32_1 = arith.constant 0 : i32
    return %c0_i32, %c0_i32_0 : i32, i32
  }
  func.func @transform_10(%arg0: i32) -> (i32, i32) {
    %c0_i32 = arith.constant 0 : i32
    %c0_i32_0 = arith.constant 0 : i32
    %c0_i32_1 = arith.constant 0 : i32
    return %c0_i32, %c0_i32_0 : i32, i32
  }
  func.func @transform_11(%arg0: i32) -> (i32, i32) {
    %c0_i32 = arith.constant 0 : i32
    %c0_i32_0 = arith.constant 0 : i32
    %c0_i32_1 = arith.constant 0 : i32
    return %c0_i32, %c0_i32_0 : i32, i32
  }
  func.func @transform_12(%arg0: i32) -> (i32, i32) {
    %c0_i32 = arith.constant 0 : i32
    %c0_i32_0 = arith.constant 0 : i32
    %c0_i32_1 = arith.constant 0 : i32
    return %c0_i32, %c0_i32_0 : i32, i32
  }
  func.func @transform_13(%arg0: i32) -> (i32, i32) {
    %c0_i32 = arith.constant 0 : i32
    %c0_i32_0 = arith.constant 0 : i32
    %c0_i32_1 = arith.constant 0 : i32
    return %c0_i32, %c0_i32_0 : i32, i32
  }
  func.func @transform_14(%arg0: i32) -> (i32, i32) {
    %c0_i32 = arith.constant 0 : i32
    %c0_i32_0 = arith.constant 0 : i32
    %c0_i32_1 = arith.constant 0 : i32
    return %c0_i32, %c0_i32_0 : i32, i32
  }
  func.func @transform_15(%arg0: i32) -> (i32, i32) {
    %c0_i32 = arith.constant 0 : i32
    %c0_i32_0 = arith.constant 0 : i32
    %c0_i32_1 = arith.constant 0 : i32
    return %c0_i32, %c0_i32_0 : i32, i32
  }
  func.func @transform_16(%arg0: i32) -> (i32, i32) {
    %c0_i32 = arith.constant 0 : i32
    %c0_i32_0 = arith.constant 0 : i32
    return %c0_i32, %arg0 : i32, i32
  }
}

</mosaic_0001>

<llo_original>
// kernel: tpu_custom_call.1
$region0: #{tpu_custom_call.1}
  #allocation0 [shape = 'u32[]', space=smem, size = 0x4, offset = 0x4, fixed_abs, tag = 'smem constant byte address 0x4 - core index']
  #allocation1 [shape = 'u32[144,128]{1,0:T(1,128)}', space=vmem, size = 0x12000, scoped, tag = 'internal scratch']
  #allocation2 [shape = 'f32[1,1]{1,0:T(1,128)S(1)}', space=vmem, size = 0x200, scoped, tag = 'scoped memory for tpu_custom_call.1']
  %s0 = inlined_call_operand.vmem [shape: f32[3,1000], index: 0, kind: input, shape index: {}]
  %s1 = inlined_call_operand.vmem [shape: f32[3,1], index: 1, kind: input, shape index: {}]
  %s2 = inlined_call_operand.vmem [shape: f32[3,1], index: 2, kind: input, shape index: {}]
  %s3 = inlined_call_operand.vmem [shape: f32[32,3], index: 3, kind: input, shape index: {}]
  %s4 = inlined_call_operand.vmem [shape: f32[32,3], index: 4, kind: input, shape index: {}]
  %s5 = inlined_call_operand.vmem [shape: f32[32,3], index: 5, kind: input, shape index: {}]
  %s6 = inlined_call_operand.vmem [shape: f32[32,1], index: 6, kind: input, shape index: {}]
  %s7 = inlined_call_operand.vmem [shape: f32[32,32], index: 7, kind: input, shape index: {}]
  %s8 = inlined_call_operand.vmem [shape: f32[32,1], index: 8, kind: input, shape index: {}]
  %s9 = inlined_call_operand.vmem [shape: f32[32,32], index: 9, kind: input, shape index: {}]
  %s10 = inlined_call_operand.vmem [shape: f32[32,3], index: 10, kind: input, shape index: {}]
  %s11 = inlined_call_operand.vmem [shape: f32[32,3], index: 11, kind: input, shape index: {}]
  %s12 = inlined_call_operand.vmem [shape: f32[32,3], index: 12, kind: input, shape index: {}]
  %s13 = inlined_call_operand.vmem [shape: f32[32,1], index: 13, kind: input, shape index: {}]
  %s14 = inlined_call_operand.vmem [shape: f32[1,32], index: 14, kind: input, shape index: {}]
  %s15 = inlined_call_operand.<no memory space> [shape: f32[1,1], index: 15, kind: input, shape index: {}]
  %s16 = inlined_call_operand.hbm [shape: f32[1,1000], index: 16, kind: output, shape index: {}]
  %s17 = sld [smem:[#allocation0]]
  $region74: #{tpu_custom_call.1} parent=0
    _
  %s19 = ssub.s32 1, %s17
  %s20 = scalar_select 0, %s19, %s17
  %v21 = vstv %s15
  %22 = vst [vmem:[#allocation2] sm:$0x1] %v21
  $region1: #{tpu_custom_call.1} parent=0
    #allocation3 [shape = 'u8[4096]{0}', space=vmem, size = 0x1000, scoped, tag = 'output window, operand 0, single buffered']
    #allocation4 [shape = 's32[1]{0}', space=sflag, size = 0x4, scoped, tag = 'scoped memory for tpu_custom_call.1']
    %23 = vsyncpa [#allocation4], 0
    // Predicated region
    $region2: #{tpu_custom_call.1} parent=1 // pred_check
      _
    $region3: #{tpu_custom_call.1} parent=1 // pred_check_branch
      %25 = sbr.rel (0) target = $region5
    $region4: #{tpu_custom_call.1} parent=1 // pred_region
      _
    $region5: #{tpu_custom_call.1} parent=1 // pred_fallthru
      _
    // Predicated region
    $region6: #{tpu_custom_call.1} parent=1 // pred_check
      _
    $region7: #{tpu_custom_call.1} parent=1 // pred_check_branch
      %27 = sbr.rel (0) target = $region9
    $region8: #{tpu_custom_call.1} parent=1 // pred_region
      _
    $region9: #{tpu_custom_call.1} parent=1 // pred_fallthru
      _
    // Predicated region
    $region10: #{tpu_custom_call.1} parent=1 // pred_check
      _
    $region11: #{tpu_custom_call.1} parent=1 // pred_check_branch
      %29 = sbr.rel (0) target = $region13
    $region12: #{tpu_custom_call.1} parent=1 // pred_region
      _
    $region13: #{tpu_custom_call.1} parent=1 // pred_fallthru
      _
    // Predicated region
    $region14: #{tpu_custom_call.1} parent=1 // pred_check
      _
    $region15: #{tpu_custom_call.1} parent=1 // pred_check_branch
      %31 = sbr.rel (0) target = $region17
    $region16: #{tpu_custom_call.1} parent=1 // pred_region
      _
    $region17: #{tpu_custom_call.1} parent=1 // pred_fallthru
      _
    // Predicated region
    $region18: #{tpu_custom_call.1} parent=1 // pred_check
      _
    $region19: #{tpu_custom_call.1} parent=1 // pred_check_branch
      %33 = sbr.rel (0) target = $region21
    $region20: #{tpu_custom_call.1} parent=1 // pred_region
      _
    $region21: #{tpu_custom_call.1} parent=1 // pred_fallthru
      _
    // Predicated region
    $region22: #{tpu_custom_call.1} parent=1 // pred_check
      _
    $region23: #{tpu_custom_call.1} parent=1 // pred_check_branch
      %35 = sbr.rel (0) target = $region25
    $region24: #{tpu_custom_call.1} parent=1 // pred_region
      _
    $region25: #{tpu_custom_call.1} parent=1 // pred_fallthru
      _
    // Predicated region
    $region26: #{tpu_custom_call.1} parent=1 // pred_check
      _
    $region27: #{tpu_custom_call.1} parent=1 // pred_check_branch
      %37 = sbr.rel (0) target = $region29
    $region28: #{tpu_custom_call.1} parent=1 // pred_region
      _
    $region29: #{tpu_custom_call.1} parent=1 // pred_fallthru
      _
    // Predicated region
    $region30: #{tpu_custom_call.1} parent=1 // pred_check
      _
    $region31: #{tpu_custom_call.1} parent=1 // pred_check_branch
      %39 = sbr.rel (0) target = $region33
    $region32: #{tpu_custom_call.1} parent=1 // pred_region
      _
    $region33: #{tpu_custom_call.1} parent=1 // pred_fallthru
      _
    // Predicated region
    $region34: #{tpu_custom_call.1} parent=1 // pred_check
      _
    $region35: #{tpu_custom_call.1} parent=1 // pred_check_branch
      %41 = sbr.rel (0) target = $region37
    $region36: #{tpu_custom_call.1} parent=1 // pred_region
      _
    $region37: #{tpu_custom_call.1} parent=1 // pred_fallthru
      _
    // Predicated region
    $region38: #{tpu_custom_call.1} parent=1 // pred_check
      _
    $region39: #{tpu_custom_call.1} parent=1 // pred_check_branch
      %43 = sbr.rel (0) target = $region41
    $region40: #{tpu_custom_call.1} parent=1 // pred_region
      _
    $region41: #{tpu_custom_call.1} parent=1 // pred_fallthru
      _
    // Predicated region
    $region42: #{tpu_custom_call.1} parent=1 // pred_check
      _
    $region43: #{tpu_custom_call.1} parent=1 // pred_check_branch
      %45 = sbr.rel (0) target = $region45
    $region44: #{tpu_custom_call.1} parent=1 // pred_region
      _
    $region45: #{tpu_custom_call.1} parent=1 // pred_fallthru
      _
    // Predicated region
    $region46: #{tpu_custom_call.1} parent=1 // pred_check
      _
    $region47: #{tpu_custom_call.1} parent=1 // pred_check_branch
      %47 = sbr.rel (0) target = $region49
    $region48: #{tpu_custom_call.1} parent=1 // pred_region
      _
    $region49: #{tpu_custom_call.1} parent=1 // pred_fallthru
      _
    // Predicated region
    $region50: #{tpu_custom_call.1} parent=1 // pred_check
      _
    $region51: #{tpu_custom_call.1} parent=1 // pred_check_branch
      %49 = sbr.rel (0) target = $region53
    $region52: #{tpu_custom_call.1} parent=1 // pred_region
      _
    $region53: #{tpu_custom_call.1} parent=1 // pred_fallthru
      _
    // Predicated region
    $region54: #{tpu_custom_call.1} parent=1 // pred_check
      _
    $region55: #{tpu_custom_call.1} parent=1 // pred_check_branch
      %51 = sbr.rel (0) target = $region57
    $region56: #{tpu_custom_call.1} parent=1 // pred_region
      _
    $region57: #{tpu_custom_call.1} parent=1 // pred_fallthru
      _
    // Predicated region
    $region58: #{tpu_custom_call.1} parent=1 // pred_check
      _
    $region59: #{tpu_custom_call.1} parent=1 // pred_check_branch
      %53 = sbr.rel (0) target = $region61
    $region60: #{tpu_custom_call.1} parent=1 // pred_region
      _
    $region61: #{tpu_custom_call.1} parent=1 // pred_fallthru
      _
    // Predicated region
    $region62: #{tpu_custom_call.1} parent=1 // pred_check
      _
    $region63: #{tpu_custom_call.1} parent=1 // pred_check_branch
      %55 = sbr.rel (0) target = $region65
    $region64: #{tpu_custom_call.1} parent=1 // pred_region
      _
    $region65: #{tpu_custom_call.1} parent=1 // pred_fallthru
      _
    %v56 = vld [vmem:[%s0] sm:$0x77]
    %v57 = vld [vmem:[%s0 + $0x8] sm:$0x77]
    %v58 = vld [vmem:[%s0 + $0x10] sm:$0x77]
    %v59 = vld [vmem:[%s0 + $0x18] sm:$0x77]
    %v60 = vld [vmem:[%s1] sm:$0x7]
    %62 = vset.pattern.permute.xlu0 0
    %63 = vperm.xlu0 %62, %v60
    %v64 = vpop.permute.xlu0 %63
    %v66 = vunpack.c.l.s4 839922192
    %v67 = vunpack.c.0.s8 %v66
    %v68 = vlaneseq
    %v69 = vshrl.u32 %v68, 7
    %v70 = vsub.s32 %v67, %v69
    %v71 = vrot.slane %v64, %v70
    %v73 = vsub.f32 %v56, %v71
    %v74 = vsub.f32 %v57, %v71
    %v75 = vsub.f32 %v58, %v71
    %v76 = vsub.f32 %v59, %v71
    %v77 = vld [vmem:[%s2] sm:$0x7]
    %79 = vset.pattern.permute.xlu0 0
    %80 = vperm.xlu0 %79, %v77
    %v81 = vpop.permute.xlu0 %80
    %v83 = vunpack.c.l.s4 839922192
    %v84 = vunpack.c.0.s8 %v83
    %v85 = vlaneseq
    %v86 = vshrl.u32 %v85, 7
    %v87 = vsub.s32 %v84, %v86
    %v88 = vrot.slane %v81, %v87
    %v90 = vmul.f32 %v73, %v88
    %v91 = vmul.f32 %v74, %v88
    %v92 = vmul.f32 %v75, %v88
    %v93 = vmul.f32 %v76, %v88
    %vm94 = vcmp.le.f32.partialorder %v90, 1.0
    %vm95 = vcmp.le.f32.partialorder %v91, 1.0
    %vm96 = vcmp.le.f32.partialorder %v92, 1.0
    %vm97 = vcmp.le.f32.partialorder %v93, 1.0
    %v98 = vsel %vm94, 1, 0
    %v99 = vsel %vm95, 1, 0
    %v100 = vsel %vm96, 1, 0
    %v101 = vsel %vm97, 1, 0
    %v102 = vcvt.s32.f32 %v98
    %v103 = vcvt.s32.f32 %v99
    %v104 = vcvt.s32.f32 %v100
    %v105 = vcvt.s32.f32 %v101
    %vm106 = vcmp.ge.f32.partialorder %v90, -1.0
    %vm107 = vcmp.ge.f32.partialorder %v91, -1.0
    %vm108 = vcmp.ge.f32.partialorder %v92, -1.0
    %vm109 = vcmp.ge.f32.partialorder %v93, -1.0
    %v110 = vsel %vm106, 1, 0
    %v111 = vsel %vm107, 1, 0
    %v112 = vsel %vm108, 1, 0
    %v113 = vsel %vm109, 1, 0
    %v114 = vcvt.s32.f32 %v110
    %v115 = vcvt.s32.f32 %v111
    %v116 = vcvt.s32.f32 %v112
    %v117 = vcvt.s32.f32 %v113
    %v118 = vadd.f32 %v102, %v114
    %v119 = vadd.f32 %v103, %v115
    %v120 = vadd.f32 %v104, %v116
    %v121 = vadd.f32 %v105, %v117
    %v126 = vcombine.high %v118, %v118
    %v127 = vcombine.high %v119, %v119
    %v128 = vcombine.high %v120, %v120
    %v129 = vcombine.high %v121, %v121
    %vm134 = vcmask 1042432
    %v135 = vsel %vm134, %v118, 0.0
    %v136 = vrot.slane %v135, 4
    %v137 = vadd.f32 %v135, %v136
    %v138 = vrot.slane %v137, 2
    %v139 = vadd.f32 %v137, %v138
    %v140 = vrot.slane %v139, 1
    %v141 = vadd.f32 %v139, %v140
    %v142 = vsel %vm134, %v126, 0.0
    %v143 = vrot.slane %v142, 4
    %v144 = vadd.f32 %v142, %v143
    %v145 = vrot.slane %v144, 2
    %v146 = vadd.f32 %v144, %v145
    %v147 = vrot.slane %v146, 1
    %v148 = vadd.f32 %v146, %v147
    %v149 = vsel %vm134, %v119, 0.0
    %v150 = vrot.slane %v149, 4
    %v151 = vadd.f32 %v149, %v150
    %v152 = vrot.slane %v151, 2
    %v153 = vadd.f32 %v151, %v152
    %v154 = vrot.slane %v153, 1
    %v155 = vadd.f32 %v153, %v154
    %v156 = vsel %vm134, %v127, 0.0
    %v157 = vrot.slane %v156, 4
    %v158 = vadd.f32 %v156, %v157
    %v159 = vrot.slane %v158, 2
    %v160 = vadd.f32 %v158, %v159
    %v161 = vrot.slane %v160, 1
    %v162 = vadd.f32 %v160, %v161
    %v163 = vsel %vm134, %v120, 0.0
    %v164 = vrot.slane %v163, 4
    %v165 = vadd.f32 %v163, %v164
    %v166 = vrot.slane %v165, 2
    %v167 = vadd.f32 %v165, %v166
    %v168 = vrot.slane %v167, 1
    %v169 = vadd.f32 %v167, %v168
    %v170 = vsel %vm134, %v128, 0.0
    %v171 = vrot.slane %v170, 4
    %v172 = vadd.f32 %v170, %v171
    %v173 = vrot.slane %v172, 2
    %v174 = vadd.f32 %v172, %v173
    %v175 = vrot.slane %v174, 1
    %v176 = vadd.f32 %v174, %v175
    %v177 = vsel %vm134, %v121, 0.0
    %v178 = vrot.slane %v177, 4
    %v179 = vadd.f32 %v177, %v178
    %v180 = vrot.slane %v179, 2
    %v181 = vadd.f32 %v179, %v180
    %v182 = vrot.slane %v181, 1
    %v183 = vadd.f32 %v181, %v182
    %v184 = vsel %vm134, %v129, 0.0
    %v185 = vrot.slane %v184, 4
    %v186 = vadd.f32 %v184, %v185
    %v187 = vrot.slane %v186, 2
    %v188 = vadd.f32 %v186, %v187
    %v189 = vrot.slane %v188, 1
    %v190 = vadd.f32 %v188, %v189
    %vm191 = vcmp.eq.f32.partialorder %v141, 6.0
    %vm192 = vcmp.eq.f32.partialorder %v148, 6.0
    %vm193 = vcmp.eq.f32.partialorder %v155, 6.0
    %vm194 = vcmp.eq.f32.partialorder %v162, 6.0
    %vm195 = vcmp.eq.f32.partialorder %v169, 6.0
    %vm196 = vcmp.eq.f32.partialorder %v176, 6.0
    %vm197 = vcmp.eq.f32.partialorder %v183, 6.0
    %vm198 = vcmp.eq.f32.partialorder %v190, 6.0
    %v199 = vmul.f32 %v56, %v56
    %v200 = vmul.f32 %v57, %v57
    %v201 = vmul.f32 %v58, %v58
    %v202 = vmul.f32 %v59, %v59
    %v207 = vcombine.high %v199, %v199
    %v208 = vcombine.high %v200, %v200
    %v209 = vcombine.high %v201, %v201
    %v210 = vcombine.high %v202, %v202
    %v215 = vsel %vm134, %v199, 0.0
    %v216 = vrot.slane %v215, 4
    %v217 = vadd.f32 %v215, %v216
    %v218 = vrot.slane %v217, 2
    %v219 = vadd.f32 %v217, %v218
    %v220 = vrot.slane %v219, 1
    %v221 = vadd.f32 %v219, %v220
    %v222 = vsel %vm134, %v207, 0.0
    %v223 = vrot.slane %v222, 4
    %v224 = vadd.f32 %v222, %v223
    %v225 = vrot.slane %v224, 2
    %v226 = vadd.f32 %v224, %v225
    %v227 = vrot.slane %v226, 1
    %v228 = vadd.f32 %v226, %v227
    %v229 = vsel %vm134, %v200, 0.0
    %v230 = vrot.slane %v229, 4
    %v231 = vadd.f32 %v229, %v230
    %v232 = vrot.slane %v231, 2
    %v233 = vadd.f32 %v231, %v232
    %v234 = vrot.slane %v233, 1
    %v235 = vadd.f32 %v233, %v234
    %v236 = vsel %vm134, %v208, 0.0
    %v237 = vrot.slane %v236, 4
    %v238 = vadd.f32 %v236, %v237
    %v239 = vrot.slane %v238, 2
    %v240 = vadd.f32 %v238, %v239
    %v241 = vrot.slane %v240, 1
    %v242 = vadd.f32 %v240, %v241
    %v243 = vsel %vm134, %v201, 0.0
    %v244 = vrot.slane %v243, 4
    %v245 = vadd.f32 %v243, %v244
    %v246 = vrot.slane %v245, 2
    %v247 = vadd.f32 %v245, %v246
    %v248 = vrot.slane %v247, 1
    %v249 = vadd.f32 %v247, %v248
    %v250 = vsel %vm134, %v209, 0.0
    %v251 = vrot.slane %v250, 4
    %v252 = vadd.f32 %v250, %v251
    %v253 = vrot.slane %v252, 2
    %v254 = vadd.f32 %v252, %v253
    %v255 = vrot.slane %v254, 1
    %v256 = vadd.f32 %v254, %v255
    %v257 = vsel %vm134, %v202, 0.0
    %v258 = vrot.slane %v257, 4
    %v259 = vadd.f32 %v257, %v258
    %v260 = vrot.slane %v259, 2
    %v261 = vadd.f32 %v259, %v260
    %v262 = vrot.slane %v261, 1
    %v263 = vadd.f32 %v261, %v262
    %v264 = vsel %vm134, %v210, 0.0
    %v265 = vrot.slane %v264, 4
    %v266 = vadd.f32 %v264, %v265
    %v267 = vrot.slane %v266, 2
    %v268 = vadd.f32 %v266, %v267
    %v269 = vrot.slane %v268, 1
    %v270 = vadd.f32 %v268, %v269
    %v271 = vrsqrt.pop %v221
    %v272 = vmul.f32 %v221, %v271
    %vm273 = vcmp.eq.f32.partialorder %v221, inf
    %v274 = vsel %vm273, %v221, %v272
    %vm275 = vcmp.eq.f32.partialorder %v221, 0.0
    %v276 = vand.u32 %v221, 2147483648
    %v277 = vsel %vm275, %v276, %v274
    %v278 = vrsqrt.pop %v228
    %v279 = vmul.f32 %v228, %v278
    %vm280 = vcmp.eq.f32.partialorder %v228, inf
    %v281 = vsel %vm280, %v228, %v279
    %vm282 = vcmp.eq.f32.partialorder %v228, 0.0
    %v283 = vand.u32 %v228, 2147483648
    %v284 = vsel %vm282, %v283, %v281
    %v285 = vrsqrt.pop %v235
    %v286 = vmul.f32 %v235, %v285
    %vm287 = vcmp.eq.f32.partialorder %v235, inf
    %v288 = vsel %vm287, %v235, %v286
    %vm289 = vcmp.eq.f32.partialorder %v235, 0.0
    %v290 = vand.u32 %v235, 2147483648
    %v291 = vsel %vm289, %v290, %v288
    %v292 = vrsqrt.pop %v242
    %v293 = vmul.f32 %v242, %v292
    %vm294 = vcmp.eq.f32.partialorder %v242, inf
    %v295 = vsel %vm294, %v242, %v293
    %vm296 = vcmp.eq.f32.partialorder %v242, 0.0
    %v297 = vand.u32 %v242, 2147483648
    %v298 = vsel %vm296, %v297, %v295
    %v299 = vrsqrt.pop %v249
    %v300 = vmul.f32 %v249, %v299
    %vm301 = vcmp.eq.f32.partialorder %v249, inf
    %v302 = vsel %vm301, %v249, %v300
    %vm303 = vcmp.eq.f32.partialorder %v249, 0.0
    %v304 = vand.u32 %v249, 2147483648
    %v305 = vsel %vm303, %v304, %v302
    %v306 = vrsqrt.pop %v256
    %v307 = vmul.f32 %v256, %v306
    %vm308 = vcmp.eq.f32.partialorder %v256, inf
    %v309 = vsel %vm308, %v256, %v307
    %vm310 = vcmp.eq.f32.partialorder %v256, 0.0
    %v311 = vand.u32 %v256, 2147483648
    %v312 = vsel %vm310, %v311, %v309
    %v313 = vrsqrt.pop %v263
    %v314 = vmul.f32 %v263, %v313
    %vm315 = vcmp.eq.f32.partialorder %v263, inf
    %v316 = vsel %vm315, %v263, %v314
    %vm317 = vcmp.eq.f32.partialorder %v263, 0.0
    %v318 = vand.u32 %v263, 2147483648
    %v319 = vsel %vm317, %v318, %v316
    %v320 = vrsqrt.pop %v270
    %v321 = vmul.f32 %v270, %v320
    %vm322 = vcmp.eq.f32.partialorder %v270, inf
    %v323 = vsel %vm322, %v270, %v321
    %vm324 = vcmp.eq.f32.partialorder %v270, 0.0
    %v325 = vand.u32 %v270, 2147483648
    %v326 = vsel %vm324, %v325, %v323
    %v327 = vsub.f32 %v277, 0.045
    %v328 = vsub.f32 %v284, 0.045
    %v329 = vsub.f32 %v291, 0.045
    %v330 = vsub.f32 %v298, 0.045
    %v331 = vsub.f32 %v305, 0.045
    %v332 = vsub.f32 %v312, 0.045
    %v333 = vsub.f32 %v319, 0.045
    %v334 = vsub.f32 %v326, 0.045
    %v335 = vmul.f32 %v90, 3.1415927
    %v336 = vmul.f32 %v91, 3.1415927
    %v337 = vmul.f32 %v92, 3.1415927
    %v338 = vmul.f32 %v93, 3.1415927
    %v339 = vand.u32 2147483647, %v335
    %vm340 = vcmp.le.f32.partialorder %v339, 0.7853982
    %vm341 = vcmp.lt.s32.totalorder %v335, 0
    %v342 = vand.u32 %v335, 2139095040
    %v343 = vshrl.u32 %v342, 23
    %v344 = vsub.s32 %v343, 127
    %v345 = vand.u32 2147483647, %v335
    %v346 = vand.u32 %v345, 8388607
    %v347 = vor.u32 %v346, 8388608
    %v348 = vsub.s32 0, %v347
    %v349 = vadd.s32 %v344, 1
    %vm350 = vcmp.gt.s32.totalorder %v349, 0
    %v351 = vsel %vm350, %v349, 0
    %v352 = vshrl.u32 %v351, 5
    %v353 = vand.u32 %v351, 31
    %v354 = vsub.s32 32, %v353
    %v355 = vshrl.u32 683565275, %v354
    %v356 = vshll.u32 683565275, %v353
    %v357 = vshrl.u32 2475754826, %v354
    %v358 = vor.u32 %v356, %v357
    %v359 = vshll.u32 2475754826, %v353
    %v360 = vshrl.u32 2131351028, %v354
    %v361 = vor.u32 %v359, %v360
    %v362 = vshll.u32 2131351028, %v353
    %v363 = vshrl.u32 2102212464, %v354
    %v364 = vor.u32 %v362, %v363
    %v365 = vshll.u32 2102212464, %v353
    %v366 = vshrl.u32 920167782, %v354
    %v367 = vor.u32 %v365, %v366
    %v368 = vshll.u32 920167782, %v353
    %v369 = vshrl.u32 1326507024, %v354
    %v370 = vor.u32 %v368, %v369
    %vm371 = vcmp.lt.s32.totalorder %v352, 1
    %vm372 = vcmp.lt.s32.totalorder %v352, 2
    %vm373 = vcmp.lt.s32.totalorder %v352, 3
    %vm374 = vcmp.lt.s32.totalorder %v352, 4
    %v375 = vsel %vm371, %v355, %v358
    %v376 = vsel %vm374, %v364, 2102212464
    %v377 = vsel %vm373, %v361, %v376
    %v378 = vsel %vm372, %v375, %v377
    %v379 = vsel %vm371, %v358, %v361
    %v380 = vsel %vm374, %v367, 920167782
    %v381 = vsel %vm373, %v364, %v380
    %v382 = vsel %vm372, %v379, %v381
    %v383 = vsel %vm371, %v361, %v364
    %v384 = vsel %vm374, %v370, 1326507024
    %v385 = vsel %vm373, %v367, %v384
    %v386 = vsel %vm372, %v383, %v385
    %v387 = vshll.u32 %v347, 8
    %v388 = vmul.u32.u64.compose %v387, %v386
    %v389 = vextract.low.u32 %v388
    %v390 = vextract.high.u32 %v388
    %v391 = vmul.u32.u64.compose %v387, %v382
    %v392 = vextract.low.u32 %v391
    %v393 = vextract.high.u32 %v391
    %v394 = vmul.u32 %v387, %v378
    %v395 = vadd.s32 %v390, %v392
    %vm396 = vc.u32 %v390, %v392
    %v397 = vadd.s32 %v393, 1
    %v398 = vsel %vm396, %v397, %v393
    %v399 = vadd.s32 %v394, %v398
    %v400 = vadd.s32 %v399, 536870912
    %v401 = vshrl.u32 %v400, 30
    %v402 = vshll.u32 %v401, 30
    %v403 = vsub.s32 %v399, %v402
    %vm404 = vcmp.lt.s32.totalorder %v403, 0
    %v405 = vsub.s32 0, %v403
    %v406 = vsel %vm404, %v405, %v403
    %v407 = vclz %v406
    %v408 = vsub.s32 %v407, 2
    %vm409 = vcmp.gt.s32.totalorder 0, %v408
    %v410 = vsel %vm409, 0, %v408
    %v411 = vsub.s32 32, %v410
    %v412 = vshll.u32 %v403, %v410
    %v413 = vshrl.u32 %v395, %v411
    %v414 = vor.u32 %v412, %v413
    %v415 = vsub.s32 4294967266, %v410
    %v416 = vadd.s32 %v415, 127
    %v417 = vshll.u32 %v416, 23
    %v418 = vor.u32 4788187, %v417
    %v419 = vand.u32 2147483647, %v418
    %v421 = vcvt.s32.f32 %v414
    %v422 = vmul.f32 %v421, %v419
    %v423 = vxor.u32 %v422, 2147483648
    %v424 = vsel %vm341, %v423, %v422
    %v425 = vsub.s32 4, %v401
    %v426 = vsel %vm341, %v425, %v401
    %v427 = vsel %vm340, %v335, %v424
    %v428 = vsel %vm340, 0, %v426
    %v429 = vcosq.f32.pop %v427
    %v430 = vsinq.f32.pop %v427
    %vm431 = vweird.f32 %v335
    %v432 = vadd.s32 %v428, 3
    %v433 = vand.u32 %v432, 3
    %vm434 = vcmp.lt.s32.totalorder %v433, 2
    %vm435 = vcmp.eq.s32.totalorder %v433, 0
    %v436 = vxor.u32 %v430, 2147483648
    %v437 = vsel %vm435, %v429, %v436
    %vm438 = vcmp.eq.s32.totalorder %v433, 2
    %v439 = vxor.u32 %v429, 2147483648
    %v440 = vsel %vm438, %v439, %v430
    %v441 = vsel %vm434, %v437, %v440
    %v442 = vsel %vm431, nan, %v441
    %v443 = vand.u32 2147483647, %v336
    %vm444 = vcmp.le.f32.partialorder %v443, 0.7853982
    %vm445 = vcmp.lt.s32.totalorder %v336, 0
    %v446 = vand.u32 %v336, 2139095040
    %v447 = vshrl.u32 %v446, 23
    %v448 = vsub.s32 %v447, 127
    %v449 = vand.u32 2147483647, %v336
    %v450 = vand.u32 %v449, 8388607
    %v451 = vor.u32 %v450, 8388608
    %v452 = vsub.s32 0, %v451
    %v453 = vadd.s32 %v448, 1
    %vm454 = vcmp.gt.s32.totalorder %v453, 0
    %v455 = vsel %vm454, %v453, 0
    %v456 = vshrl.u32 %v455, 5
    %v457 = vand.u32 %v455, 31
    %v458 = vsub.s32 32, %v457
    %v459 = vshrl.u32 683565275, %v458
    %v460 = vshll.u32 683565275, %v457
    %v461 = vshrl.u32 2475754826, %v458
    %v462 = vor.u32 %v460, %v461
    %v463 = vshll.u32 2475754826, %v457
    %v464 = vshrl.u32 2131351028, %v458
    %v465 = vor.u32 %v463, %v464
    %v466 = vshll.u32 2131351028, %v457
    %v467 = vshrl.u32 2102212464, %v458
    %v468 = vor.u32 %v466, %v467
    %v469 = vshll.u32 2102212464, %v457
    %v470 = vshrl.u32 920167782, %v458
    %v471 = vor.u32 %v469, %v470
    %v472 = vshll.u32 920167782, %v457
    %v473 = vshrl.u32 1326507024, %v458
    %v474 = vor.u32 %v472, %v473
    %vm475 = vcmp.lt.s32.totalorder %v456, 1
    %vm476 = vcmp.lt.s32.totalorder %v456, 2
    %vm477 = vcmp.lt.s32.totalorder %v456, 3
    %vm478 = vcmp.lt.s32.totalorder %v456, 4
    %v479 = vsel %vm475, %v459, %v462
    %v480 = vsel %vm478, %v468, 2102212464
    %v481 = vsel %vm477, %v465, %v480
    %v482 = vsel %vm476, %v479, %v481
    %v483 = vsel %vm475, %v462, %v465
    %v484 = vsel %vm478, %v471, 920167782
    %v485 = vsel %vm477, %v468, %v484
    %v486 = vsel %vm476, %v483, %v485
    %v487 = vsel %vm475, %v465, %v468
    %v488 = vsel %vm478, %v474, 1326507024
    %v489 = vsel %vm477, %v471, %v488
    %v490 = vsel %vm476, %v487, %v489
    %v491 = vshll.u32 %v451, 8
    %v492 = vmul.u32.u64.compose %v491, %v490
    %v493 = vextract.low.u32 %v492
    %v494 = vextract.high.u32 %v492
    %v495 = vmul.u32.u64.compose %v491, %v486
    %v496 = vextract.low.u32 %v495
    %v497 = vextract.high.u32 %v495
    %v498 = vmul.u32 %v491, %v482
    %v499 = vadd.s32 %v494, %v496
    %vm500 = vc.u32 %v494, %v496
    %v501 = vadd.s32 %v497, 1
    %v502 = vsel %vm500, %v501, %v497
    %v503 = vadd.s32 %v498, %v502
    %v504 = vadd.s32 %v503, 536870912
    %v505 = vshrl.u32 %v504, 30
    %v506 = vshll.u32 %v505, 30
    %v507 = vsub.s32 %v503, %v506
    %vm508 = vcmp.lt.s32.totalorder %v507, 0
    %v509 = vsub.s32 0, %v507
    %v510 = vsel %vm508, %v509, %v507
    %v511 = vclz %v510
    %v512 = vsub.s32 %v511, 2
    %vm513 = vcmp.gt.s32.totalorder 0, %v512
    %v514 = vsel %vm513, 0, %v512
    %v515 = vsub.s32 32, %v514
    %v516 = vshll.u32 %v507, %v514
    %v517 = vshrl.u32 %v499, %v515
    %v518 = vor.u32 %v516, %v517
    %v519 = vsub.s32 4294967266, %v514
    %v520 = vadd.s32 %v519, 127
    %v521 = vshll.u32 %v520, 23
    %v522 = vor.u32 4788187, %v521
    %v523 = vand.u32 2147483647, %v522
    %v525 = vcvt.s32.f32 %v518
    %v526 = vmul.f32 %v525, %v523
    %v527 = vxor.u32 %v526, 2147483648
    %v528 = vsel %vm445, %v527, %v526
    %v529 = vsub.s32 4, %v505
    %v530 = vsel %vm445, %v529, %v505
    %v531 = vsel %vm444, %v336, %v528
    %v532 = vsel %vm444, 0, %v530
    %v533 = vcosq.f32.pop %v531
    %v534 = vsinq.f32.pop %v531
    %vm535 = vweird.f32 %v336
    %v536 = vadd.s32 %v532, 3
    %v537 = vand.u32 %v536, 3
    %vm538 = vcmp.lt.s32.totalorder %v537, 2
    %vm539 = vcmp.eq.s32.totalorder %v537, 0
    %v540 = vxor.u32 %v534, 2147483648
    %v541 = vsel %vm539, %v533, %v540
    %vm542 = vcmp.eq.s32.totalorder %v537, 2
    %v543 = vxor.u32 %v533, 2147483648
    %v544 = vsel %vm542, %v543, %v534
    %v545 = vsel %vm538, %v541, %v544
    %v546 = vsel %vm535, nan, %v545
    %v547 = vand.u32 2147483647, %v337
    %vm548 = vcmp.le.f32.partialorder %v547, 0.7853982
    %vm549 = vcmp.lt.s32.totalorder %v337, 0
    %v550 = vand.u32 %v337, 2139095040
    %v551 = vshrl.u32 %v550, 23
    %v552 = vsub.s32 %v551, 127
    %v553 = vand.u32 2147483647, %v337
    %v554 = vand.u32 %v553, 8388607
    %v555 = vor.u32 %v554, 8388608
    %v556 = vsub.s32 0, %v555
    %v557 = vadd.s32 %v552, 1
    %vm558 = vcmp.gt.s32.totalorder %v557, 0
    %v559 = vsel %vm558, %v557, 0
    %v560 = vshrl.u32 %v559, 5
    %v561 = vand.u32 %v559, 31
    %v562 = vsub.s32 32, %v561
    %v563 = vshrl.u32 683565275, %v562
    %v564 = vshll.u32 683565275, %v561
    %v565 = vshrl.u32 2475754826, %v562
    %v566 = vor.u32 %v564, %v565
    %v567 = vshll.u32 2475754826, %v561
    %v568 = vshrl.u32 2131351028, %v562
    %v569 = vor.u32 %v567, %v568
    %v570 = vshll.u32 2131351028, %v561
    %v571 = vshrl.u32 2102212464, %v562
    %v572 = vor.u32 %v570, %v571
    %v573 = vshll.u32 2102212464, %v561
    %v574 = vshrl.u32 920167782, %v562
    %v575 = vor.u32 %v573, %v574
    %v576 = vshll.u32 920167782, %v561
    %v577 = vshrl.u32 1326507024, %v562
    %v578 = vor.u32 %v576, %v577
    %vm579 = vcmp.lt.s32.totalorder %v560, 1
    %vm580 = vcmp.lt.s32.totalorder %v560, 2
    %vm581 = vcmp.lt.s32.totalorder %v560, 3
    %vm582 = vcmp.lt.s32.totalorder %v560, 4
    %v583 = vsel %vm579, %v563, %v566
    %v584 = vsel %vm582, %v572, 2102212464
    %v585 = vsel %vm581, %v569, %v584
    %v586 = vsel %vm580, %v583, %v585
    %v587 = vsel %vm579, %v566, %v569
    %v588 = vsel %vm582, %v575, 920167782
    %v589 = vsel %vm581, %v572, %v588
    %v590 = vsel %vm580, %v587, %v589
    %v591 = vsel %vm579, %v569, %v572
    %v592 = vsel %vm582, %v578, 1326507024
    %v593 = vsel %vm581, %v575, %v592
    %v594 = vsel %vm580, %v591, %v593
    %v595 = vshll.u32 %v555, 8
    %v596 = vmul.u32.u64.compose %v595, %v594
    %v597 = vextract.low.u32 %v596
    %v598 = vextract.high.u32 %v596
    %v599 = vmul.u32.u64.compose %v595, %v590
    %v600 = vextract.low.u32 %v599
    %v601 = vextract.high.u32 %v599
    %v602 = vmul.u32 %v595, %v586
    %v603 = vadd.s32 %v598, %v600
    %vm604 = vc.u32 %v598, %v600
    %v605 = vadd.s32 %v601, 1
    %v606 = vsel %vm604, %v605, %v601
    %v607 = vadd.s32 %v602, %v606
    %v608 = vadd.s32 %v607, 536870912
    %v609 = vshrl.u32 %v608, 30
    %v610 = vshll.u32 %v609, 30
    %v611 = vsub.s32 %v607, %v610
    %vm612 = vcmp.lt.s32.totalorder %v611, 0
    %v613 = vsub.s32 0, %v611
    %v614 = vsel %vm612, %v613, %v611
    %v615 = vclz %v614
    %v616 = vsub.s32 %v615, 2
    %vm617 = vcmp.gt.s32.totalorder 0, %v616
    %v618 = vsel %vm617, 0, %v616
    %v619 = vsub.s32 32, %v618
    %v620 = vshll.u32 %v611, %v618
    %v621 = vshrl.u32 %v603, %v619
    %v622 = vor.u32 %v620, %v621
    %v623 = vsub.s32 4294967266, %v618
    %v624 = vadd.s32 %v623, 127
    %v625 = vshll.u32 %v624, 23
    %v626 = vor.u32 4788187, %v625
    %v627 = vand.u32 2147483647, %v626
    %v629 = vcvt.s32.f32 %v622
    %v630 = vmul.f32 %v629, %v627
    %v631 = vxor.u32 %v630, 2147483648
    %v632 = vsel %vm549, %v631, %v630
    %v633 = vsub.s32 4, %v609
    %v634 = vsel %vm549, %v633, %v609
    %v635 = vsel %vm548, %v337, %v632
    %v636 = vsel %vm548, 0, %v634
    %v637 = vcosq.f32.pop %v635
    %v638 = vsinq.f32.pop %v635
    %vm639 = vweird.f32 %v337
    %v640 = vadd.s32 %v636, 3
    %v641 = vand.u32 %v640, 3
    %vm642 = vcmp.lt.s32.totalorder %v641, 2
    %vm643 = vcmp.eq.s32.totalorder %v641, 0
    %v644 = vxor.u32 %v638, 2147483648
    %v645 = vsel %vm643, %v637, %v644
    %vm646 = vcmp.eq.s32.totalorder %v641, 2
    %v647 = vxor.u32 %v637, 2147483648
    %v648 = vsel %vm646, %v647, %v638
    %v649 = vsel %vm642, %v645, %v648
    %v650 = vsel %vm639, nan, %v649
    %v651 = vand.u32 2147483647, %v338
    %vm652 = vcmp.le.f32.partialorder %v651, 0.7853982
    %vm653 = vcmp.lt.s32.totalorder %v338, 0
    %v654 = vand.u32 %v338, 2139095040
    %v655 = vshrl.u32 %v654, 23
    %v656 = vsub.s32 %v655, 127
    %v657 = vand.u32 2147483647, %v338
    %v658 = vand.u32 %v657, 8388607
    %v659 = vor.u32 %v658, 8388608
    %v660 = vsub.s32 0, %v659
    %v661 = vadd.s32 %v656, 1
    %vm662 = vcmp.gt.s32.totalorder %v661, 0
    %v663 = vsel %vm662, %v661, 0
    %v664 = vshrl.u32 %v663, 5
    %v665 = vand.u32 %v663, 31
    %v666 = vsub.s32 32, %v665
    %v667 = vshrl.u32 683565275, %v666
    %v668 = vshll.u32 683565275, %v665
    %v669 = vshrl.u32 2475754826, %v666
    %v670 = vor.u32 %v668, %v669
    %v671 = vshll.u32 2475754826, %v665
    %v672 = vshrl.u32 2131351028, %v666
    %v673 = vor.u32 %v671, %v672
    %v674 = vshll.u32 2131351028, %v665
    %v675 = vshrl.u32 2102212464, %v666
    %v676 = vor.u32 %v674, %v675
    %v677 = vshll.u32 2102212464, %v665
    %v678 = vshrl.u32 920167782, %v666
    %v679 = vor.u32 %v677, %v678
    %v680 = vshll.u32 920167782, %v665
    %v681 = vshrl.u32 1326507024, %v666
    %v682 = vor.u32 %v680, %v681
    %vm683 = vcmp.lt.s32.totalorder %v664, 1
    %vm684 = vcmp.lt.s32.totalorder %v664, 2
    %vm685 = vcmp.lt.s32.totalorder %v664, 3
    %vm686 = vcmp.lt.s32.totalorder %v664, 4
    %v687 = vsel %vm683, %v667, %v670
    %v688 = vsel %vm686, %v676, 2102212464
    %v689 = vsel %vm685, %v673, %v688
    %v690 = vsel %vm684, %v687, %v689
    %v691 = vsel %vm683, %v670, %v673
    %v692 = vsel %vm686, %v679, 920167782
    %v693 = vsel %vm685, %v676, %v692
    %v694 = vsel %vm684, %v691, %v693
    %v695 = vsel %vm683, %v673, %v676
    %v696 = vsel %vm686, %v682, 1326507024
    %v697 = vsel %vm685, %v679, %v696
    %v698 = vsel %vm684, %v695, %v697
    %v699 = vshll.u32 %v659, 8
    %v700 = vmul.u32.u64.compose %v699, %v698
    %v701 = vextract.low.u32 %v700
    %v702 = vextract.high.u32 %v700
    %v703 = vmul.u32.u64.compose %v699, %v694
    %v704 = vextract.low.u32 %v703
    %v705 = vextract.high.u32 %v703
    %v706 = vmul.u32 %v699, %v690
    %v707 = vadd.s32 %v702, %v704
    %vm708 = vc.u32 %v702, %v704
    %v709 = vadd.s32 %v705, 1
    %v710 = vsel %vm708, %v709, %v705
    %v711 = vadd.s32 %v706, %v710
    %v712 = vadd.s32 %v711, 536870912
    %v713 = vshrl.u32 %v712, 30
    %v714 = vshll.u32 %v713, 30
    %v715 = vsub.s32 %v711, %v714
    %vm716 = vcmp.lt.s32.totalorder %v715, 0
    %v717 = vsub.s32 0, %v715
    %v718 = vsel %vm716, %v717, %v715
    %v719 = vclz %v718
    %v720 = vsub.s32 %v719, 2
    %vm721 = vcmp.gt.s32.totalorder 0, %v720
    %v722 = vsel %vm721, 0, %v720
    %v723 = vsub.s32 32, %v722
    %v724 = vshll.u32 %v715, %v722
    %v725 = vshrl.u32 %v707, %v723
    %v726 = vor.u32 %v724, %v725
    %v727 = vsub.s32 4294967266, %v722
    %v728 = vadd.s32 %v727, 127
    %v729 = vshll.u32 %v728, 23
    %v730 = vor.u32 4788187, %v729
    %v731 = vand.u32 2147483647, %v730
    %v733 = vcvt.s32.f32 %v726
    %v734 = vmul.f32 %v733, %v731
    %v735 = vxor.u32 %v734, 2147483648
    %v736 = vsel %vm653, %v735, %v734
    %v737 = vsub.s32 4, %v713
    %v738 = vsel %vm653, %v737, %v713
    %v739 = vsel %vm652, %v338, %v736
    %v740 = vsel %vm652, 0, %v738
    %v741 = vcosq.f32.pop %v739
    %v742 = vsinq.f32.pop %v739
    %vm743 = vweird.f32 %v338
    %v744 = vadd.s32 %v740, 3
    %v745 = vand.u32 %v744, 3
    %vm746 = vcmp.lt.s32.totalorder %v745, 2
    %vm747 = vcmp.eq.s32.totalorder %v745, 0
    %v748 = vxor.u32 %v742, 2147483648
    %v749 = vsel %vm747, %v741, %v748
    %vm750 = vcmp.eq.s32.totalorder %v745, 2
    %v751 = vxor.u32 %v741, 2147483648
    %v752 = vsel %vm750, %v751, %v742
    %v753 = vsel %vm746, %v749, %v752
    %v754 = vsel %vm743, nan, %v753
    %v755 = vand.u32 2147483647, %v335
    %vm756 = vcmp.le.f32.partialorder %v755, 0.7853982
    %vm757 = vcmp.lt.s32.totalorder %v335, 0
    %v758 = vand.u32 %v335, 2139095040
    %v759 = vshrl.u32 %v758, 23
    %v760 = vsub.s32 %v759, 127
    %v761 = vand.u32 2147483647, %v335
    %v762 = vand.u32 %v761, 8388607
    %v763 = vor.u32 %v762, 8388608
    %v764 = vsub.s32 0, %v763
    %v765 = vadd.s32 %v760, 1
    %vm766 = vcmp.gt.s32.totalorder %v765, 0
    %v767 = vsel %vm766, %v765, 0
    %v768 = vshrl.u32 %v767, 5
    %v769 = vand.u32 %v767, 31
    %v770 = vsub.s32 32, %v769
    %v771 = vshrl.u32 683565275, %v770
    %v772 = vshll.u32 683565275, %v769
    %v773 = vshrl.u32 2475754826, %v770
    %v774 = vor.u32 %v772, %v773
    %v775 = vshll.u32 2475754826, %v769
    %v776 = vshrl.u32 2131351028, %v770
    %v777 = vor.u32 %v775, %v776
    %v778 = vshll.u32 2131351028, %v769
    %v779 = vshrl.u32 2102212464, %v770
    %v780 = vor.u32 %v778, %v779
    %v781 = vshll.u32 2102212464, %v769
    %v782 = vshrl.u32 920167782, %v770
    %v783 = vor.u32 %v781, %v782
    %v784 = vshll.u32 920167782, %v769
    %v785 = vshrl.u32 1326507024, %v770
    %v786 = vor.u32 %v784, %v785
    %vm787 = vcmp.lt.s32.totalorder %v768, 1
    %vm788 = vcmp.lt.s32.totalorder %v768, 2
    %vm789 = vcmp.lt.s32.totalorder %v768, 3
    %vm790 = vcmp.lt.s32.totalorder %v768, 4
    %v791 = vsel %vm787, %v771, %v774
    %v792 = vsel %vm790, %v780, 2102212464
    %v793 = vsel %vm789, %v777, %v792
    %v794 = vsel %vm788, %v791, %v793
    %v795 = vsel %vm787, %v774, %v777
    %v796 = vsel %vm790, %v783, 920167782
    %v797 = vsel %vm789, %v780, %v796
    %v798 = vsel %vm788, %v795, %v797
    %v799 = vsel %vm787, %v777, %v780
    %v800 = vsel %vm790, %v786, 1326507024
    %v801 = vsel %vm789, %v783, %v800
    %v802 = vsel %vm788, %v799, %v801
    %v803 = vshll.u32 %v763, 8
    %v804 = vmul.u32.u64.compose %v803, %v802
    %v805 = vextract.low.u32 %v804
    %v806 = vextract.high.u32 %v804
    %v807 = vmul.u32.u64.compose %v803, %v798
    %v808 = vextract.low.u32 %v807
    %v809 = vextract.high.u32 %v807
    %v810 = vmul.u32 %v803, %v794
    %v811 = vadd.s32 %v806, %v808
    %vm812 = vc.u32 %v806, %v808
    %v813 = vadd.s32 %v809, 1
    %v814 = vsel %vm812, %v813, %v809
    %v815 = vadd.s32 %v810, %v814
    %v816 = vadd.s32 %v815, 536870912
    %v817 = vshrl.u32 %v816, 30
    %v818 = vshll.u32 %v817, 30
    %v819 = vsub.s32 %v815, %v818
    %vm820 = vcmp.lt.s32.totalorder %v819, 0
    %v821 = vsub.s32 0, %v819
    %v822 = vsel %vm820, %v821, %v819
    %v823 = vclz %v822
    %v824 = vsub.s32 %v823, 2
    %vm825 = vcmp.gt.s32.totalorder 0, %v824
    %v826 = vsel %vm825, 0, %v824
    %v827 = vsub.s32 32, %v826
    %v828 = vshll.u32 %v819, %v826
    %v829 = vshrl.u32 %v811, %v827
    %v830 = vor.u32 %v828, %v829
    %v831 = vsub.s32 4294967266, %v826
    %v832 = vadd.s32 %v831, 127
    %v833 = vshll.u32 %v832, 23
    %v834 = vor.u32 4788187, %v833
    %v835 = vand.u32 2147483647, %v834
    %v837 = vcvt.s32.f32 %v830
    %v838 = vmul.f32 %v837, %v835
    %v839 = vxor.u32 %v838, 2147483648
    %v840 = vsel %vm757, %v839, %v838
    %v841 = vsub.s32 4, %v817
    %v842 = vsel %vm757, %v841, %v817
    %v843 = vsel %vm756, %v335, %v840
    %v844 = vsel %vm756, 0, %v842
    %v845 = vcosq.f32.pop %v843
    %v846 = vsinq.f32.pop %v843
    %vm847 = vweird.f32 %v335
    %v848 = vand.u32 %v844, 3
    %vm849 = vcmp.lt.s32.totalorder %v848, 2
    %vm850 = vcmp.eq.s32.totalorder %v848, 0
    %v851 = vxor.u32 %v846, 2147483648
    %v852 = vsel %vm850, %v845, %v851
    %vm853 = vcmp.eq.s32.totalorder %v848, 2
    %v854 = vxor.u32 %v845, 2147483648
    %v855 = vsel %vm853, %v854, %v846
    %v856 = vsel %vm849, %v852, %v855
    %v857 = vsel %vm847, nan, %v856
    %v858 = vand.u32 2147483647, %v336
    %vm859 = vcmp.le.f32.partialorder %v858, 0.7853982
    %vm860 = vcmp.lt.s32.totalorder %v336, 0
    %v861 = vand.u32 %v336, 2139095040
    %v862 = vshrl.u32 %v861, 23
    %v863 = vsub.s32 %v862, 127
    %v864 = vand.u32 2147483647, %v336
    %v865 = vand.u32 %v864, 8388607
    %v866 = vor.u32 %v865, 8388608
    %v867 = vsub.s32 0, %v866
    %v868 = vadd.s32 %v863, 1
    %vm869 = vcmp.gt.s32.totalorder %v868, 0
    %v870 = vsel %vm869, %v868, 0
    %v871 = vshrl.u32 %v870, 5
    %v872 = vand.u32 %v870, 31
    %v873 = vsub.s32 32, %v872
    %v874 = vshrl.u32 683565275, %v873
    %v875 = vshll.u32 683565275, %v872
    %v876 = vshrl.u32 2475754826, %v873
    %v877 = vor.u32 %v875, %v876
    %v878 = vshll.u32 2475754826, %v872
    %v879 = vshrl.u32 2131351028, %v873
    %v880 = vor.u32 %v878, %v879
    %v881 = vshll.u32 2131351028, %v872
    %v882 = vshrl.u32 2102212464, %v873
    %v883 = vor.u32 %v881, %v882
    %v884 = vshll.u32 2102212464, %v872
    %v885 = vshrl.u32 920167782, %v873
    %v886 = vor.u32 %v884, %v885
    %v887 = vshll.u32 920167782, %v872
    %v888 = vshrl.u32 1326507024, %v873
    %v889 = vor.u32 %v887, %v888
    %vm890 = vcmp.lt.s32.totalorder %v871, 1
    %vm891 = vcmp.lt.s32.totalorder %v871, 2
    %vm892 = vcmp.lt.s32.totalorder %v871, 3
    %vm893 = vcmp.lt.s32.totalorder %v871, 4
    %v894 = vsel %vm890, %v874, %v877
    %v895 = vsel %vm893, %v883, 2102212464
    %v896 = vsel %vm892, %v880, %v895
    %v897 = vsel %vm891, %v894, %v896
    %v898 = vsel %vm890, %v877, %v880
    %v899 = vsel %vm893, %v886, 920167782
    %v900 = vsel %vm892, %v883, %v899
    %v901 = vsel %vm891, %v898, %v900
    %v902 = vsel %vm890, %v880, %v883
    %v903 = vsel %vm893, %v889, 1326507024
    %v904 = vsel %vm892, %v886, %v903
    %v905 = vsel %vm891, %v902, %v904
    %v906 = vshll.u32 %v866, 8
    %v907 = vmul.u32.u64.compose %v906, %v905
    %v908 = vextract.low.u32 %v907
    %v909 = vextract.high.u32 %v907
    %v910 = vmul.u32.u64.compose %v906, %v901
    %v911 = vextract.low.u32 %v910
    %v912 = vextract.high.u32 %v910
    %v913 = vmul.u32 %v906, %v897
    %v914 = vadd.s32 %v909, %v911
    %vm915 = vc.u32 %v909, %v911
    %v916 = vadd.s32 %v912, 1
    %v917 = vsel %vm915, %v916, %v912
    %v918 = vadd.s32 %v913, %v917
    %v919 = vadd.s32 %v918, 536870912
    %v920 = vshrl.u32 %v919, 30
    %v921 = vshll.u32 %v920, 30
    %v922 = vsub.s32 %v918, %v921
    %vm923 = vcmp.lt.s32.totalorder %v922, 0
    %v924 = vsub.s32 0, %v922
    %v925 = vsel %vm923, %v924, %v922
    %v926 = vclz %v925
    %v927 = vsub.s32 %v926, 2
    %vm928 = vcmp.gt.s32.totalorder 0, %v927
    %v929 = vsel %vm928, 0, %v927
    %v930 = vsub.s32 32, %v929
    %v931 = vshll.u32 %v922, %v929
    %v932 = vshrl.u32 %v914, %v930
    %v933 = vor.u32 %v931, %v932
    %v934 = vsub.s32 4294967266, %v929
    %v935 = vadd.s32 %v934, 127
    %v936 = vshll.u32 %v935, 23
    %v937 = vor.u32 4788187, %v936
    %v938 = vand.u32 2147483647, %v937
    %v940 = vcvt.s32.f32 %v933
    %v941 = vmul.f32 %v940, %v938
    %v942 = vxor.u32 %v941, 2147483648
    %v943 = vsel %vm860, %v942, %v941
    %v944 = vsub.s32 4, %v920
    %v945 = vsel %vm860, %v944, %v920
    %v946 = vsel %vm859, %v336, %v943
    %v947 = vsel %vm859, 0, %v945
    %v948 = vcosq.f32.pop %v946
    %v949 = vsinq.f32.pop %v946
    %vm950 = vweird.f32 %v336
    %v951 = vand.u32 %v947, 3
    %vm952 = vcmp.lt.s32.totalorder %v951, 2
    %vm953 = vcmp.eq.s32.totalorder %v951, 0
    %v954 = vxor.u32 %v949, 2147483648
    %v955 = vsel %vm953, %v948, %v954
    %vm956 = vcmp.eq.s32.totalorder %v951, 2
    %v957 = vxor.u32 %v948, 2147483648
    %v958 = vsel %vm956, %v957, %v949
    %v959 = vsel %vm952, %v955, %v958
    %v960 = vsel %vm950, nan, %v959
    %v961 = vand.u32 2147483647, %v337
    %vm962 = vcmp.le.f32.partialorder %v961, 0.7853982
    %vm963 = vcmp.lt.s32.totalorder %v337, 0
    %v964 = vand.u32 %v337, 2139095040
    %v965 = vshrl.u32 %v964, 23
    %v966 = vsub.s32 %v965, 127
    %v967 = vand.u32 2147483647, %v337
    %v968 = vand.u32 %v967, 8388607
    %v969 = vor.u32 %v968, 8388608
    %v970 = vsub.s32 0, %v969
    %v971 = vadd.s32 %v966, 1
    %vm972 = vcmp.gt.s32.totalorder %v971, 0
    %v973 = vsel %vm972, %v971, 0
    %v974 = vshrl.u32 %v973, 5
    %v975 = vand.u32 %v973, 31
    %v976 = vsub.s32 32, %v975
    %v977 = vshrl.u32 683565275, %v976
    %v978 = vshll.u32 683565275, %v975
    %v979 = vshrl.u32 2475754826, %v976
    %v980 = vor.u32 %v978, %v979
    %v981 = vshll.u32 2475754826, %v975
    %v982 = vshrl.u32 2131351028, %v976
    %v983 = vor.u32 %v981, %v982
    %v984 = vshll.u32 2131351028, %v975
    %v985 = vshrl.u32 2102212464, %v976
    %v986 = vor.u32 %v984, %v985
    %v987 = vshll.u32 2102212464, %v975
    %v988 = vshrl.u32 920167782, %v976
    %v989 = vor.u32 %v987, %v988
    %v990 = vshll.u32 920167782, %v975
    %v991 = vshrl.u32 1326507024, %v976
    %v992 = vor.u32 %v990, %v991
    %vm993 = vcmp.lt.s32.totalorder %v974, 1
    %vm994 = vcmp.lt.s32.totalorder %v974, 2
    %vm995 = vcmp.lt.s32.totalorder %v974, 3
    %vm996 = vcmp.lt.s32.totalorder %v974, 4
    %v997 = vsel %vm993, %v977, %v980
    %v998 = vsel %vm996, %v986, 2102212464
    %v999 = vsel %vm995, %v983, %v998
    %v1000 = vsel %vm994, %v997, %v999
    %v1001 = vsel %vm993, %v980, %v983
    %v1002 = vsel %vm996, %v989, 920167782
    %v1003 = vsel %vm995, %v986, %v1002
    %v1004 = vsel %vm994, %v1001, %v1003
    %v1005 = vsel %vm993, %v983, %v986
    %v1006 = vsel %vm996, %v992, 1326507024
    %v1007 = vsel %vm995, %v989, %v1006
    %v1008 = vsel %vm994, %v1005, %v1007
    %v1009 = vshll.u32 %v969, 8
    %v1010 = vmul.u32.u64.compose %v1009, %v1008
    %v1011 = vextract.low.u32 %v1010
    %v1012 = vextract.high.u32 %v1010
    %v1013 = vmul.u32.u64.compose %v1009, %v1004
    %v1014 = vextract.low.u32 %v1013
    %v1015 = vextract.high.u32 %v1013
    %v1016 = vmul.u32 %v1009, %v1000
    %v1017 = vadd.s32 %v1012, %v1014
    %vm1018 = vc.u32 %v1012, %v1014
    %v1019 = vadd.s32 %v1015, 1
    %v1020 = vsel %vm1018, %v1019, %v1015
    %v1021 = vadd.s32 %v1016, %v1020
    %v1022 = vadd.s32 %v1021, 536870912
    %v1023 = vshrl.u32 %v1022, 30
    %v1024 = vshll.u32 %v1023, 30
    %v1025 = vsub.s32 %v1021, %v1024
    %vm1026 = vcmp.lt.s32.totalorder %v1025, 0
    %v1027 = vsub.s32 0, %v1025
    %v1028 = vsel %vm1026, %v1027, %v1025
    %v1029 = vclz %v1028
    %v1030 = vsub.s32 %v1029, 2
    %vm1031 = vcmp.gt.s32.totalorder 0, %v1030
    %v1032 = vsel %vm1031, 0, %v1030
    %v1033 = vsub.s32 32, %v1032
    %v1034 = vshll.u32 %v1025, %v1032
    %v1035 = vshrl.u32 %v1017, %v1033
    %v1036 = vor.u32 %v1034, %v1035
    %v1037 = vsub.s32 4294967266, %v1032
    %v1038 = vadd.s32 %v1037, 127
    %v1039 = vshll.u32 %v1038, 23
    %v1040 = vor.u32 4788187, %v1039
    %v1041 = vand.u32 2147483647, %v1040
    %v1043 = vcvt.s32.f32 %v1036
    %v1044 = vmul.f32 %v1043, %v1041
    %v1045 = vxor.u32 %v1044, 2147483648
    %v1046 = vsel %vm963, %v1045, %v1044
    %v1047 = vsub.s32 4, %v1023
    %v1048 = vsel %vm963, %v1047, %v1023
    %v1049 = vsel %vm962, %v337, %v1046
    %v1050 = vsel %vm962, 0, %v1048
    %v1051 = vcosq.f32.pop %v1049
    %v1052 = vsinq.f32.pop %v1049
    %vm1053 = vweird.f32 %v337
    %v1054 = vand.u32 %v1050, 3
    %vm1055 = vcmp.lt.s32.totalorder %v1054, 2
    %vm1056 = vcmp.eq.s32.totalorder %v1054, 0
    %v1057 = vxor.u32 %v1052, 2147483648
    %v1058 = vsel %vm1056, %v1051, %v1057
    %vm1059 = vcmp.eq.s32.totalorder %v1054, 2
    %v1060 = vxor.u32 %v1051, 2147483648
    %v1061 = vsel %vm1059, %v1060, %v1052
    %v1062 = vsel %vm1055, %v1058, %v1061
    %v1063 = vsel %vm1053, nan, %v1062
    %v1064 = vand.u32 2147483647, %v338
    %vm1065 = vcmp.le.f32.partialorder %v1064, 0.7853982
    %vm1066 = vcmp.lt.s32.totalorder %v338, 0
    %v1067 = vand.u32 %v338, 2139095040
    %v1068 = vshrl.u32 %v1067, 23
    %v1069 = vsub.s32 %v1068, 127
    %v1070 = vand.u32 2147483647, %v338
    %v1071 = vand.u32 %v1070, 8388607
    %v1072 = vor.u32 %v1071, 8388608
    %v1073 = vsub.s32 0, %v1072
    %v1074 = vadd.s32 %v1069, 1
    %vm1075 = vcmp.gt.s32.totalorder %v1074, 0
    %v1076 = vsel %vm1075, %v1074, 0
    %v1077 = vshrl.u32 %v1076, 5
    %v1078 = vand.u32 %v1076, 31
    %v1079 = vsub.s32 32, %v1078
    %v1080 = vshrl.u32 683565275, %v1079
    %v1081 = vshll.u32 683565275, %v1078
    %v1082 = vshrl.u32 2475754826, %v1079
    %v1083 = vor.u32 %v1081, %v1082
    %v1084 = vshll.u32 2475754826, %v1078
    %v1085 = vshrl.u32 2131351028, %v1079
    %v1086 = vor.u32 %v1084, %v1085
    %v1087 = vshll.u32 2131351028, %v1078
    %v1088 = vshrl.u32 2102212464, %v1079
    %v1089 = vor.u32 %v1087, %v1088
    %v1090 = vshll.u32 2102212464, %v1078
    %v1091 = vshrl.u32 920167782, %v1079
    %v1092 = vor.u32 %v1090, %v1091
    %v1093 = vshll.u32 920167782, %v1078
    %v1094 = vshrl.u32 1326507024, %v1079
    %v1095 = vor.u32 %v1093, %v1094
    %vm1096 = vcmp.lt.s32.totalorder %v1077, 1
    %vm1097 = vcmp.lt.s32.totalorder %v1077, 2
    %vm1098 = vcmp.lt.s32.totalorder %v1077, 3
    %vm1099 = vcmp.lt.s32.totalorder %v1077, 4
    %v1100 = vsel %vm1096, %v1080, %v1083
    %v1101 = vsel %vm1099, %v1089, 2102212464
    %v1102 = vsel %vm1098, %v1086, %v1101
    %v1103 = vsel %vm1097, %v1100, %v1102
    %v1104 = vsel %vm1096, %v1083, %v1086
    %v1105 = vsel %vm1099, %v1092, 920167782
    %v1106 = vsel %vm1098, %v1089, %v1105
    %v1107 = vsel %vm1097, %v1104, %v1106
    %v1108 = vsel %vm1096, %v1086, %v1089
    %v1109 = vsel %vm1099, %v1095, 1326507024
    %v1110 = vsel %vm1098, %v1092, %v1109
    %v1111 = vsel %vm1097, %v1108, %v1110
    %v1112 = vshll.u32 %v1072, 8
    %v1113 = vmul.u32.u64.compose %v1112, %v1111
    %v1114 = vextract.low.u32 %v1113
    %v1115 = vextract.high.u32 %v1113
    %v1116 = vmul.u32.u64.compose %v1112, %v1107
    %v1117 = vextract.low.u32 %v1116
    %v1118 = vextract.high.u32 %v1116
    %v1119 = vmul.u32 %v1112, %v1103
    %v1120 = vadd.s32 %v1115, %v1117
    %vm1121 = vc.u32 %v1115, %v1117
    %v1122 = vadd.s32 %v1118, 1
    %v1123 = vsel %vm1121, %v1122, %v1118
    %v1124 = vadd.s32 %v1119, %v1123
    %v1125 = vadd.s32 %v1124, 536870912
    %v1126 = vshrl.u32 %v1125, 30
    %v1127 = vshll.u32 %v1126, 30
    %v1128 = vsub.s32 %v1124, %v1127
    %vm1129 = vcmp.lt.s32.totalorder %v1128, 0
    %v1130 = vsub.s32 0, %v1128
    %v1131 = vsel %vm1129, %v1130, %v1128
    %v1132 = vclz %v1131
    %v1133 = vsub.s32 %v1132, 2
    %vm1134 = vcmp.gt.s32.totalorder 0, %v1133
    %v1135 = vsel %vm1134, 0, %v1133
    %v1136 = vsub.s32 32, %v1135
    %v1137 = vshll.u32 %v1128, %v1135
    %v1138 = vshrl.u32 %v1120, %v1136
    %v1139 = vor.u32 %v1137, %v1138
    %v1140 = vsub.s32 4294967266, %v1135
    %v1141 = vadd.s32 %v1140, 127
    %v1142 = vshll.u32 %v1141, 23
    %v1143 = vor.u32 4788187, %v1142
    %v1144 = vand.u32 2147483647, %v1143
    %v1146 = vcvt.s32.f32 %v1139
    %v1147 = vmul.f32 %v1146, %v1144
    %v1148 = vxor.u32 %v1147, 2147483648
    %v1149 = vsel %vm1066, %v1148, %v1147
    %v1150 = vsub.s32 4, %v1126
    %v1151 = vsel %vm1066, %v1150, %v1126
    %v1152 = vsel %vm1065, %v338, %v1149
    %v1153 = vsel %vm1065, 0, %v1151
    %v1154 = vcosq.f32.pop %v1152
    %v1155 = vsinq.f32.pop %v1152
    %vm1156 = vweird.f32 %v338
    %v1157 = vand.u32 %v1153, 3
    %vm1158 = vcmp.lt.s32.totalorder %v1157, 2
    %vm1159 = vcmp.eq.s32.totalorder %v1157, 0
    %v1160 = vxor.u32 %v1155, 2147483648
    %v1161 = vsel %vm1159, %v1154, %v1160
    %vm1162 = vcmp.eq.s32.totalorder %v1157, 2
    %v1163 = vxor.u32 %v1154, 2147483648
    %v1164 = vsel %vm1162, %v1163, %v1155
    %v1165 = vsel %vm1158, %v1161, %v1164
    %v1166 = vsel %vm1156, nan, %v1165
    %v1167 = vld [vmem:[%s3] sm:$0xff]
    %v1168 = vld [vmem:[%s3 + $0x8] sm:$0xff]
    %v1169 = vld [vmem:[%s3 + $0x10] sm:$0xff]
    %v1170 = vld [vmem:[%s3 + $0x18] sm:$0xff]
    %v1171 = vld [vmem:[%s4] sm:$0xff]
    %v1172 = vld [vmem:[%s4 + $0x8] sm:$0xff]
    %v1173 = vld [vmem:[%s4 + $0x10] sm:$0xff]
    %v1174 = vld [vmem:[%s4 + $0x18] sm:$0xff]
    %v1179 = vcombine.high %v442, %v442
    %v1180 = vcombine.high %v546, %v546
    %v1181 = vcombine.high %v650, %v650
    %v1182 = vcombine.high %v754, %v754
    %vm1183 = vcmask 23552
    %v1185 = vsel %vm1183, %v1171, 0
    %v1188 = vsel %vm1183, %v1172, 0
    %v1191 = vsel %vm1183, %v1173, 0
    %v1194 = vsel %vm1183, %v1174, 0
    %v1196 = vsel %vm134, %v442, 0
    %v1198 = vsel %vm134, %v1179, 0
    %v1200 = vsel %vm134, %v546, 0
    %v1202 = vsel %vm134, %v1180, 0
    %v1204 = vsel %vm134, %v650, 0
    %v1206 = vsel %vm134, %v1181, 0
    %v1208 = vsel %vm134, %v754, 0
    %v1210 = vsel %vm134, %v1182, 0
    %1212 = vmatprep.subr.mxu0 %v1198
    %1213 = vmatpush1.msra.mxu0 %v1196
    %1214 = vmatprep.subr.mxu0 0.0
    %1215 = vmatpush1.msra.mxu0 0.0
    %1216 = vmatprep.subr.mxu0 0.0
    %1217 = vmatpush1.msra.mxu0 0.0
    %1218 = vmatprep.subr.mxu0 0.0
    %1219 = vmatpush1.msra.mxu0 0.0
    %1220 = vmatprep.subr.mxu0 0.0
    %1221 = vmatpush1.msra.mxu0 0.0
    %1222 = vmatprep.subr.mxu0 0.0
    %1223 = vmatpush1.msra.mxu0 0.0
    %1224 = vmatprep.subr.mxu0 0.0
    %1225 = vmatpush1.msra.mxu0 0.0
    %1226 = vmatprep.subr.mxu0 0.0
    %1227 = vmatpush1.msra.mxu0 0.0
    %1228 = vmatprep.subr.mxu0 0.0
    %1229 = vmatpush1.msra.mxu0 0.0
    %1230 = vmatprep.subr.mxu0 0.0
    %1231 = vmatpush1.msra.mxu0 0.0
    %1232 = vmatprep.subr.mxu0 0.0
    %1233 = vmatpush1.msra.mxu0 0.0
    %1234 = vmatprep.subr.mxu0 0.0
    %1235 = vmatpush1.msra.mxu0 0.0
    %1236 = vmatprep.subr.mxu0 0.0
    %1237 = vmatpush1.msra.mxu0 0.0
    %1238 = vmatprep.subr.mxu0 0.0
    %1239 = vmatpush1.msra.mxu0 0.0
    %1240 = vmatprep.subr.mxu0 0.0
    %1241 = vmatpush1.msra.mxu0 0.0
    %1242 = vmatprep.subr.mxu0 0.0
    %1243 = vmatpush1.msra.mxu0 0.0
    %1244 = vmatprep.subr.mxu0 0.0
    %1245 = vmatpush1.msra.mxu0 0.0
    %1246 = vmatprep.subr.mxu0 0.0
    %1247 = vmatpush1.msra.mxu0 0.0
    %1248 = vmatprep.subr.mxu0 0.0
    %1249 = vmatpush1.msra.mxu0 0.0
    %1250 = vmatprep.subr.mxu0 0.0
    %1251 = vmatpush1.msra.mxu0 0.0
    %1252 = vmatprep.subr.mxu0 0.0
    %1253 = vmatpush1.msra.mxu0 0.0
    %1254 = vmatprep.subr.mxu0 0.0
    %1255 = vmatpush1.msra.mxu0 0.0
    %1256 = vmatprep.subr.mxu0 0.0
    %1257 = vmatpush1.msra.mxu0 0.0
    %1258 = vmatprep.subr.mxu0 0.0
    %1259 = vmatpush1.msra.mxu0 0.0
    %1260 = vmatprep.subr.mxu0 0.0
    %1261 = vmatpush1.msra.mxu0 0.0
    %1262 = vmatprep.subr.mxu0 0.0
    %1263 = vmatpush1.msra.mxu0 0.0
    %1264 = vmatprep.subr.mxu0 0.0
    %1265 = vmatpush1.msra.mxu0 0.0
    %1266 = vmatprep.subr.mxu0 0.0
    %1267 = vmatpush1.msra.mxu0 0.0
    %1268 = vmatprep.subr.mxu0 0.0
    %1269 = vmatpush1.msra.mxu0 0.0
    %1270 = vmatprep.subr.mxu0 0.0
    %1271 = vmatpush1.msra.mxu0 0.0
    %1272 = vmatprep.subr.mxu0 0.0
    %1273 = vmatpush1.msra.mxu0 0.0
    %1274 = vmatprep.subr.mxu0 0.0
    %1275 = vmatpush1.msra.mxu0 0.0
    %1276 = vmatprep.mubr.f32.mxu0 0.0
    %1277 = vmatmul.mubr.f32.gmra.mrb[0].mxu0 %v1185
    %v1278 = vpop.f32.mrb[0].mxu0
    %v1279 = vadd.f32 0.0, %v1278
    %v1280 = vpop.f32.mrb[0].mxu0
    %v1281 = vadd.f32 0.0, %v1280
    %1282 = vmatprep.mubr.f32.mxu0 0.0
    %1283 = vmatmul.mubr.f32.gmra.mrb[0].mxu0 %v1188
    %v1284 = vpop.f32.mrb[0].mxu0
    %v1285 = vadd.f32 0.0, %v1284
    %v1286 = vpop.f32.mrb[0].mxu0
    %v1287 = vadd.f32 0.0, %v1286
    %1288 = vmatprep.mubr.f32.mxu0 0.0
    %1289 = vmatmul.mubr.f32.gmra.mrb[0].mxu0 %v1191
    %v1290 = vpop.f32.mrb[0].mxu0
    %v1291 = vadd.f32 0.0, %v1290
    %v1292 = vpop.f32.mrb[0].mxu0
    %v1293 = vadd.f32 0.0, %v1292
    %1294 = vmatprep.mubr.f32.mxu0 0.0
    %1295 = vmatmul.mubr.f32.gmra.mrb[0].mxu0 %v1194
    %v1296 = vpop.f32.mrb[0].mxu0
    %v1297 = vadd.f32 0.0, %v1296
    %v1298 = vpop.f32.mrb[0].mxu0
    %v1299 = vadd.f32 0.0, %v1298
    %1300 = vdwg.mxu0
    %1301 = vmatprep.subr.mxu0 %v1202
    %1302 = vmatpush1.msra.mxu0 %v1200
    %1303 = vmatprep.subr.mxu0 0.0
    %1304 = vmatpush1.msra.mxu0 0.0
    %1305 = vmatprep.subr.mxu0 0.0
    %1306 = vmatpush1.msra.mxu0 0.0
    %1307 = vmatprep.subr.mxu0 0.0
    %1308 = vmatpush1.msra.mxu0 0.0
    %1309 = vmatprep.subr.mxu0 0.0
    %1310 = vmatpush1.msra.mxu0 0.0
    %1311 = vmatprep.subr.mxu0 0.0
    %1312 = vmatpush1.msra.mxu0 0.0
    %1313 = vmatprep.subr.mxu0 0.0
    %1314 = vmatpush1.msra.mxu0 0.0
    %1315 = vmatprep.subr.mxu0 0.0
    %1316 = vmatpush1.msra.mxu0 0.0
    %1317 = vmatprep.subr.mxu0 0.0
    %1318 = vmatpush1.msra.mxu0 0.0
    %1319 = vmatprep.subr.mxu0 0.0
    %1320 = vmatpush1.msra.mxu0 0.0
    %1321 = vmatprep.subr.mxu0 0.0
    %1322 = vmatpush1.msra.mxu0 0.0
    %1323 = vmatprep.subr.mxu0 0.0
    %1324 = vmatpush1.msra.mxu0 0.0
    %1325 = vmatprep.subr.mxu0 0.0
    %1326 = vmatpush1.msra.mxu0 0.0
    %1327 = vmatprep.subr.mxu0 0.0
    %1328 = vmatpush1.msra.mxu0 0.0
    %1329 = vmatprep.subr.mxu0 0.0
    %1330 = vmatpush1.msra.mxu0 0.0
    %1331 = vmatprep.subr.mxu0 0.0
    %1332 = vmatpush1.msra.mxu0 0.0
    %1333 = vmatprep.subr.mxu0 0.0
    %1334 = vmatpush1.msra.mxu0 0.0
    %1335 = vmatprep.subr.mxu0 0.0
    %1336 = vmatpush1.msra.mxu0 0.0
    %1337 = vmatprep.subr.mxu0 0.0
    %1338 = vmatpush1.msra.mxu0 0.0
    %1339 = vmatprep.subr.mxu0 0.0
    %1340 = vmatpush1.msra.mxu0 0.0
    %1341 = vmatprep.subr.mxu0 0.0
    %1342 = vmatpush1.msra.mxu0 0.0
    %1343 = vmatprep.subr.mxu0 0.0
    %1344 = vmatpush1.msra.mxu0 0.0
    %1345 = vmatprep.subr.mxu0 0.0
    %1346 = vmatpush1.msra.mxu0 0.0
    %1347 = vmatprep.subr.mxu0 0.0
    %1348 = vmatpush1.msra.mxu0 0.0
    %1349 = vmatprep.subr.mxu0 0.0
    %1350 = vmatpush1.msra.mxu0 0.0
    %1351 = vmatprep.subr.mxu0 0.0
    %1352 = vmatpush1.msra.mxu0 0.0
    %1353 = vmatprep.subr.mxu0 0.0
    %1354 = vmatpush1.msra.mxu0 0.0
    %1355 = vmatprep.subr.mxu0 0.0
    %1356 = vmatpush1.msra.mxu0 0.0
    %1357 = vmatprep.subr.mxu0 0.0
    %1358 = vmatpush1.msra.mxu0 0.0
    %1359 = vmatprep.subr.mxu0 0.0
    %1360 = vmatpush1.msra.mxu0 0.0
    %1361 = vmatprep.subr.mxu0 0.0
    %1362 = vmatpush1.msra.mxu0 0.0
    %1363 = vmatprep.subr.mxu0 0.0
    %1364 = vmatpush1.msra.mxu0 0.0
    %1365 = vmatprep.mubr.f32.mxu0 0.0
    %1366 = vmatmul.mubr.f32.gmra.mrb[0].mxu0 %v1185
    %v1367 = vpop.f32.mrb[0].mxu0
    %v1368 = vadd.f32 0.0, %v1367
    %v1369 = vpop.f32.mrb[0].mxu0
    %v1370 = vadd.f32 0.0, %v1369
    %1371 = vmatprep.mubr.f32.mxu0 0.0
    %1372 = vmatmul.mubr.f32.gmra.mrb[0].mxu0 %v1188
    %v1373 = vpop.f32.mrb[0].mxu0
    %v1374 = vadd.f32 0.0, %v1373
    %v1375 = vpop.f32.mrb[0].mxu0
    %v1376 = vadd.f32 0.0, %v1375
    %1377 = vmatprep.mubr.f32.mxu0 0.0
    %1378 = vmatmul.mubr.f32.gmra.mrb[0].mxu0 %v1191
    %v1379 = vpop.f32.mrb[0].mxu0
    %v1380 = vadd.f32 0.0, %v1379
    %v1381 = vpop.f32.mrb[0].mxu0
    %v1382 = vadd.f32 0.0, %v1381
    %1383 = vmatprep.mubr.f32.mxu0 0.0
    %1384 = vmatmul.mubr.f32.gmra.mrb[0].mxu0 %v1194
    %v1385 = vpop.f32.mrb[0].mxu0
    %v1386 = vadd.f32 0.0, %v1385
    %v1387 = vpop.f32.mrb[0].mxu0
    %v1388 = vadd.f32 0.0, %v1387
    %1389 = vdwg.mxu0
    %1390 = vmatprep.subr.mxu0 %v1206
    %1391 = vmatpush1.msra.mxu0 %v1204
    %1392 = vmatprep.subr.mxu0 0.0
    %1393 = vmatpush1.msra.mxu0 0.0
    %1394 = vmatprep.subr.mxu0 0.0
    %1395 = vmatpush1.msra.mxu0 0.0
    %1396 = vmatprep.subr.mxu0 0.0
    %1397 = vmatpush1.msra.mxu0 0.0
    %1398 = vmatprep.subr.mxu0 0.0
    %1399 = vmatpush1.msra.mxu0 0.0
    %1400 = vmatprep.subr.mxu0 0.0
    %1401 = vmatpush1.msra.mxu0 0.0
    %1402 = vmatprep.subr.mxu0 0.0
    %1403 = vmatpush1.msra.mxu0 0.0
    %1404 = vmatprep.subr.mxu0 0.0
    %1405 = vmatpush1.msra.mxu0 0.0
    %1406 = vmatprep.subr.mxu0 0.0
    %1407 = vmatpush1.msra.mxu0 0.0
    %1408 = vmatprep.subr.mxu0 0.0
    %1409 = vmatpush1.msra.mxu0 0.0
    %1410 = vmatprep.subr.mxu0 0.0
    %1411 = vmatpush1.msra.mxu0 0.0
    %1412 = vmatprep.subr.mxu0 0.0
    %1413 = vmatpush1.msra.mxu0 0.0
    %1414 = vmatprep.subr.mxu0 0.0
    %1415 = vmatpush1.msra.mxu0 0.0
    %1416 = vmatprep.subr.mxu0 0.0
    %1417 = vmatpush1.msra.mxu0 0.0
    %1418 = vmatprep.subr.mxu0 0.0
    %1419 = vmatpush1.msra.mxu0 0.0
    %1420 = vmatprep.subr.mxu0 0.0
    %1421 = vmatpush1.msra.mxu0 0.0
    %1422 = vmatprep.subr.mxu0 0.0
    %1423 = vmatpush1.msra.mxu0 0.0
    %1424 = vmatprep.subr.mxu0 0.0
    %1425 = vmatpush1.msra.mxu0 0.0
    %1426 = vmatprep.subr.mxu0 0.0
    %1427 = vmatpush1.msra.mxu0 0.0
    %1428 = vmatprep.subr.mxu0 0.0
    %1429 = vmatpush1.msra.mxu0 0.0
    %1430 = vmatprep.subr.mxu0 0.0
    %1431 = vmatpush1.msra.mxu0 0.0
    %1432 = vmatprep.subr.mxu0 0.0
    %1433 = vmatpush1.msra.mxu0 0.0
    %1434 = vmatprep.subr.mxu0 0.0
    %1435 = vmatpush1.msra.mxu0 0.0
    %1436 = vmatprep.subr.mxu0 0.0
    %1437 = vmatpush1.msra.mxu0 0.0
    %1438 = vmatprep.subr.mxu0 0.0
    %1439 = vmatpush1.msra.mxu0 0.0
    %1440 = vmatprep.subr.mxu0 0.0
    %1441 = vmatpush1.msra.mxu0 0.0
    %1442 = vmatprep.subr.mxu0 0.0
    %1443 = vmatpush1.msra.mxu0 0.0
    %1444 = vmatprep.subr.mxu0 0.0
    %1445 = vmatpush1.msra.mxu0 0.0
    %1446 = vmatprep.subr.mxu0 0.0
    %1447 = vmatpush1.msra.mxu0 0.0
    %1448 = vmatprep.subr.mxu0 0.0
    %1449 = vmatpush1.msra.mxu0 0.0
    %1450 = vmatprep.subr.mxu0 0.0
    %1451 = vmatpush1.msra.mxu0 0.0
    %1452 = vmatprep.subr.mxu0 0.0
    %1453 = vmatpush1.msra.mxu0 0.0
    %1454 = vmatprep.mubr.f32.mxu0 0.0
    %1455 = vmatmul.mubr.f32.gmra.mrb[0].mxu0 %v1185
    %v1456 = vpop.f32.mrb[0].mxu0
    %v1457 = vadd.f32 0.0, %v1456
    %v1458 = vpop.f32.mrb[0].mxu0
    %v1459 = vadd.f32 0.0, %v1458
    %1460 = vmatprep.mubr.f32.mxu0 0.0
    %1461 = vmatmul.mubr.f32.gmra.mrb[0].mxu0 %v1188
    %v1462 = vpop.f32.mrb[0].mxu0
    %v1463 = vadd.f32 0.0, %v1462
    %v1464 = vpop.f32.mrb[0].mxu0
    %v1465 = vadd.f32 0.0, %v1464
    %1466 = vmatprep.mubr.f32.mxu0 0.0
    %1467 = vmatmul.mubr.f32.gmra.mrb[0].mxu0 %v1191
    %v1468 = vpop.f32.mrb[0].mxu0
    %v1469 = vadd.f32 0.0, %v1468
    %v1470 = vpop.f32.mrb[0].mxu0
    %v1471 = vadd.f32 0.0, %v1470
    %1472 = vmatprep.mubr.f32.mxu0 0.0
    %1473 = vmatmul.mubr.f32.gmra.mrb[0].mxu0 %v1194
    %v1474 = vpop.f32.mrb[0].mxu0
    %v1475 = vadd.f32 0.0, %v1474
    %v1476 = vpop.f32.mrb[0].mxu0
    %v1477 = vadd.f32 0.0, %v1476
    %1478 = vdwg.mxu0
    %1479 = vmatprep.subr.mxu0 %v1210
    %1480 = vmatpush1.msra.mxu0 %v1208
    %1481 = vmatprep.subr.mxu0 0.0
    %1482 = vmatpush1.msra.mxu0 0.0
    %1483 = vmatprep.subr.mxu0 0.0
    %1484 = vmatpush1.msra.mxu0 0.0
    %1485 = vmatprep.subr.mxu0 0.0
    %1486 = vmatpush1.msra.mxu0 0.0
    %1487 = vmatprep.subr.mxu0 0.0
    %1488 = vmatpush1.msra.mxu0 0.0
    %1489 = vmatprep.subr.mxu0 0.0
    %1490 = vmatpush1.msra.mxu0 0.0
    %1491 = vmatprep.subr.mxu0 0.0
    %1492 = vmatpush1.msra.mxu0 0.0
    %1493 = vmatprep.subr.mxu0 0.0
    %1494 = vmatpush1.msra.mxu0 0.0
    %1495 = vmatprep.subr.mxu0 0.0
    %1496 = vmatpush1.msra.mxu0 0.0
    %1497 = vmatprep.subr.mxu0 0.0
    %1498 = vmatpush1.msra.mxu0 0.0
    %1499 = vmatprep.subr.mxu0 0.0
    %1500 = vmatpush1.msra.mxu0 0.0
    %1501 = vmatprep.subr.mxu0 0.0
    %1502 = vmatpush1.msra.mxu0 0.0
    %1503 = vmatprep.subr.mxu0 0.0
    %1504 = vmatpush1.msra.mxu0 0.0
    %1505 = vmatprep.subr.mxu0 0.0
    %1506 = vmatpush1.msra.mxu0 0.0
    %1507 = vmatprep.subr.mxu0 0.0
    %1508 = vmatpush1.msra.mxu0 0.0
    %1509 = vmatprep.subr.mxu0 0.0
    %1510 = vmatpush1.msra.mxu0 0.0
    %1511 = vmatprep.subr.mxu0 0.0
    %1512 = vmatpush1.msra.mxu0 0.0
    %1513 = vmatprep.subr.mxu0 0.0
    %1514 = vmatpush1.msra.mxu0 0.0
    %1515 = vmatprep.subr.mxu0 0.0
    %1516 = vmatpush1.msra.mxu0 0.0
    %1517 = vmatprep.subr.mxu0 0.0
    %1518 = vmatpush1.msra.mxu0 0.0
    %1519 = vmatprep.subr.mxu0 0.0
    %1520 = vmatpush1.msra.mxu0 0.0
    %1521 = vmatprep.subr.mxu0 0.0
    %1522 = vmatpush1.msra.mxu0 0.0
    %1523 = vmatprep.subr.mxu0 0.0
    %1524 = vmatpush1.msra.mxu0 0.0
    %1525 = vmatprep.subr.mxu0 0.0
    %1526 = vmatpush1.msra.mxu0 0.0
    %1527 = vmatprep.subr.mxu0 0.0
    %1528 = vmatpush1.msra.mxu0 0.0
    %1529 = vmatprep.subr.mxu0 0.0
    %1530 = vmatpush1.msra.mxu0 0.0
    %1531 = vmatprep.subr.mxu0 0.0
    %1532 = vmatpush1.msra.mxu0 0.0
    %1533 = vmatprep.subr.mxu0 0.0
    %1534 = vmatpush1.msra.mxu0 0.0
    %1535 = vmatprep.subr.mxu0 0.0
    %1536 = vmatpush1.msra.mxu0 0.0
    %1537 = vmatprep.subr.mxu0 0.0
    %1538 = vmatpush1.msra.mxu0 0.0
    %1539 = vmatprep.subr.mxu0 0.0
    %1540 = vmatpush1.msra.mxu0 0.0
    %1541 = vmatprep.subr.mxu0 0.0
    %1542 = vmatpush1.msra.mxu0 0.0
    %1543 = vmatprep.mubr.f32.mxu0 0.0
    %1544 = vmatmul.mubr.f32.gmra.mrb[0].mxu0 %v1185
    %v1545 = vpop.f32.mrb[0].mxu0
    %v1546 = vadd.f32 0.0, %v1545
    %v1547 = vpop.f32.mrb[0].mxu0
    %v1548 = vadd.f32 0.0, %v1547
    %1549 = vmatprep.mubr.f32.mxu0 0.0
    %1550 = vmatmul.mubr.f32.gmra.mrb[0].mxu0 %v1188
    %v1551 = vpop.f32.mrb[0].mxu0
    %v1552 = vadd.f32 0.0, %v1551
    %v1553 = vpop.f32.mrb[0].mxu0
    %v1554 = vadd.f32 0.0, %v1553
    %1555 = vmatprep.mubr.f32.mxu0 0.0
    %1556 = vmatmul.mubr.f32.gmra.mrb[0].mxu0 %v1191
    %v1557 = vpop.f32.mrb[0].mxu0
    %v1558 = vadd.f32 0.0, %v1557
    %v1559 = vpop.f32.mrb[0].mxu0
    %v1560 = vadd.f32 0.0, %v1559
    %1561 = vmatprep.mubr.f32.mxu0 0.0
    %1562 = vmatmul.mubr.f32.gmra.mrb[0].mxu0 %v1194
    %v1563 = vpop.f32.mrb[0].mxu0
    %v1564 = vadd.f32 0.0, %v1563
    %v1565 = vpop.f32.mrb[0].mxu0
    %v1566 = vadd.f32 0.0, %v1565
    %1567 = vdwg.mxu0
    %v1572 = vcombine.high %v90, %v90
    %v1573 = vcombine.high %v91, %v91
    %v1574 = vcombine.high %v92, %v92
    %v1575 = vcombine.high %v93, %v93
    %v1577 = vsel %vm1183, %v1167, 0
    %v1580 = vsel %vm1183, %v1168, 0
    %v1583 = vsel %vm1183, %v1169, 0
    %v1586 = vsel %vm1183, %v1170, 0
    %v1588 = vsel %vm134, %v90, 0
    %v1590 = vsel %vm134, %v1572, 0
    %v1592 = vsel %vm134, %v91, 0
    %v1594 = vsel %vm134, %v1573, 0
    %v1596 = vsel %vm134, %v92, 0
    %v1598 = vsel %vm134, %v1574, 0
    %v1600 = vsel %vm134, %v93, 0
    %v1602 = vsel %vm134, %v1575, 0
    %1604 = vmatprep.subr.mxu0 %v1590
    %1605 = vmatpush1.msra.mxu0 %v1588
    %1606 = vmatprep.subr.mxu0 0.0
    %1607 = vmatpush1.msra.mxu0 0.0
    %1608 = vmatprep.subr.mxu0 0.0
    %1609 = vmatpush1.msra.mxu0 0.0
    %1610 = vmatprep.subr.mxu0 0.0
    %1611 = vmatpush1.msra.mxu0 0.0
    %1612 = vmatprep.subr.mxu0 0.0
    %1613 = vmatpush1.msra.mxu0 0.0
    %1614 = vmatprep.subr.mxu0 0.0
    %1615 = vmatpush1.msra.mxu0 0.0
    %1616 = vmatprep.subr.mxu0 0.0
    %1617 = vmatpush1.msra.mxu0 0.0
    %1618 = vmatprep.subr.mxu0 0.0
    %1619 = vmatpush1.msra.mxu0 0.0
    %1620 = vmatprep.subr.mxu0 0.0
    %1621 = vmatpush1.msra.mxu0 0.0
    %1622 = vmatprep.subr.mxu0 0.0
    %1623 = vmatpush1.msra.mxu0 0.0
    %1624 = vmatprep.subr.mxu0 0.0
    %1625 = vmatpush1.msra.mxu0 0.0
    %1626 = vmatprep.subr.mxu0 0.0
    %1627 = vmatpush1.msra.mxu0 0.0
    %1628 = vmatprep.subr.mxu0 0.0
    %1629 = vmatpush1.msra.mxu0 0.0
    %1630 = vmatprep.subr.mxu0 0.0
    %1631 = vmatpush1.msra.mxu0 0.0
    %1632 = vmatprep.subr.mxu0 0.0
    %1633 = vmatpush1.msra.mxu0 0.0
    %1634 = vmatprep.subr.mxu0 0.0
    %1635 = vmatpush1.msra.mxu0 0.0
    %1636 = vmatprep.subr.mxu0 0.0
    %1637 = vmatpush1.msra.mxu0 0.0
    %1638 = vmatprep.subr.mxu0 0.0
    %1639 = vmatpush1.msra.mxu0 0.0
    %1640 = vmatprep.subr.mxu0 0.0
    %1641 = vmatpush1.msra.mxu0 0.0
    %1642 = vmatprep.subr.mxu0 0.0
    %1643 = vmatpush1.msra.mxu0 0.0
    %1644 = vmatprep.subr.mxu0 0.0
    %1645 = vmatpush1.msra.mxu0 0.0
    %1646 = vmatprep.subr.mxu0 0.0
    %1647 = vmatpush1.msra.mxu0 0.0
    %1648 = vmatprep.subr.mxu0 0.0
    %1649 = vmatpush1.msra.mxu0 0.0
    %1650 = vmatprep.subr.mxu0 0.0
    %1651 = vmatpush1.msra.mxu0 0.0
    %1652 = vmatprep.subr.mxu0 0.0
    %1653 = vmatpush1.msra.mxu0 0.0
    %1654 = vmatprep.subr.mxu0 0.0
    %1655 = vmatpush1.msra.mxu0 0.0
    %1656 = vmatprep.subr.mxu0 0.0
    %1657 = vmatpush1.msra.mxu0 0.0
    %1658 = vmatprep.subr.mxu0 0.0
    %1659 = vmatpush1.msra.mxu0 0.0
    %1660 = vmatprep.subr.mxu0 0.0
    %1661 = vmatpush1.msra.mxu0 0.0
    %1662 = vmatprep.subr.mxu0 0.0
    %1663 = vmatpush1.msra.mxu0 0.0
    %1664 = vmatprep.subr.mxu0 0.0
    %1665 = vmatpush1.msra.mxu0 0.0
    %1666 = vmatprep.subr.mxu0 0.0
    %1667 = vmatpush1.msra.mxu0 0.0
    %1668 = vmatprep.mubr.f32.mxu0 0.0
    %1669 = vmatmul.mubr.f32.gmra.mrb[0].mxu0 %v1577
    %v1670 = vpop.f32.mrb[0].mxu0
    %v1671 = vadd.f32 %v1279, %v1670
    %v1672 = vpop.f32.mrb[0].mxu0
    %v1673 = vadd.f32 %v1281, %v1672
    %1674 = vmatprep.mubr.f32.mxu0 0.0
    %1675 = vmatmul.mubr.f32.gmra.mrb[0].mxu0 %v1580
    %v1676 = vpop.f32.mrb[0].mxu0
    %v1677 = vadd.f32 %v1285, %v1676
    %v1678 = vpop.f32.mrb[0].mxu0
    %v1679 = vadd.f32 %v1287, %v1678
    %1680 = vmatprep.mubr.f32.mxu0 0.0
    %1681 = vmatmul.mubr.f32.gmra.mrb[0].mxu0 %v1583
    %v1682 = vpop.f32.mrb[0].mxu0
    %v1683 = vadd.f32 %v1291, %v1682
    %v1684 = vpop.f32.mrb[0].mxu0
    %v1685 = vadd.f32 %v1293, %v1684
    %1686 = vmatprep.mubr.f32.mxu0 0.0
    %1687 = vmatmul.mubr.f32.gmra.mrb[0].mxu0 %v1586
    %v1688 = vpop.f32.mrb[0].mxu0
    %v1689 = vadd.f32 %v1297, %v1688
    %v1690 = vpop.f32.mrb[0].mxu0
    %v1691 = vadd.f32 %v1299, %v1690
    %1692 = vdwg.mxu0
    %1693 = vmatprep.subr.mxu0 %v1594
    %1694 = vmatpush1.msra.mxu0 %v1592
    %1695 = vmatprep.subr.mxu0 0.0
    %1696 = vmatpush1.msra.mxu0 0.0
    %1697 = vmatprep.subr.mxu0 0.0
    %1698 = vmatpush1.msra.mxu0 0.0
    %1699 = vmatprep.subr.mxu0 0.0
    %1700 = vmatpush1.msra.mxu0 0.0
    %1701 = vmatprep.subr.mxu0 0.0
    %1702 = vmatpush1.msra.mxu0 0.0
    %1703 = vmatprep.subr.mxu0 0.0
    %1704 = vmatpush1.msra.mxu0 0.0
    %1705 = vmatprep.subr.mxu0 0.0
    %1706 = vmatpush1.msra.mxu0 0.0
    %1707 = vmatprep.subr.mxu0 0.0
    %1708 = vmatpush1.msra.mxu0 0.0
    %1709 = vmatprep.subr.mxu0 0.0
    %1710 = vmatpush1.msra.mxu0 0.0
    %1711 = vmatprep.subr.mxu0 0.0
    %1712 = vmatpush1.msra.mxu0 0.0
    %1713 = vmatprep.subr.mxu0 0.0
    %1714 = vmatpush1.msra.mxu0 0.0
    %1715 = vmatprep.subr.mxu0 0.0
    %1716 = vmatpush1.msra.mxu0 0.0
    %1717 = vmatprep.subr.mxu0 0.0
    %1718 = vmatpush1.msra.mxu0 0.0
    %1719 = vmatprep.subr.mxu0 0.0
    %1720 = vmatpush1.msra.mxu0 0.0
    %1721 = vmatprep.subr.mxu0 0.0
    %1722 = vmatpush1.msra.mxu0 0.0
    %1723 = vmatprep.subr.mxu0 0.0
    %1724 = vmatpush1.msra.mxu0 0.0
    %1725 = vmatprep.subr.mxu0 0.0
    %1726 = vmatpush1.msra.mxu0 0.0
    %1727 = vmatprep.subr.mxu0 0.0
    %1728 = vmatpush1.msra.mxu0 0.0
    %1729 = vmatprep.subr.mxu0 0.0
    %1730 = vmatpush1.msra.mxu0 0.0
    %1731 = vmatprep.subr.mxu0 0.0
    %1732 = vmatpush1.msra.mxu0 0.0
    %1733 = vmatprep.subr.mxu0 0.0
    %1734 = vmatpush1.msra.mxu0 0.0
    %1735 = vmatprep.subr.mxu0 0.0
    %1736 = vmatpush1.msra.mxu0 0.0
    %1737 = vmatprep.subr.mxu0 0.0
    %1738 = vmatpush1.msra.mxu0 0.0
    %1739 = vmatprep.subr.mxu0 0.0
    %1740 = vmatpush1.msra.mxu0 0.0
    %1741 = vmatprep.subr.mxu0 0.0
    %1742 = vmatpush1.msra.mxu0 0.0
    %1743 = vmatprep.subr.mxu0 0.0
    %1744 = vmatpush1.msra.mxu0 0.0
    %1745 = vmatprep.subr.mxu0 0.0
    %1746 = vmatpush1.msra.mxu0 0.0
    %1747 = vmatprep.subr.mxu0 0.0
    %1748 = vmatpush1.msra.mxu0 0.0
    %1749 = vmatprep.subr.mxu0 0.0
    %1750 = vmatpush1.msra.mxu0 0.0
    %1751 = vmatprep.subr.mxu0 0.0
    %1752 = vmatpush1.msra.mxu0 0.0
    %1753 = vmatprep.subr.mxu0 0.0
    %1754 = vmatpush1.msra.mxu0 0.0
    %1755 = vmatprep.subr.mxu0 0.0
    %1756 = vmatpush1.msra.mxu0 0.0
    %1757 = vmatprep.mubr.f32.mxu0 0.0
    %1758 = vmatmul.mubr.f32.gmra.mrb[0].mxu0 %v1577
    %v1759 = vpop.f32.mrb[0].mxu0
    %v1760 = vadd.f32 %v1368, %v1759
    %v1761 = vpop.f32.mrb[0].mxu0
    %v1762 = vadd.f32 %v1370, %v1761
    %1763 = vmatprep.mubr.f32.mxu0 0.0
    %1764 = vmatmul.mubr.f32.gmra.mrb[0].mxu0 %v1580
    %v1765 = vpop.f32.mrb[0].mxu0
    %v1766 = vadd.f32 %v1374, %v1765
    %v1767 = vpop.f32.mrb[0].mxu0
    %v1768 = vadd.f32 %v1376, %v1767
    %1769 = vmatprep.mubr.f32.mxu0 0.0
    %1770 = vmatmul.mubr.f32.gmra.mrb[0].mxu0 %v1583
    %v1771 = vpop.f32.mrb[0].mxu0
    %v1772 = vadd.f32 %v1380, %v1771
    %v1773 = vpop.f32.mrb[0].mxu0
    %v1774 = vadd.f32 %v1382, %v1773
    %1775 = vmatprep.mubr.f32.mxu0 0.0
    %1776 = vmatmul.mubr.f32.gmra.mrb[0].mxu0 %v1586
    %v1777 = vpop.f32.mrb[0].mxu0
    %v1778 = vadd.f32 %v1386, %v1777
    %v1779 = vpop.f32.mrb[0].mxu0
    %v1780 = vadd.f32 %v1388, %v1779
    %1781 = vdwg.mxu0
    %1782 = vmatprep.subr.mxu0 %v1598
    %1783 = vmatpush1.msra.mxu0 %v1596
    %1784 = vmatprep.subr.mxu0 0.0
    %1785 = vmatpush1.msra.mxu0 0.0
    %1786 = vmatprep.subr.mxu0 0.0
    %1787 = vmatpush1.msra.mxu0 0.0
    %1788 = vmatprep.subr.mxu0 0.0
    %1789 = vmatpush1.msra.mxu0 0.0
    %1790 = vmatprep.subr.mxu0 0.0
    %1791 = vmatpush1.msra.mxu0 0.0
    %1792 = vmatprep.subr.mxu0 0.0
    %1793 = vmatpush1.msra.mxu0 0.0
    %1794 = vmatprep.subr.mxu0 0.0
    %1795 = vmatpush1.msra.mxu0 0.0
    %1796 = vmatprep.subr.mxu0 0.0
    %1797 = vmatpush1.msra.mxu0 0.0
    %1798 = vmatprep.subr.mxu0 0.0
    %1799 = vmatpush1.msra.mxu0 0.0
    %1800 = vmatprep.subr.mxu0 0.0
    %1801 = vmatpush1.msra.mxu0 0.0
    %1802 = vmatprep.subr.mxu0 0.0
    %1803 = vmatpush1.msra.mxu0 0.0
    %1804 = vmatprep.subr.mxu0 0.0
    %1805 = vmatpush1.msra.mxu0 0.0
    %1806 = vmatprep.subr.mxu0 0.0
    %1807 = vmatpush1.msra.mxu0 0.0
    %1808 = vmatprep.subr.mxu0 0.0
    %1809 = vmatpush1.msra.mxu0 0.0
    %1810 = vmatprep.subr.mxu0 0.0
    %1811 = vmatpush1.msra.mxu0 0.0
    %1812 = vmatprep.subr.mxu0 0.0
    %1813 = vmatpush1.msra.mxu0 0.0
    %1814 = vmatprep.subr.mxu0 0.0
    %1815 = vmatpush1.msra.mxu0 0.0
    %1816 = vmatprep.subr.mxu0 0.0
    %1817 = vmatpush1.msra.mxu0 0.0
    %1818 = vmatprep.subr.mxu0 0.0
    %1819 = vmatpush1.msra.mxu0 0.0
    %1820 = vmatprep.subr.mxu0 0.0
    %1821 = vmatpush1.msra.mxu0 0.0
    %1822 = vmatprep.subr.mxu0 0.0
    %1823 = vmatpush1.msra.mxu0 0.0
    %1824 = vmatprep.subr.mxu0 0.0
    %1825 = vmatpush1.msra.mxu0 0.0
    %1826 = vmatprep.subr.mxu0 0.0
    %1827 = vmatpush1.msra.mxu0 0.0
    %1828 = vmatprep.subr.mxu0 0.0
    %1829 = vmatpush1.msra.mxu0 0.0
    %1830 = vmatprep.subr.mxu0 0.0
    %1831 = vmatpush1.msra.mxu0 0.0
    %1832 = vmatprep.subr.mxu0 0.0
    %1833 = vmatpush1.msra.mxu0 0.0
    %1834 = vmatprep.subr.mxu0 0.0
    %1835 = vmatpush1.msra.mxu0 0.0
    %1836 = vmatprep.subr.mxu0 0.0
    %1837 = vmatpush1.msra.mxu0 0.0
    %1838 = vmatprep.subr.mxu0 0.0
    %1839 = vmatpush1.msra.mxu0 0.0
    %1840 = vmatprep.subr.mxu0 0.0
    %1841 = vmatpush1.msra.mxu0 0.0
    %1842 = vmatprep.subr.mxu0 0.0
    %1843 = vmatpush1.msra.mxu0 0.0
    %1844 = vmatprep.subr.mxu0 0.0
    %1845 = vmatpush1.msra.mxu0 0.0
    %1846 = vmatprep.mubr.f32.mxu0 0.0
    %1847 = vmatmul.mubr.f32.gmra.mrb[0].mxu0 %v1577
    %v1848 = vpop.f32.mrb[0].mxu0
    %v1849 = vadd.f32 %v1457, %v1848
    %v1850 = vpop.f32.mrb[0].mxu0
    %v1851 = vadd.f32 %v1459, %v1850
    %1852 = vmatprep.mubr.f32.mxu0 0.0
    %1853 = vmatmul.mubr.f32.gmra.mrb[0].mxu0 %v1580
    %v1854 = vpop.f32.mrb[0].mxu0
    %v1855 = vadd.f32 %v1463, %v1854
    %v1856 = vpop.f32.mrb[0].mxu0
    %v1857 = vadd.f32 %v1465, %v1856
    %1858 = vmatprep.mubr.f32.mxu0 0.0
    %1859 = vmatmul.mubr.f32.gmra.mrb[0].mxu0 %v1583
    %v1860 = vpop.f32.mrb[0].mxu0
    %v1861 = vadd.f32 %v1469, %v1860
    %v1862 = vpop.f32.mrb[0].mxu0
    %v1863 = vadd.f32 %v1471, %v1862
    %1864 = vmatprep.mubr.f32.mxu0 0.0
    %1865 = vmatmul.mubr.f32.gmra.mrb[0].mxu0 %v1586
    %v1866 = vpop.f32.mrb[0].mxu0
    %v1867 = vadd.f32 %v1475, %v1866
    %v1868 = vpop.f32.mrb[0].mxu0
    %v1869 = vadd.f32 %v1477, %v1868
    %1870 = vdwg.mxu0
    %1871 = vmatprep.subr.mxu0 %v1602
    %1872 = vmatpush1.msra.mxu0 %v1600
    %1873 = vmatprep.subr.mxu0 0.0
    %1874 = vmatpush1.msra.mxu0 0.0
    %1875 = vmatprep.subr.mxu0 0.0
    %1876 = vmatpush1.msra.mxu0 0.0
    %1877 = vmatprep.subr.mxu0 0.0
    %1878 = vmatpush1.msra.mxu0 0.0
    %1879 = vmatprep.subr.mxu0 0.0
    %1880 = vmatpush1.msra.mxu0 0.0
    %1881 = vmatprep.subr.mxu0 0.0
    %1882 = vmatpush1.msra.mxu0 0.0
    %1883 = vmatprep.subr.mxu0 0.0
    %1884 = vmatpush1.msra.mxu0 0.0
    %1885 = vmatprep.subr.mxu0 0.0
    %1886 = vmatpush1.msra.mxu0 0.0
    %1887 = vmatprep.subr.mxu0 0.0
    %1888 = vmatpush1.msra.mxu0 0.0
    %1889 = vmatprep.subr.mxu0 0.0
    %1890 = vmatpush1.msra.mxu0 0.0
    %1891 = vmatprep.subr.mxu0 0.0
    %1892 = vmatpush1.msra.mxu0 0.0
    %1893 = vmatprep.subr.mxu0 0.0
    %1894 = vmatpush1.msra.mxu0 0.0
    %1895 = vmatprep.subr.mxu0 0.0
    %1896 = vmatpush1.msra.mxu0 0.0
    %1897 = vmatprep.subr.mxu0 0.0
    %1898 = vmatpush1.msra.mxu0 0.0
    %1899 = vmatprep.subr.mxu0 0.0
    %1900 = vmatpush1.msra.mxu0 0.0
    %1901 = vmatprep.subr.mxu0 0.0
    %1902 = vmatpush1.msra.mxu0 0.0
    %1903 = vmatprep.subr.mxu0 0.0
    %1904 = vmatpush1.msra.mxu0 0.0
    %1905 = vmatprep.subr.mxu0 0.0
    %1906 = vmatpush1.msra.mxu0 0.0
    %1907 = vmatprep.subr.mxu0 0.0
    %1908 = vmatpush1.msra.mxu0 0.0
    %1909 = vmatprep.subr.mxu0 0.0
    %1910 = vmatpush1.msra.mxu0 0.0
    %1911 = vmatprep.subr.mxu0 0.0
    %1912 = vmatpush1.msra.mxu0 0.0
    %1913 = vmatprep.subr.mxu0 0.0
    %1914 = vmatpush1.msra.mxu0 0.0
    %1915 = vmatprep.subr.mxu0 0.0
    %1916 = vmatpush1.msra.mxu0 0.0
    %1917 = vmatprep.subr.mxu0 0.0
    %1918 = vmatpush1.msra.mxu0 0.0
    %1919 = vmatprep.subr.mxu0 0.0
    %1920 = vmatpush1.msra.mxu0 0.0
    %1921 = vmatprep.subr.mxu0 0.0
    %1922 = vmatpush1.msra.mxu0 0.0
    %1923 = vmatprep.subr.mxu0 0.0
    %1924 = vmatpush1.msra.mxu0 0.0
    %1925 = vmatprep.subr.mxu0 0.0
    %1926 = vmatpush1.msra.mxu0 0.0
    %1927 = vmatprep.subr.mxu0 0.0
    %1928 = vmatpush1.msra.mxu0 0.0
    %1929 = vmatprep.subr.mxu0 0.0
    %1930 = vmatpush1.msra.mxu0 0.0
    %1931 = vmatprep.subr.mxu0 0.0
    %1932 = vmatpush1.msra.mxu0 0.0
    %1933 = vmatprep.subr.mxu0 0.0
    %1934 = vmatpush1.msra.mxu0 0.0
    %1935 = vmatprep.mubr.f32.mxu0 0.0
    %1936 = vmatmul.mubr.f32.gmra.mrb[0].mxu0 %v1577
    %v1937 = vpop.f32.mrb[0].mxu0
    %v1938 = vadd.f32 %v1546, %v1937
    %v1939 = vpop.f32.mrb[0].mxu0
    %v1940 = vadd.f32 %v1548, %v1939
    %1941 = vmatprep.mubr.f32.mxu0 0.0
    %1942 = vmatmul.mubr.f32.gmra.mrb[0].mxu0 %v1580
    %v1943 = vpop.f32.mrb[0].mxu0
    %v1944 = vadd.f32 %v1552, %v1943
    %v1945 = vpop.f32.mrb[0].mxu0
    %v1946 = vadd.f32 %v1554, %v1945
    %1947 = vmatprep.mubr.f32.mxu0 0.0
    %1948 = vmatmul.mubr.f32.gmra.mrb[0].mxu0 %v1583
    %v1949 = vpop.f32.mrb[0].mxu0
    %v1950 = vadd.f32 %v1558, %v1949
    %v1951 = vpop.f32.mrb[0].mxu0
    %v1952 = vadd.f32 %v1560, %v1951
    %1953 = vmatprep.mubr.f32.mxu0 0.0
    %1954 = vmatmul.mubr.f32.gmra.mrb[0].mxu0 %v1586
    %v1955 = vpop.f32.mrb[0].mxu0
    %v1956 = vadd.f32 %v1564, %v1955
    %v1957 = vpop.f32.mrb[0].mxu0
    %v1958 = vadd.f32 %v1566, %v1957
    %1959 = vdwg.mxu0
    %v1960 = vld [vmem:[%s5] sm:$0xff]
    %v1961 = vld [vmem:[%s5 + $0x8] sm:$0xff]
    %v1962 = vld [vmem:[%s5 + $0x10] sm:$0xff]
    %v1963 = vld [vmem:[%s5 + $0x18] sm:$0xff]
    %v1968 = vcombine.high %v857, %v857
    %v1969 = vcombine.high %v960, %v960
    %v1970 = vcombine.high %v1063, %v1063
    %v1971 = vcombine.high %v1166, %v1166
    %v1973 = vsel %vm1183, %v1960, 0
    %v1976 = vsel %vm1183, %v1961, 0
    %v1979 = vsel %vm1183, %v1962, 0
    %v1982 = vsel %vm1183, %v1963, 0
    %v1984 = vsel %vm134, %v857, 0
    %v1986 = vsel %vm134, %v1968, 0
    %v1988 = vsel %vm134, %v960, 0
    %v1990 = vsel %vm134, %v1969, 0
    %v1992 = vsel %vm134, %v1063, 0
    %v1994 = vsel %vm134, %v1970, 0
    %v1996 = vsel %vm134, %v1166, 0
    %v1998 = vsel %vm134, %v1971, 0
    %2000 = vmatprep.subr.mxu0 %v1986
    %2001 = vmatpush1.msra.mxu0 %v1984
    %2002 = vmatprep.subr.mxu0 0.0
    %2003 = vmatpush1.msra.mxu0 0.0
    %2004 = vmatprep.subr.mxu0 0.0
    %2005 = vmatpush1.msra.mxu0 0.0
    %2006 = vmatprep.subr.mxu0 0.0
    %2007 = vmatpush1.msra.mxu0 0.0
    %2008 = vmatprep.subr.mxu0 0.0
    %2009 = vmatpush1.msra.mxu0 0.0
    %2010 = vmatprep.subr.mxu0 0.0
    %2011 = vmatpush1.msra.mxu0 0.0
    %2012 = vmatprep.subr.mxu0 0.0
    %2013 = vmatpush1.msra.mxu0 0.0
    %2014 = vmatprep.subr.mxu0 0.0
    %2015 = vmatpush1.msra.mxu0 0.0
    %2016 = vmatprep.subr.mxu0 0.0
    %2017 = vmatpush1.msra.mxu0 0.0
    %2018 = vmatprep.subr.mxu0 0.0
    %2019 = vmatpush1.msra.mxu0 0.0
    %2020 = vmatprep.subr.mxu0 0.0
    %2021 = vmatpush1.msra.mxu0 0.0
    %2022 = vmatprep.subr.mxu0 0.0
    %2023 = vmatpush1.msra.mxu0 0.0
    %2024 = vmatprep.subr.mxu0 0.0
    %2025 = vmatpush1.msra.mxu0 0.0
    %2026 = vmatprep.subr.mxu0 0.0
    %2027 = vmatpush1.msra.mxu0 0.0
    %2028 = vmatprep.subr.mxu0 0.0
    %2029 = vmatpush1.msra.mxu0 0.0
    %2030 = vmatprep.subr.mxu0 0.0
    %2031 = vmatpush1.msra.mxu0 0.0
    %2032 = vmatprep.subr.mxu0 0.0
    %2033 = vmatpush1.msra.mxu0 0.0
    %2034 = vmatprep.subr.mxu0 0.0
    %2035 = vmatpush1.msra.mxu0 0.0
    %2036 = vmatprep.subr.mxu0 0.0
    %2037 = vmatpush1.msra.mxu0 0.0
    %2038 = vmatprep.subr.mxu0 0.0
    %2039 = vmatpush1.msra.mxu0 0.0
    %2040 = vmatprep.subr.mxu0 0.0
    %2041 = vmatpush1.msra.mxu0 0.0
    %2042 = vmatprep.subr.mxu0 0.0
    %2043 = vmatpush1.msra.mxu0 0.0
    %2044 = vmatprep.subr.mxu0 0.0
    %2045 = vmatpush1.msra.mxu0 0.0
    %2046 = vmatprep.subr.mxu0 0.0
    %2047 = vmatpush1.msra.mxu0 0.0
    %2048 = vmatprep.subr.mxu0 0.0
    %2049 = vmatpush1.msra.mxu0 0.0
    %2050 = vmatprep.subr.mxu0 0.0
    %2051 = vmatpush1.msra.mxu0 0.0
    %2052 = vmatprep.subr.mxu0 0.0
    %2053 = vmatpush1.msra.mxu0 0.0
    %2054 = vmatprep.subr.mxu0 0.0
    %2055 = vmatpush1.msra.mxu0 0.0
    %2056 = vmatprep.subr.mxu0 0.0
    %2057 = vmatpush1.msra.mxu0 0.0
    %2058 = vmatprep.subr.mxu0 0.0
    %2059 = vmatpush1.msra.mxu0 0.0
    %2060 = vmatprep.subr.mxu0 0.0
    %2061 = vmatpush1.msra.mxu0 0.0
    %2062 = vmatprep.subr.mxu0 0.0
    %2063 = vmatpush1.msra.mxu0 0.0
    %2064 = vmatprep.mubr.f32.mxu0 0.0
    %2065 = vmatmul.mubr.f32.gmra.mrb[0].mxu0 %v1973
    %v2066 = vpop.f32.mrb[0].mxu0
    %v2067 = vadd.f32 0.0, %v2066
    %v2068 = vpop.f32.mrb[0].mxu0
    %v2069 = vadd.f32 0.0, %v2068
    %2070 = vmatprep.mubr.f32.mxu0 0.0
    %2071 = vmatmul.mubr.f32.gmra.mrb[0].mxu0 %v1976
    %v2072 = vpop.f32.mrb[0].mxu0
    %v2073 = vadd.f32 0.0, %v2072
    %v2074 = vpop.f32.mrb[0].mxu0
    %v2075 = vadd.f32 0.0, %v2074
    %2076 = vmatprep.mubr.f32.mxu0 0.0
    %2077 = vmatmul.mubr.f32.gmra.mrb[0].mxu0 %v1979
    %v2078 = vpop.f32.mrb[0].mxu0
    %v2079 = vadd.f32 0.0, %v2078
    %v2080 = vpop.f32.mrb[0].mxu0
    %v2081 = vadd.f32 0.0, %v2080
    %2082 = vmatprep.mubr.f32.mxu0 0.0
    %2083 = vmatmul.mubr.f32.gmra.mrb[0].mxu0 %v1982
    %v2084 = vpop.f32.mrb[0].mxu0
    %v2085 = vadd.f32 0.0, %v2084
    %v2086 = vpop.f32.mrb[0].mxu0
    %v2087 = vadd.f32 0.0, %v2086
    %2088 = vdwg.mxu0
    %2089 = vmatprep.subr.mxu0 %v1990
    %2090 = vmatpush1.msra.mxu0 %v1988
    %2091 = vmatprep.subr.mxu0 0.0
    %2092 = vmatpush1.msra.mxu0 0.0
    %2093 = vmatprep.subr.mxu0 0.0
    %2094 = vmatpush1.msra.mxu0 0.0
    %2095 = vmatprep.subr.mxu0 0.0
    %2096 = vmatpush1.msra.mxu0 0.0
    %2097 = vmatprep.subr.mxu0 0.0
    %2098 = vmatpush1.msra.mxu0 0.0
    %2099 = vmatprep.subr.mxu0 0.0
    %2100 = vmatpush1.msra.mxu0 0.0
    %2101 = vmatprep.subr.mxu0 0.0
    %2102 = vmatpush1.msra.mxu0 0.0
    %2103 = vmatprep.subr.mxu0 0.0
    %2104 = vmatpush1.msra.mxu0 0.0
    %2105 = vmatprep.subr.mxu0 0.0
    %2106 = vmatpush1.msra.mxu0 0.0
    %2107 = vmatprep.subr.mxu0 0.0
    %2108 = vmatpush1.msra.mxu0 0.0
    %2109 = vmatprep.subr.mxu0 0.0
    %2110 = vmatpush1.msra.mxu0 0.0
    %2111 = vmatprep.subr.mxu0 0.0
    %2112 = vmatpush1.msra.mxu0 0.0
    %2113 = vmatprep.subr.mxu0 0.0
    %2114 = vmatpush1.msra.mxu0 0.0
    %2115 = vmatprep.subr.mxu0 0.0
    %2116 = vmatpush1.msra.mxu0 0.0
    %2117 = vmatprep.subr.mxu0 0.0
    %2118 = vmatpush1.msra.mxu0 0.0
    %2119 = vmatprep.subr.mxu0 0.0
    %2120 = vmatpush1.msra.mxu0 0.0
    %2121 = vmatprep.subr.mxu0 0.0
    %2122 = vmatpush1.msra.mxu0 0.0
    %2123 = vmatprep.subr.mxu0 0.0
    %2124 = vmatpush1.msra.mxu0 0.0
    %2125 = vmatprep.subr.mxu0 0.0
    %2126 = vmatpush1.msra.mxu0 0.0
    %2127 = vmatprep.subr.mxu0 0.0
    %2128 = vmatpush1.msra.mxu0 0.0
    %2129 = vmatprep.subr.mxu0 0.0
    %2130 = vmatpush1.msra.mxu0 0.0
    %2131 = vmatprep.subr.mxu0 0.0
    %2132 = vmatpush1.msra.mxu0 0.0
    %2133 = vmatprep.subr.mxu0 0.0
    %2134 = vmatpush1.msra.mxu0 0.0
    %2135 = vmatprep.subr.mxu0 0.0
    %2136 = vmatpush1.msra.mxu0 0.0
    %2137 = vmatprep.subr.mxu0 0.0
    %2138 = vmatpush1.msra.mxu0 0.0
    %2139 = vmatprep.subr.mxu0 0.0
    %2140 = vmatpush1.msra.mxu0 0.0
    %2141 = vmatprep.subr.mxu0 0.0
    %2142 = vmatpush1.msra.mxu0 0.0
    %2143 = vmatprep.subr.mxu0 0.0
    %2144 = vmatpush1.msra.mxu0 0.0
    %2145 = vmatprep.subr.mxu0 0.0
    %2146 = vmatpush1.msra.mxu0 0.0
    %2147 = vmatprep.subr.mxu0 0.0
    %2148 = vmatpush1.msra.mxu0 0.0
    %2149 = vmatprep.subr.mxu0 0.0
    %2150 = vmatpush1.msra.mxu0 0.0
    %2151 = vmatprep.subr.mxu0 0.0
    %2152 = vmatpush1.msra.mxu0 0.0
    %2153 = vmatprep.mubr.f32.mxu0 0.0
    %2154 = vmatmul.mubr.f32.gmra.mrb[0].mxu0 %v1973
    %v2155 = vpop.f32.mrb[0].mxu0
    %v2156 = vadd.f32 0.0, %v2155
    %v2157 = vpop.f32.mrb[0].mxu0
    %v2158 = vadd.f32 0.0, %v2157
    %2159 = vmatprep.mubr.f32.mxu0 0.0
    %2160 = vmatmul.mubr.f32.gmra.mrb[0].mxu0 %v1976
    %v2161 = vpop.f32.mrb[0].mxu0
    %v2162 = vadd.f32 0.0, %v2161
    %v2163 = vpop.f32.mrb[0].mxu0
    %v2164 = vadd.f32 0.0, %v2163
    %2165 = vmatprep.mubr.f32.mxu0 0.0
    %2166 = vmatmul.mubr.f32.gmra.mrb[0].mxu0 %v1979
    %v2167 = vpop.f32.mrb[0].mxu0
    %v2168 = vadd.f32 0.0, %v2167
    %v2169 = vpop.f32.mrb[0].mxu0
    %v2170 = vadd.f32 0.0, %v2169
    %2171 = vmatprep.mubr.f32.mxu0 0.0
    %2172 = vmatmul.mubr.f32.gmra.mrb[0].mxu0 %v1982
    %v2173 = vpop.f32.mrb[0].mxu0
    %v2174 = vadd.f32 0.0, %v2173
    %v2175 = vpop.f32.mrb[0].mxu0
    %v2176 = vadd.f32 0.0, %v2175
    %2177 = vdwg.mxu0
    %2178 = vmatprep.subr.mxu0 %v1994
    %2179 = vmatpush1.msra.mxu0 %v1992
    %2180 = vmatprep.subr.mxu0 0.0
    %2181 = vmatpush1.msra.mxu0 0.0
    %2182 = vmatprep.subr.mxu0 0.0
    %2183 = vmatpush1.msra.mxu0 0.0
    %2184 = vmatprep.subr.mxu0 0.0
    %2185 = vmatpush1.msra.mxu0 0.0
    %2186 = vmatprep.subr.mxu0 0.0
    %2187 = vmatpush1.msra.mxu0 0.0
    %2188 = vmatprep.subr.mxu0 0.0
    %2189 = vmatpush1.msra.mxu0 0.0
    %2190 = vmatprep.subr.mxu0 0.0
    %2191 = vmatpush1.msra.mxu0 0.0
    %2192 = vmatprep.subr.mxu0 0.0
    %2193 = vmatpush1.msra.mxu0 0.0
    %2194 = vmatprep.subr.mxu0 0.0
    %2195 = vmatpush1.msra.mxu0 0.0
    %2196 = vmatprep.subr.mxu0 0.0
    %2197 = vmatpush1.msra.mxu0 0.0
    %2198 = vmatprep.subr.mxu0 0.0
    %2199 = vmatpush1.msra.mxu0 0.0
    %2200 = vmatprep.subr.mxu0 0.0
    %2201 = vmatpush1.msra.mxu0 0.0
    %2202 = vmatprep.subr.mxu0 0.0
    %2203 = vmatpush1.msra.mxu0 0.0
    %2204 = vmatprep.subr.mxu0 0.0
    %2205 = vmatpush1.msra.mxu0 0.0
    %2206 = vmatprep.subr.mxu0 0.0
    %2207 = vmatpush1.msra.mxu0 0.0
    %2208 = vmatprep.subr.mxu0 0.0
    %2209 = vmatpush1.msra.mxu0 0.0
    %2210 = vmatprep.subr.mxu0 0.0
    %2211 = vmatpush1.msra.mxu0 0.0
    %2212 = vmatprep.subr.mxu0 0.0
    %2213 = vmatpush1.msra.mxu0 0.0
    %2214 = vmatprep.subr.mxu0 0.0
    %2215 = vmatpush1.msra.mxu0 0.0
    %2216 = vmatprep.subr.mxu0 0.0
    %2217 = vmatpush1.msra.mxu0 0.0
    %2218 = vmatprep.subr.mxu0 0.0
    %2219 = vmatpush1.msra.mxu0 0.0
    %2220 = vmatprep.subr.mxu0 0.0
    %2221 = vmatpush1.msra.mxu0 0.0
    %2222 = vmatprep.subr.mxu0 0.0
    %2223 = vmatpush1.msra.mxu0 0.0
    %2224 = vmatprep.subr.mxu0 0.0
    %2225 = vmatpush1.msra.mxu0 0.0
    %2226 = vmatprep.subr.mxu0 0.0
    %2227 = vmatpush1.msra.mxu0 0.0
    %2228 = vmatprep.subr.mxu0 0.0
    %2229 = vmatpush1.msra.mxu0 0.0
    %2230 = vmatprep.subr.mxu0 0.0
    %2231 = vmatpush1.msra.mxu0 0.0
    %2232 = vmatprep.subr.mxu0 0.0
    %2233 = vmatpush1.msra.mxu0 0.0
    %2234 = vmatprep.subr.mxu0 0.0
    %2235 = vmatpush1.msra.mxu0 0.0
    %2236 = vmatprep.subr.mxu0 0.0
    %2237 = vmatpush1.msra.mxu0 0.0
    %2238 = vmatprep.subr.mxu0 0.0
    %2239 = vmatpush1.msra.mxu0 0.0
    %2240 = vmatprep.subr.mxu0 0.0
    %2241 = vmatpush1.msra.mxu0 0.0
    %2242 = vmatprep.mubr.f32.mxu0 0.0
    %2243 = vmatmul.mubr.f32.gmra.mrb[0].mxu0 %v1973
    %v2244 = vpop.f32.mrb[0].mxu0
    %v2245 = vadd.f32 0.0, %v2244
    %v2246 = vpop.f32.mrb[0].mxu0
    %v2247 = vadd.f32 0.0, %v2246
    %2248 = vmatprep.mubr.f32.mxu0 0.0
    %2249 = vmatmul.mubr.f32.gmra.mrb[0].mxu0 %v1976
    %v2250 = vpop.f32.mrb[0].mxu0
    %v2251 = vadd.f32 0.0, %v2250
    %v2252 = vpop.f32.mrb[0].mxu0
    %v2253 = vadd.f32 0.0, %v2252
    %2254 = vmatprep.mubr.f32.mxu0 0.0
    %2255 = vmatmul.mubr.f32.gmra.mrb[0].mxu0 %v1979
    %v2256 = vpop.f32.mrb[0].mxu0
    %v2257 = vadd.f32 0.0, %v2256
    %v2258 = vpop.f32.mrb[0].mxu0
    %v2259 = vadd.f32 0.0, %v2258
    %2260 = vmatprep.mubr.f32.mxu0 0.0
    %2261 = vmatmul.mubr.f32.gmra.mrb[0].mxu0 %v1982
    %v2262 = vpop.f32.mrb[0].mxu0
    %v2263 = vadd.f32 0.0, %v2262
    %v2264 = vpop.f32.mrb[0].mxu0
    %v2265 = vadd.f32 0.0, %v2264
    %2266 = vdwg.mxu0
    %2267 = vmatprep.subr.mxu0 %v1998
    %2268 = vmatpush1.msra.mxu0 %v1996
    %2269 = vmatprep.subr.mxu0 0.0
    %2270 = vmatpush1.msra.mxu0 0.0
    %2271 = vmatprep.subr.mxu0 0.0
    %2272 = vmatpush1.msra.mxu0 0.0
    %2273 = vmatprep.subr.mxu0 0.0
    %2274 = vmatpush1.msra.mxu0 0.0
    %2275 = vmatprep.subr.mxu0 0.0
    %2276 = vmatpush1.msra.mxu0 0.0
    %2277 = vmatprep.subr.mxu0 0.0
    %2278 = vmatpush1.msra.mxu0 0.0
    %2279 = vmatprep.subr.mxu0 0.0
    %2280 = vmatpush1.msra.mxu0 0.0
    %2281 = vmatprep.subr.mxu0 0.0
    %2282 = vmatpush1.msra.mxu0 0.0
    %2283 = vmatprep.subr.mxu0 0.0
    %2284 = vmatpush1.msra.mxu0 0.0
    %2285 = vmatprep.subr.mxu0 0.0
    %2286 = vmatpush1.msra.mxu0 0.0
    %2287 = vmatprep.subr.mxu0 0.0
    %2288 = vmatpush1.msra.mxu0 0.0
    %2289 = vmatprep.subr.mxu0 0.0
    %2290 = vmatpush1.msra.mxu0 0.0
    %2291 = vmatprep.subr.mxu0 0.0
    %2292 = vmatpush1.msra.mxu0 0.0
    %2293 = vmatprep.subr.mxu0 0.0
    %2294 = vmatpush1.msra.mxu0 0.0
    %2295 = vmatprep.subr.mxu0 0.0
    %2296 = vmatpush1.msra.mxu0 0.0
    %2297 = vmatprep.subr.mxu0 0.0
    %2298 = vmatpush1.msra.mxu0 0.0
    %2299 = vmatprep.subr.mxu0 0.0
    %2300 = vmatpush1.msra.mxu0 0.0
    %2301 = vmatprep.subr.mxu0 0.0
    %2302 = vmatpush1.msra.mxu0 0.0
    %2303 = vmatprep.subr.mxu0 0.0
    %2304 = vmatpush1.msra.mxu0 0.0
    %2305 = vmatprep.subr.mxu0 0.0
    %2306 = vmatpush1.msra.mxu0 0.0
    %2307 = vmatprep.subr.mxu0 0.0
    %2308 = vmatpush1.msra.mxu0 0.0
    %2309 = vmatprep.subr.mxu0 0.0
    %2310 = vmatpush1.msra.mxu0 0.0
    %2311 = vmatprep.subr.mxu0 0.0
    %2312 = vmatpush1.msra.mxu0 0.0
    %2313 = vmatprep.subr.mxu0 0.0
    %2314 = vmatpush1.msra.mxu0 0.0
    %2315 = vmatprep.subr.mxu0 0.0
    %2316 = vmatpush1.msra.mxu0 0.0
    %2317 = vmatprep.subr.mxu0 0.0
    %2318 = vmatpush1.msra.mxu0 0.0
    %2319 = vmatprep.subr.mxu0 0.0
    %2320 = vmatpush1.msra.mxu0 0.0
    %2321 = vmatprep.subr.mxu0 0.0
    %2322 = vmatpush1.msra.mxu0 0.0
    %2323 = vmatprep.subr.mxu0 0.0
    %2324 = vmatpush1.msra.mxu0 0.0
    %2325 = vmatprep.subr.mxu0 0.0
    %2326 = vmatpush1.msra.mxu0 0.0
    %2327 = vmatprep.subr.mxu0 0.0
    %2328 = vmatpush1.msra.mxu0 0.0
    %2329 = vmatprep.subr.mxu0 0.0
    %2330 = vmatpush1.msra.mxu0 0.0
    %2331 = vmatprep.mubr.f32.mxu0 0.0
    %2332 = vmatmul.mubr.f32.gmra.mrb[0].mxu0 %v1973
    %v2333 = vpop.f32.mrb[0].mxu0
    %v2334 = vadd.f32 0.0, %v2333
    %v2335 = vpop.f32.mrb[0].mxu0
    %v2336 = vadd.f32 0.0, %v2335
    %2337 = vmatprep.mubr.f32.mxu0 0.0
    %2338 = vmatmul.mubr.f32.gmra.mrb[0].mxu0 %v1976
    %v2339 = vpop.f32.mrb[0].mxu0
    %v2340 = vadd.f32 0.0, %v2339
    %v2341 = vpop.f32.mrb[0].mxu0
    %v2342 = vadd.f32 0.0, %v2341
    %2343 = vmatprep.mubr.f32.mxu0 0.0
    %2344 = vmatmul.mubr.f32.gmra.mrb[0].mxu0 %v1979
    %v2345 = vpop.f32.mrb[0].mxu0
    %v2346 = vadd.f32 0.0, %v2345
    %v2347 = vpop.f32.mrb[0].mxu0
    %v2348 = vadd.f32 0.0, %v2347
    %2349 = vmatprep.mubr.f32.mxu0 0.0
    %2350 = vmatmul.mubr.f32.gmra.mrb[0].mxu0 %v1982
    %v2351 = vpop.f32.mrb[0].mxu0
    %v2352 = vadd.f32 0.0, %v2351
    %v2353 = vpop.f32.mrb[0].mxu0
    %v2354 = vadd.f32 0.0, %v2353
    %2355 = vdwg.mxu0
    %v2356 = vadd.f32 %v1671, %v2067
    %v2357 = vadd.f32 %v1673, %v2069
    %v2358 = vadd.f32 %v1760, %v2156
    %v2359 = vadd.f32 %v1762, %v2158
    %v2360 = vadd.f32 %v1849, %v2245
    %v2361 = vadd.f32 %v1851, %v2247
    %v2362 = vadd.f32 %v1938, %v2334
    %v2363 = vadd.f32 %v1940, %v2336
    %v2364 = vadd.f32 %v1677, %v2073
    %v2365 = vadd.f32 %v1679, %v2075
    %v2366 = vadd.f32 %v1766, %v2162
    %v2367 = vadd.f32 %v1768, %v2164
    %v2368 = vadd.f32 %v1855, %v2251
    %v2369 = vadd.f32 %v1857, %v2253
    %v2370 = vadd.f32 %v1944, %v2340
    %v2371 = vadd.f32 %v1946, %v2342
    %v2372 = vadd.f32 %v1683, %v2079
    %v2373 = vadd.f32 %v1685, %v2081
    %v2374 = vadd.f32 %v1772, %v2168
    %v2375 = vadd.f32 %v1774, %v2170
    %v2376 = vadd.f32 %v1861, %v2257
    %v2377 = vadd.f32 %v1863, %v2259
    %v2378 = vadd.f32 %v1950, %v2346
    %v2379 = vadd.f32 %v1952, %v2348
    %v2380 = vadd.f32 %v1689, %v2085
    %v2381 = vadd.f32 %v1691, %v2087
    %v2382 = vadd.f32 %v1778, %v2174
    %v2383 = vadd.f32 %v1780, %v2176
    %v2384 = vadd.f32 %v1867, %v2263
    %v2385 = vadd.f32 %v1869, %v2265
    %v2386 = vadd.f32 %v1956, %v2352
    %v2387 = vadd.f32 %v1958, %v2354
    %v2388 = vld [vmem:[%s6] sm:$0xff]
    %v2389 = vld [vmem:[%s6 + $0x8] sm:$0xff]
    %v2390 = vld [vmem:[%s6 + $0x10] sm:$0xff]
    %v2391 = vld [vmem:[%s6 + $0x18] sm:$0xff]
    %2393 = vset.pattern.permute.xlu0 0
    %2394 = vperm.xlu0 %2393, %v2388
    %v2395 = vpop.permute.xlu0 %2394
    %2398 = vset.pattern.permute.xlu0 0
    %2399 = vperm.xlu0 %2398, %v2389
    %v2400 = vpop.permute.xlu0 %2399
    %2403 = vset.pattern.permute.xlu0 0
    %2404 = vperm.xlu0 %2403, %v2390
    %v2405 = vpop.permute.xlu0 %2404
    %2408 = vset.pattern.permute.xlu0 0
    %2409 = vperm.xlu0 %2408, %v2391
    %v2410 = vpop.permute.xlu0 %2409
    %v2412 = vadd.f32 %v2356, %v2395
    %v2413 = vadd.f32 %v2357, %v2395
    %v2414 = vadd.f32 %v2358, %v2395
    %v2415 = vadd.f32 %v2359, %v2395
    %v2416 = vadd.f32 %v2360, %v2395
    %v2417 = vadd.f32 %v2361, %v2395
    %v2418 = vadd.f32 %v2362, %v2395
    %v2419 = vadd.f32 %v2363, %v2395
    %v2420 = vadd.f32 %v2364, %v2400
    %v2421 = vadd.f32 %v2365, %v2400
    %v2422 = vadd.f32 %v2366, %v2400
    %v2423 = vadd.f32 %v2367, %v2400
    %v2424 = vadd.f32 %v2368, %v2400
    %v2425 = vadd.f32 %v2369, %v2400
    %v2426 = vadd.f32 %v2370, %v2400
    %v2427 = vadd.f32 %v2371, %v2400
    %v2428 = vadd.f32 %v2372, %v2405
    %v2429 = vadd.f32 %v2373, %v2405
    %v2430 = vadd.f32 %v2374, %v2405
    %v2431 = vadd.f32 %v2375, %v2405
    %v2432 = vadd.f32 %v2376, %v2405
    %v2433 = vadd.f32 %v2377, %v2405
    %v2434 = vadd.f32 %v2378, %v2405
    %v2435 = vadd.f32 %v2379, %v2405
    %v2436 = vadd.f32 %v2380, %v2410
    %v2437 = vadd.f32 %v2381, %v2410
    %v2438 = vadd.f32 %v2382, %v2410
    %v2439 = vadd.f32 %v2383, %v2410
    %v2440 = vadd.f32 %v2384, %v2410
    %v2441 = vadd.f32 %v2385, %v2410
    %v2442 = vadd.f32 %v2386, %v2410
    %v2443 = vadd.f32 %v2387, %v2410
    %v2444 = vmul.f32 %v2412, 0.5
    %v2445 = vmul.f32 %v2413, 0.5
    %v2446 = vmul.f32 %v2414, 0.5
    %v2447 = vmul.f32 %v2415, 0.5
    %v2448 = vmul.f32 %v2416, 0.5
    %v2449 = vmul.f32 %v2417, 0.5
    %v2450 = vmul.f32 %v2418, 0.5
    %v2451 = vmul.f32 %v2419, 0.5
    %v2452 = vmul.f32 %v2420, 0.5
    %v2453 = vmul.f32 %v2421, 0.5
    %v2454 = vmul.f32 %v2422, 0.5
    %v2455 = vmul.f32 %v2423, 0.5
    %v2456 = vmul.f32 %v2424, 0.5
    %v2457 = vmul.f32 %v2425, 0.5
    %v2458 = vmul.f32 %v2426, 0.5
    %v2459 = vmul.f32 %v2427, 0.5
    %v2460 = vmul.f32 %v2428, 0.5
    %v2461 = vmul.f32 %v2429, 0.5
    %v2462 = vmul.f32 %v2430, 0.5
    %v2463 = vmul.f32 %v2431, 0.5
    %v2464 = vmul.f32 %v2432, 0.5
    %v2465 = vmul.f32 %v2433, 0.5
    %v2466 = vmul.f32 %v2434, 0.5
    %v2467 = vmul.f32 %v2435, 0.5
    %v2468 = vmul.f32 %v2436, 0.5
    %v2469 = vmul.f32 %v2437, 0.5
    %v2470 = vmul.f32 %v2438, 0.5
    %v2471 = vmul.f32 %v2439, 0.5
    %v2472 = vmul.f32 %v2440, 0.5
    %v2473 = vmul.f32 %v2441, 0.5
    %v2474 = vmul.f32 %v2442, 0.5
    %v2475 = vmul.f32 %v2443, 0.5
    %v2476 = vtanh.pop %v2444
    %v2477 = vtanh.pop %v2445
    %v2478 = vtanh.pop %v2446
    %v2479 = vtanh.pop %v2447
    %v2480 = vtanh.pop %v2448
    %v2481 = vtanh.pop %v2449
    %v2482 = vtanh.pop %v2450
    %v2483 = vtanh.pop %v2451
    %v2484 = vtanh.pop %v2452
    %v2485 = vtanh.pop %v2453
    %v2486 = vtanh.pop %v2454
    %v2487 = vtanh.pop %v2455
    %v2488 = vtanh.pop %v2456
    %v2489 = vtanh.pop %v2457
    %v2490 = vtanh.pop %v2458
    %v2491 = vtanh.pop %v2459
    %v2492 = vtanh.pop %v2460
    %v2493 = vtanh.pop %v2461
    %v2494 = vtanh.pop %v2462
    %v2495 = vtanh.pop %v2463
    %v2496 = vtanh.pop %v2464
    %v2497 = vtanh.pop %v2465
    %v2498 = vtanh.pop %v2466
    %v2499 = vtanh.pop %v2467
    %v2500 = vtanh.pop %v2468
    %v2501 = vtanh.pop %v2469
    %v2502 = vtanh.pop %v2470
    %v2503 = vtanh.pop %v2471
    %v2504 = vtanh.pop %v2472
    %v2505 = vtanh.pop %v2473
    %v2506 = vtanh.pop %v2474
    %v2507 = vtanh.pop %v2475
    %v2508 = vadd.f32 %v2476, 1.0
    %v2509 = vadd.f32 %v2477, 1.0
    %v2510 = vadd.f32 %v2478, 1.0
    %v2511 = vadd.f32 %v2479, 1.0
    %v2512 = vadd.f32 %v2480, 1.0
    %v2513 = vadd.f32 %v2481, 1.0
    %v2514 = vadd.f32 %v2482, 1.0
    %v2515 = vadd.f32 %v2483, 1.0
    %v2516 = vadd.f32 %v2484, 1.0
    %v2517 = vadd.f32 %v2485, 1.0
    %v2518 = vadd.f32 %v2486, 1.0
    %v2519 = vadd.f32 %v2487, 1.0
    %v2520 = vadd.f32 %v2488, 1.0
    %v2521 = vadd.f32 %v2489, 1.0
    %v2522 = vadd.f32 %v2490, 1.0
    %v2523 = vadd.f32 %v2491, 1.0
    %v2524 = vadd.f32 %v2492, 1.0
    %v2525 = vadd.f32 %v2493, 1.0
    %v2526 = vadd.f32 %v2494, 1.0
    %v2527 = vadd.f32 %v2495, 1.0
    %v2528 = vadd.f32 %v2496, 1.0
    %v2529 = vadd.f32 %v2497, 1.0
    %v2530 = vadd.f32 %v2498, 1.0
    %v2531 = vadd.f32 %v2499, 1.0
    %v2532 = vadd.f32 %v2500, 1.0
    %v2533 = vadd.f32 %v2501, 1.0
    %v2534 = vadd.f32 %v2502, 1.0
    %v2535 = vadd.f32 %v2503, 1.0
    %v2536 = vadd.f32 %v2504, 1.0
    %v2537 = vadd.f32 %v2505, 1.0
    %v2538 = vadd.f32 %v2506, 1.0
    %v2539 = vadd.f32 %v2507, 1.0
    %v2540 = vmul.f32 %v2444, %v2508
    %v2541 = vmul.f32 %v2445, %v2509
    %v2542 = vmul.f32 %v2446, %v2510
    %v2543 = vmul.f32 %v2447, %v2511
    %v2544 = vmul.f32 %v2448, %v2512
    %v2545 = vmul.f32 %v2449, %v2513
    %v2546 = vmul.f32 %v2450, %v2514
    %v2547 = vmul.f32 %v2451, %v2515
    %v2548 = vmul.f32 %v2452, %v2516
    %v2549 = vmul.f32 %v2453, %v2517
    %v2550 = vmul.f32 %v2454, %v2518
    %v2551 = vmul.f32 %v2455, %v2519
    %v2552 = vmul.f32 %v2456, %v2520
    %v2553 = vmul.f32 %v2457, %v2521
    %v2554 = vmul.f32 %v2458, %v2522
    %v2555 = vmul.f32 %v2459, %v2523
    %v2556 = vmul.f32 %v2460, %v2524
    %v2557 = vmul.f32 %v2461, %v2525
    %v2558 = vmul.f32 %v2462, %v2526
    %v2559 = vmul.f32 %v2463, %v2527
    %v2560 = vmul.f32 %v2464, %v2528
    %v2561 = vmul.f32 %v2465, %v2529
    %v2562 = vmul.f32 %v2466, %v2530
    %v2563 = vmul.f32 %v2467, %v2531
    %v2564 = vmul.f32 %v2468, %v2532
    %v2565 = vmul.f32 %v2469, %v2533
    %v2566 = vmul.f32 %v2470, %v2534
    %v2567 = vmul.f32 %v2471, %v2535
    %v2568 = vmul.f32 %v2472, %v2536
    %v2569 = vmul.f32 %v2473, %v2537
    %v2570 = vmul.f32 %v2474, %v2538
    %v2571 = vmul.f32 %v2475, %v2539
    %v2572 = vld [vmem:[%s7] sm:$0xff]
    %v2573 = vld [vmem:[%s7 + $0x8] sm:$0xff]
    %v2574 = vld [vmem:[%s7 + $0x10] sm:$0xff]
    %v2575 = vld [vmem:[%s7 + $0x18] sm:$0xff]
    %v2576 = vld [vmem:[%s8] sm:$0xff]
    %v2577 = vld [vmem:[%s8 + $0x8] sm:$0xff]
    %v2578 = vld [vmem:[%s8 + $0x10] sm:$0xff]
    %v2579 = vld [vmem:[%s8 + $0x18] sm:$0xff]
    %2581 = vset.pattern.permute.xlu0 0
    %2582 = vperm.xlu0 %2581, %v2576
    %v2583 = vpop.permute.xlu0 %2582
    %2586 = vset.pattern.permute.xlu0 0
    %2587 = vperm.xlu0 %2586, %v2577
    %v2588 = vpop.permute.xlu0 %2587
    %2591 = vset.pattern.permute.xlu0 0
    %2592 = vperm.xlu0 %2591, %v2578
    %v2593 = vpop.permute.xlu0 %2592
    %2596 = vset.pattern.permute.xlu0 0
    %2597 = vperm.xlu0 %2596, %v2579
    %v2598 = vpop.permute.xlu0 %2597
    %vm2600 = vcmask 261120
    %v2602 = vsel %vm2600, %v2572, 0
    %v2605 = vsel %vm2600, %v2573, 0
    %v2608 = vsel %vm2600, %v2574, 0
    %v2611 = vsel %vm2600, %v2575, 0
    %2613 = vmatprep.subr.mxu0 %v2541
    %2614 = vmatpush1.msra.mxu0 %v2540
    %2615 = vmatprep.subr.mxu0 %v2549
    %2616 = vmatpush1.msra.mxu0 %v2548
    %2617 = vmatprep.subr.mxu0 %v2557
    %2618 = vmatpush1.msra.mxu0 %v2556
    %2619 = vmatprep.subr.mxu0 %v2565
    %2620 = vmatpush1.msra.mxu0 %v2564
    %2621 = vmatprep.subr.mxu0 0.0
    %2622 = vmatpush1.msra.mxu0 0.0
    %2623 = vmatprep.subr.mxu0 0.0
    %2624 = vmatpush1.msra.mxu0 0.0
    %2625 = vmatprep.subr.mxu0 0.0
    %2626 = vmatpush1.msra.mxu0 0.0
    %2627 = vmatprep.subr.mxu0 0.0
    %2628 = vmatpush1.msra.mxu0 0.0
    %2629 = vmatprep.subr.mxu0 0.0
    %2630 = vmatpush1.msra.mxu0 0.0
    %2631 = vmatprep.subr.mxu0 0.0
    %2632 = vmatpush1.msra.mxu0 0.0
    %2633 = vmatprep.subr.mxu0 0.0
    %2634 = vmatpush1.msra.mxu0 0.0
    %2635 = vmatprep.subr.mxu0 0.0
    %2636 = vmatpush1.msra.mxu0 0.0
    %2637 = vmatprep.subr.mxu0 0.0
    %2638 = vmatpush1.msra.mxu0 0.0
    %2639 = vmatprep.subr.mxu0 0.0
    %2640 = vmatpush1.msra.mxu0 0.0
    %2641 = vmatprep.subr.mxu0 0.0
    %2642 = vmatpush1.msra.mxu0 0.0
    %2643 = vmatprep.subr.mxu0 0.0
    %2644 = vmatpush1.msra.mxu0 0.0
    %2645 = vmatprep.subr.mxu0 0.0
    %2646 = vmatpush1.msra.mxu0 0.0
    %2647 = vmatprep.subr.mxu0 0.0
    %2648 = vmatpush1.msra.mxu0 0.0
    %2649 = vmatprep.subr.mxu0 0.0
    %2650 = vmatpush1.msra.mxu0 0.0
    %2651 = vmatprep.subr.mxu0 0.0
    %2652 = vmatpush1.msra.mxu0 0.0
    %2653 = vmatprep.subr.mxu0 0.0
    %2654 = vmatpush1.msra.mxu0 0.0
    %2655 = vmatprep.subr.mxu0 0.0
    %2656 = vmatpush1.msra.mxu0 0.0
    %2657 = vmatprep.subr.mxu0 0.0
    %2658 = vmatpush1.msra.mxu0 0.0
    %2659 = vmatprep.subr.mxu0 0.0
    %2660 = vmatpush1.msra.mxu0 0.0
    %2661 = vmatprep.subr.mxu0 0.0
    %2662 = vmatpush1.msra.mxu0 0.0
    %2663 = vmatprep.subr.mxu0 0.0
    %2664 = vmatpush1.msra.mxu0 0.0
    %2665 = vmatprep.subr.mxu0 0.0
    %2666 = vmatpush1.msra.mxu0 0.0
    %2667 = vmatprep.subr.mxu0 0.0
    %2668 = vmatpush1.msra.mxu0 0.0
    %2669 = vmatprep.subr.mxu0 0.0
    %2670 = vmatpush1.msra.mxu0 0.0
    %2671 = vmatprep.subr.mxu0 0.0
    %2672 = vmatpush1.msra.mxu0 0.0
    %2673 = vmatprep.subr.mxu0 0.0
    %2674 = vmatpush1.msra.mxu0 0.0
    %2675 = vmatprep.subr.mxu0 0.0
    %2676 = vmatpush1.msra.mxu0 0.0
    %2677 = vmatprep.mubr.f32.mxu0 0.0
    %2678 = vmatmul.mubr.f32.gmra.mrb[0].mxu0 %v2602
    %v2679 = vpop.f32.mrb[0].mxu0
    %v2680 = vadd.f32 %v2583, %v2679
    %v2681 = vpop.f32.mrb[0].mxu0
    %v2682 = vadd.f32 %v2583, %v2681
    %2683 = vmatprep.mubr.f32.mxu0 0.0
    %2684 = vmatmul.mubr.f32.gmra.mrb[0].mxu0 %v2605
    %v2685 = vpop.f32.mrb[0].mxu0
    %v2686 = vadd.f32 %v2588, %v2685
    %v2687 = vpop.f32.mrb[0].mxu0
    %v2688 = vadd.f32 %v2588, %v2687
    %2689 = vmatprep.mubr.f32.mxu0 0.0
    %2690 = vmatmul.mubr.f32.gmra.mrb[0].mxu0 %v2608
    %v2691 = vpop.f32.mrb[0].mxu0
    %v2692 = vadd.f32 %v2593, %v2691
    %v2693 = vpop.f32.mrb[0].mxu0
    %v2694 = vadd.f32 %v2593, %v2693
    %2695 = vmatprep.mubr.f32.mxu0 0.0
    %2696 = vmatmul.mubr.f32.gmra.mrb[0].mxu0 %v2611
    %v2697 = vpop.f32.mrb[0].mxu0
    %v2698 = vadd.f32 %v2598, %v2697
    %v2699 = vpop.f32.mrb[0].mxu0
    %v2700 = vadd.f32 %v2598, %v2699
    %2701 = vdwg.mxu0
    %2702 = vmatprep.subr.mxu0 %v2543
    %2703 = vmatpush1.msra.mxu0 %v2542
    %2704 = vmatprep.subr.mxu0 %v2551
    %2705 = vmatpush1.msra.mxu0 %v2550
    %2706 = vmatprep.subr.mxu0 %v2559
    %2707 = vmatpush1.msra.mxu0 %v2558
    %2708 = vmatprep.subr.mxu0 %v2567
    %2709 = vmatpush1.msra.mxu0 %v2566
    %2710 = vmatprep.subr.mxu0 0.0
    %2711 = vmatpush1.msra.mxu0 0.0
    %2712 = vmatprep.subr.mxu0 0.0
    %2713 = vmatpush1.msra.mxu0 0.0
    %2714 = vmatprep.subr.mxu0 0.0
    %2715 = vmatpush1.msra.mxu0 0.0
    %2716 = vmatprep.subr.mxu0 0.0
    %2717 = vmatpush1.msra.mxu0 0.0
    %2718 = vmatprep.subr.mxu0 0.0
    %2719 = vmatpush1.msra.mxu0 0.0
    %2720 = vmatprep.subr.mxu0 0.0
    %2721 = vmatpush1.msra.mxu0 0.0
    %2722 = vmatprep.subr.mxu0 0.0
    %2723 = vmatpush1.msra.mxu0 0.0
    %2724 = vmatprep.subr.mxu0 0.0
    %2725 = vmatpush1.msra.mxu0 0.0
    %2726 = vmatprep.subr.mxu0 0.0
    %2727 = vmatpush1.msra.mxu0 0.0
    %2728 = vmatprep.subr.mxu0 0.0
    %2729 = vmatpush1.msra.mxu0 0.0
    %2730 = vmatprep.subr.mxu0 0.0
    %2731 = vmatpush1.msra.mxu0 0.0
    %2732 = vmatprep.subr.mxu0 0.0
    %2733 = vmatpush1.msra.mxu0 0.0
    %2734 = vmatprep.subr.mxu0 0.0
    %2735 = vmatpush1.msra.mxu0 0.0
    %2736 = vmatprep.subr.mxu0 0.0
    %2737 = vmatpush1.msra.mxu0 0.0
    %2738 = vmatprep.subr.mxu0 0.0
    %2739 = vmatpush1.msra.mxu0 0.0
    %2740 = vmatprep.subr.mxu0 0.0
    %2741 = vmatpush1.msra.mxu0 0.0
    %2742 = vmatprep.subr.mxu0 0.0
    %2743 = vmatpush1.msra.mxu0 0.0
    %2744 = vmatprep.subr.mxu0 0.0
    %2745 = vmatpush1.msra.mxu0 0.0
    %2746 = vmatprep.subr.mxu0 0.0
    %2747 = vmatpush1.msra.mxu0 0.0
    %2748 = vmatprep.subr.mxu0 0.0
    %2749 = vmatpush1.msra.mxu0 0.0
    %2750 = vmatprep.subr.mxu0 0.0
    %2751 = vmatpush1.msra.mxu0 0.0
    %2752 = vmatprep.subr.mxu0 0.0
    %2753 = vmatpush1.msra.mxu0 0.0
    %2754 = vmatprep.subr.mxu0 0.0
    %2755 = vmatpush1.msra.mxu0 0.0
    %2756 = vmatprep.subr.mxu0 0.0
    %2757 = vmatpush1.msra.mxu0 0.0
    %2758 = vmatprep.subr.mxu0 0.0
    %2759 = vmatpush1.msra.mxu0 0.0
    %2760 = vmatprep.subr.mxu0 0.0
    %2761 = vmatpush1.msra.mxu0 0.0
    %2762 = vmatprep.subr.mxu0 0.0
    %2763 = vmatpush1.msra.mxu0 0.0
    %2764 = vmatprep.subr.mxu0 0.0
    %2765 = vmatpush1.msra.mxu0 0.0
    %2766 = vmatprep.mubr.f32.mxu0 0.0
    %2767 = vmatmul.mubr.f32.gmra.mrb[0].mxu0 %v2602
    %v2768 = vpop.f32.mrb[0].mxu0
    %v2769 = vadd.f32 %v2583, %v2768
    %v2770 = vpop.f32.mrb[0].mxu0
    %v2771 = vadd.f32 %v2583, %v2770
    %2772 = vmatprep.mubr.f32.mxu0 0.0
    %2773 = vmatmul.mubr.f32.gmra.mrb[0].mxu0 %v2605
    %v2774 = vpop.f32.mrb[0].mxu0
    %v2775 = vadd.f32 %v2588, %v2774
    %v2776 = vpop.f32.mrb[0].mxu0
    %v2777 = vadd.f32 %v2588, %v2776
    %2778 = vmatprep.mubr.f32.mxu0 0.0
    %2779 = vmatmul.mubr.f32.gmra.mrb[0].mxu0 %v2608
    %v2780 = vpop.f32.mrb[0].mxu0
    %v2781 = vadd.f32 %v2593, %v2780
    %v2782 = vpop.f32.mrb[0].mxu0
    %v2783 = vadd.f32 %v2593, %v2782
    %2784 = vmatprep.mubr.f32.mxu0 0.0
    %2785 = vmatmul.mubr.f32.gmra.mrb[0].mxu0 %v2611
    %v2786 = vpop.f32.mrb[0].mxu0
    %v2787 = vadd.f32 %v2598, %v2786
    %v2788 = vpop.f32.mrb[0].mxu0
    %v2789 = vadd.f32 %v2598, %v2788
    %2790 = vdwg.mxu0
    %2791 = vmatprep.subr.mxu0 %v2545
    %2792 = vmatpush1.msra.mxu0 %v2544
    %2793 = vmatprep.subr.mxu0 %v2553
    %2794 = vmatpush1.msra.mxu0 %v2552
    %2795 = vmatprep.subr.mxu0 %v2561
    %2796 = vmatpush1.msra.mxu0 %v2560
    %2797 = vmatprep.subr.mxu0 %v2569
    %2798 = vmatpush1.msra.mxu0 %v2568
    %2799 = vmatprep.subr.mxu0 0.0
    %2800 = vmatpush1.msra.mxu0 0.0
    %2801 = vmatprep.subr.mxu0 0.0
    %2802 = vmatpush1.msra.mxu0 0.0
    %2803 = vmatprep.subr.mxu0 0.0
    %2804 = vmatpush1.msra.mxu0 0.0
    %2805 = vmatprep.subr.mxu0 0.0
    %2806 = vmatpush1.msra.mxu0 0.0
    %2807 = vmatprep.subr.mxu0 0.0
    %2808 = vmatpush1.msra.mxu0 0.0
    %2809 = vmatprep.subr.mxu0 0.0
    %2810 = vmatpush1.msra.mxu0 0.0
    %2811 = vmatprep.subr.mxu0 0.0
    %2812 = vmatpush1.msra.mxu0 0.0
    %2813 = vmatprep.subr.mxu0 0.0
    %2814 = vmatpush1.msra.mxu0 0.0
    %2815 = vmatprep.subr.mxu0 0.0
    %2816 = vmatpush1.msra.mxu0 0.0
    %2817 = vmatprep.subr.mxu0 0.0
    %2818 = vmatpush1.msra.mxu0 0.0
    %2819 = vmatprep.subr.mxu0 0.0
    %2820 = vmatpush1.msra.mxu0 0.0
    %2821 = vmatprep.subr.mxu0 0.0
    %2822 = vmatpush1.msra.mxu0 0.0
    %2823 = vmatprep.subr.mxu0 0.0
    %2824 = vmatpush1.msra.mxu0 0.0
    %2825 = vmatprep.subr.mxu0 0.0
    %2826 = vmatpush1.msra.mxu0 0.0
    %2827 = vmatprep.subr.mxu0 0.0
    %2828 = vmatpush1.msra.mxu0 0.0
    %2829 = vmatprep.subr.mxu0 0.0
    %2830 = vmatpush1.msra.mxu0 0.0
    %2831 = vmatprep.subr.mxu0 0.0
    %2832 = vmatpush1.msra.mxu0 0.0
    %2833 = vmatprep.subr.mxu0 0.0
    %2834 = vmatpush1.msra.mxu0 0.0
    %2835 = vmatprep.subr.mxu0 0.0
    %2836 = vmatpush1.msra.mxu0 0.0
    %2837 = vmatprep.subr.mxu0 0.0
    %2838 = vmatpush1.msra.mxu0 0.0
    %2839 = vmatprep.subr.mxu0 0.0
    %2840 = vmatpush1.msra.mxu0 0.0
    %2841 = vmatprep.subr.mxu0 0.0
    %2842 = vmatpush1.msra.mxu0 0.0
    %2843 = vmatprep.subr.mxu0 0.0
    %2844 = vmatpush1.msra.mxu0 0.0
    %2845 = vmatprep.subr.mxu0 0.0
    %2846 = vmatpush1.msra.mxu0 0.0
    %2847 = vmatprep.subr.mxu0 0.0
    %2848 = vmatpush1.msra.mxu0 0.0
    %2849 = vmatprep.subr.mxu0 0.0
    %2850 = vmatpush1.msra.mxu0 0.0
    %2851 = vmatprep.subr.mxu0 0.0
    %2852 = vmatpush1.msra.mxu0 0.0
    %2853 = vmatprep.subr.mxu0 0.0
    %2854 = vmatpush1.msra.mxu0 0.0
    %2855 = vmatprep.mubr.f32.mxu0 0.0
    %2856 = vmatmul.mubr.f32.gmra.mrb[0].mxu0 %v2602
    %v2857 = vpop.f32.mrb[0].mxu0
    %v2858 = vadd.f32 %v2583, %v2857
    %v2859 = vpop.f32.mrb[0].mxu0
    %v2860 = vadd.f32 %v2583, %v2859
    %2861 = vmatprep.mubr.f32.mxu0 0.0
    %2862 = vmatmul.mubr.f32.gmra.mrb[0].mxu0 %v2605
    %v2863 = vpop.f32.mrb[0].mxu0
    %v2864 = vadd.f32 %v2588, %v2863
    %v2865 = vpop.f32.mrb[0].mxu0
    %v2866 = vadd.f32 %v2588, %v2865
    %2867 = vmatprep.mubr.f32.mxu0 0.0
    %2868 = vmatmul.mubr.f32.gmra.mrb[0].mxu0 %v2608
    %v2869 = vpop.f32.mrb[0].mxu0
    %v2870 = vadd.f32 %v2593, %v2869
    %v2871 = vpop.f32.mrb[0].mxu0
    %v2872 = vadd.f32 %v2593, %v2871
    %2873 = vmatprep.mubr.f32.mxu0 0.0
    %2874 = vmatmul.mubr.f32.gmra.mrb[0].mxu0 %v2611
    %v2875 = vpop.f32.mrb[0].mxu0
    %v2876 = vadd.f32 %v2598, %v2875
    %v2877 = vpop.f32.mrb[0].mxu0
    %v2878 = vadd.f32 %v2598, %v2877
    %2879 = vdwg.mxu0
    %2880 = vmatprep.subr.mxu0 %v2547
    %2881 = vmatpush1.msra.mxu0 %v2546
    %2882 = vmatprep.subr.mxu0 %v2555
    %2883 = vmatpush1.msra.mxu0 %v2554
    %2884 = vmatprep.subr.mxu0 %v2563
    %2885 = vmatpush1.msra.mxu0 %v2562
    %2886 = vmatprep.subr.mxu0 %v2571
    %2887 = vmatpush1.msra.mxu0 %v2570
    %2888 = vmatprep.subr.mxu0 0.0
    %2889 = vmatpush1.msra.mxu0 0.0
    %2890 = vmatprep.subr.mxu0 0.0
    %2891 = vmatpush1.msra.mxu0 0.0
    %2892 = vmatprep.subr.mxu0 0.0
    %2893 = vmatpush1.msra.mxu0 0.0
    %2894 = vmatprep.subr.mxu0 0.0
    %2895 = vmatpush1.msra.mxu0 0.0
    %2896 = vmatprep.subr.mxu0 0.0
    %2897 = vmatpush1.msra.mxu0 0.0
    %2898 = vmatprep.subr.mxu0 0.0
    %2899 = vmatpush1.msra.mxu0 0.0
    %2900 = vmatprep.subr.mxu0 0.0
    %2901 = vmatpush1.msra.mxu0 0.0
    %2902 = vmatprep.subr.mxu0 0.0
    %2903 = vmatpush1.msra.mxu0 0.0
    %2904 = vmatprep.subr.mxu0 0.0
    %2905 = vmatpush1.msra.mxu0 0.0
    %2906 = vmatprep.subr.mxu0 0.0
    %2907 = vmatpush1.msra.mxu0 0.0
    %2908 = vmatprep.subr.mxu0 0.0
    %2909 = vmatpush1.msra.mxu0 0.0
    %2910 = vmatprep.subr.mxu0 0.0
    %2911 = vmatpush1.msra.mxu0 0.0
    %2912 = vmatprep.subr.mxu0 0.0
    %2913 = vmatpush1.msra.mxu0 0.0
    %2914 = vmatprep.subr.mxu0 0.0
    %2915 = vmatpush1.msra.mxu0 0.0
    %2916 = vmatprep.subr.mxu0 0.0
    %2917 = vmatpush1.msra.mxu0 0.0
    %2918 = vmatprep.subr.mxu0 0.0
    %2919 = vmatpush1.msra.mxu0 0.0
    %2920 = vmatprep.subr.mxu0 0.0
    %2921 = vmatpush1.msra.mxu0 0.0
    %2922 = vmatprep.subr.mxu0 0.0
    %2923 = vmatpush1.msra.mxu0 0.0
    %2924 = vmatprep.subr.mxu0 0.0
    %2925 = vmatpush1.msra.mxu0 0.0
    %2926 = vmatprep.subr.mxu0 0.0
    %2927 = vmatpush1.msra.mxu0 0.0
    %2928 = vmatprep.subr.mxu0 0.0
    %2929 = vmatpush1.msra.mxu0 0.0
    %2930 = vmatprep.subr.mxu0 0.0
    %2931 = vmatpush1.msra.mxu0 0.0
    %2932 = vmatprep.subr.mxu0 0.0
    %2933 = vmatpush1.msra.mxu0 0.0
    %2934 = vmatprep.subr.mxu0 0.0
    %2935 = vmatpush1.msra.mxu0 0.0
    %2936 = vmatprep.subr.mxu0 0.0
    %2937 = vmatpush1.msra.mxu0 0.0
    %2938 = vmatprep.subr.mxu0 0.0
    %2939 = vmatpush1.msra.mxu0 0.0
    %2940 = vmatprep.subr.mxu0 0.0
    %2941 = vmatpush1.msra.mxu0 0.0
    %2942 = vmatprep.subr.mxu0 0.0
    %2943 = vmatpush1.msra.mxu0 0.0
    %2944 = vmatprep.mubr.f32.mxu0 0.0
    %2945 = vmatmul.mubr.f32.gmra.mrb[0].mxu0 %v2602
    %v2946 = vpop.f32.mrb[0].mxu0
    %v2947 = vadd.f32 %v2583, %v2946
    %v2948 = vpop.f32.mrb[0].mxu0
    %v2949 = vadd.f32 %v2583, %v2948
    %2950 = vmatprep.mubr.f32.mxu0 0.0
    %2951 = vmatmul.mubr.f32.gmra.mrb[0].mxu0 %v2605
    %v2952 = vpop.f32.mrb[0].mxu0
    %v2953 = vadd.f32 %v2588, %v2952
    %v2954 = vpop.f32.mrb[0].mxu0
    %v2955 = vadd.f32 %v2588, %v2954
    %2956 = vmatprep.mubr.f32.mxu0 0.0
    %2957 = vmatmul.mubr.f32.gmra.mrb[0].mxu0 %v2608
    %v2958 = vpop.f32.mrb[0].mxu0
    %v2959 = vadd.f32 %v2593, %v2958
    %v2960 = vpop.f32.mrb[0].mxu0
    %v2961 = vadd.f32 %v2593, %v2960
    %2962 = vmatprep.mubr.f32.mxu0 0.0
    %2963 = vmatmul.mubr.f32.gmra.mrb[0].mxu0 %v2611
    %v2964 = vpop.f32.mrb[0].mxu0
    %v2965 = vadd.f32 %v2598, %v2964
    %v2966 = vpop.f32.mrb[0].mxu0
    %v2967 = vadd.f32 %v2598, %v2966
    %2968 = vdwg.mxu0
    %v2969 = vmul.f32 %v2680, 0.5
    %v2970 = vmul.f32 %v2682, 0.5
    %v2971 = vmul.f32 %v2769, 0.5
    %v2972 = vmul.f32 %v2771, 0.5
    %v2973 = vmul.f32 %v2858, 0.5
    %v2974 = vmul.f32 %v2860, 0.5
    %v2975 = vmul.f32 %v2947, 0.5
    %v2976 = vmul.f32 %v2949, 0.5
    %v2977 = vmul.f32 %v2686, 0.5
    %v2978 = vmul.f32 %v2688, 0.5
    %v2979 = vmul.f32 %v2775, 0.5
    %v2980 = vmul.f32 %v2777, 0.5
    %v2981 = vmul.f32 %v2864, 0.5
    %v2982 = vmul.f32 %v2866, 0.5
    %v2983 = vmul.f32 %v2953, 0.5
    %v2984 = vmul.f32 %v2955, 0.5
    %v2985 = vmul.f32 %v2692, 0.5
    %v2986 = vmul.f32 %v2694, 0.5
    %v2987 = vmul.f32 %v2781, 0.5
    %v2988 = vmul.f32 %v2783, 0.5
    %v2989 = vmul.f32 %v2870, 0.5
    %v2990 = vmul.f32 %v2872, 0.5
    %v2991 = vmul.f32 %v2959, 0.5
    %v2992 = vmul.f32 %v2961, 0.5
    %v2993 = vmul.f32 %v2698, 0.5
    %v2994 = vmul.f32 %v2700, 0.5
    %v2995 = vmul.f32 %v2787, 0.5
    %v2996 = vmul.f32 %v2789, 0.5
    %v2997 = vmul.f32 %v2876, 0.5
    %v2998 = vmul.f32 %v2878, 0.5
    %v2999 = vmul.f32 %v2965, 0.5
    %v3000 = vmul.f32 %v2967, 0.5
    %v3001 = vtanh.pop %v2969
    %v3002 = vtanh.pop %v2970
    %v3003 = vtanh.pop %v2971
    %v3004 = vtanh.pop %v2972
    %v3005 = vtanh.pop %v2973
    %v3006 = vtanh.pop %v2974
    %v3007 = vtanh.pop %v2975
    %v3008 = vtanh.pop %v2976
    %v3009 = vtanh.pop %v2977
    %v3010 = vtanh.pop %v2978
    %v3011 = vtanh.pop %v2979
    %v3012 = vtanh.pop %v2980
    %v3013 = vtanh.pop %v2981
    %v3014 = vtanh.pop %v2982
    %v3015 = vtanh.pop %v2983
    %v3016 = vtanh.pop %v2984
    %v3017 = vtanh.pop %v2985
    %v3018 = vtanh.pop %v2986
    %v3019 = vtanh.pop %v2987
    %v3020 = vtanh.pop %v2988
    %v3021 = vtanh.pop %v2989
    %v3022 = vtanh.pop %v2990
    %v3023 = vtanh.pop %v2991
    %v3024 = vtanh.pop %v2992
    %v3025 = vtanh.pop %v2993
    %v3026 = vtanh.pop %v2994
    %v3027 = vtanh.pop %v2995
    %v3028 = vtanh.pop %v2996
    %v3029 = vtanh.pop %v2997
    %v3030 = vtanh.pop %v2998
    %v3031 = vtanh.pop %v2999
    %v3032 = vtanh.pop %v3000
    %v3033 = vadd.f32 %v3001, 1.0
    %v3034 = vadd.f32 %v3002, 1.0
    %v3035 = vadd.f32 %v3003, 1.0
    %v3036 = vadd.f32 %v3004, 1.0
    %v3037 = vadd.f32 %v3005, 1.0
    %v3038 = vadd.f32 %v3006, 1.0
    %v3039 = vadd.f32 %v3007, 1.0
    %v3040 = vadd.f32 %v3008, 1.0
    %v3041 = vadd.f32 %v3009, 1.0
    %v3042 = vadd.f32 %v3010, 1.0
    %v3043 = vadd.f32 %v3011, 1.0
    %v3044 = vadd.f32 %v3012, 1.0
    %v3045 = vadd.f32 %v3013, 1.0
    %v3046 = vadd.f32 %v3014, 1.0
    %v3047 = vadd.f32 %v3015, 1.0
    %v3048 = vadd.f32 %v3016, 1.0
    %v3049 = vadd.f32 %v3017, 1.0
    %v3050 = vadd.f32 %v3018, 1.0
    %v3051 = vadd.f32 %v3019, 1.0
    %v3052 = vadd.f32 %v3020, 1.0
    %v3053 = vadd.f32 %v3021, 1.0
    %v3054 = vadd.f32 %v3022, 1.0
    %v3055 = vadd.f32 %v3023, 1.0
    %v3056 = vadd.f32 %v3024, 1.0
    %v3057 = vadd.f32 %v3025, 1.0
    %v3058 = vadd.f32 %v3026, 1.0
    %v3059 = vadd.f32 %v3027, 1.0
    %v3060 = vadd.f32 %v3028, 1.0
    %v3061 = vadd.f32 %v3029, 1.0
    %v3062 = vadd.f32 %v3030, 1.0
    %v3063 = vadd.f32 %v3031, 1.0
    %v3064 = vadd.f32 %v3032, 1.0
    %v3065 = vmul.f32 %v2969, %v3033
    %v3066 = vmul.f32 %v2970, %v3034
    %v3067 = vmul.f32 %v2971, %v3035
    %v3068 = vmul.f32 %v2972, %v3036
    %v3069 = vmul.f32 %v2973, %v3037
    %v3070 = vmul.f32 %v2974, %v3038
    %v3071 = vmul.f32 %v2975, %v3039
    %v3072 = vmul.f32 %v2976, %v3040
    %v3073 = vmul.f32 %v2977, %v3041
    %v3074 = vmul.f32 %v2978, %v3042
    %v3075 = vmul.f32 %v2979, %v3043
    %v3076 = vmul.f32 %v2980, %v3044
    %v3077 = vmul.f32 %v2981, %v3045
    %v3078 = vmul.f32 %v2982, %v3046
    %v3079 = vmul.f32 %v2983, %v3047
    %v3080 = vmul.f32 %v2984, %v3048
    %v3081 = vmul.f32 %v2985, %v3049
    %v3082 = vmul.f32 %v2986, %v3050
    %v3083 = vmul.f32 %v2987, %v3051
    %v3084 = vmul.f32 %v2988, %v3052
    %v3085 = vmul.f32 %v2989, %v3053
    %v3086 = vmul.f32 %v2990, %v3054
    %v3087 = vmul.f32 %v2991, %v3055
    %v3088 = vmul.f32 %v2992, %v3056
    %v3089 = vmul.f32 %v2993, %v3057
    %v3090 = vmul.f32 %v2994, %v3058
    %v3091 = vmul.f32 %v2995, %v3059
    %v3092 = vmul.f32 %v2996, %v3060
    %v3093 = vmul.f32 %v2997, %v3061
    %v3094 = vmul.f32 %v2998, %v3062
    %v3095 = vmul.f32 %v2999, %v3063
    %v3096 = vmul.f32 %v3000, %v3064
    %v3097 = vld [vmem:[%s9] sm:$0xff]
    %v3098 = vld [vmem:[%s9 + $0x8] sm:$0xff]
    %v3099 = vld [vmem:[%s9 + $0x10] sm:$0xff]
    %v3100 = vld [vmem:[%s9 + $0x18] sm:$0xff]
    %v3101 = vld [vmem:[%s10] sm:$0xff]
    %v3102 = vld [vmem:[%s10 + $0x8] sm:$0xff]
    %v3103 = vld [vmem:[%s10 + $0x10] sm:$0xff]
    %v3104 = vld [vmem:[%s10 + $0x18] sm:$0xff]
    %v3106 = vsel %vm1183, %v3101, 0
    %v3109 = vsel %vm1183, %v3102, 0
    %v3112 = vsel %vm1183, %v3103, 0
    %v3115 = vsel %vm1183, %v3104, 0
    %3117 = vmatprep.subr.mxu0 %v1590
    %3118 = vmatpush1.msra.mxu0 %v1588
    %3119 = vmatprep.subr.mxu0 0.0
    %3120 = vmatpush1.msra.mxu0 0.0
    %3121 = vmatprep.subr.mxu0 0.0
    %3122 = vmatpush1.msra.mxu0 0.0
    %3123 = vmatprep.subr.mxu0 0.0
    %3124 = vmatpush1.msra.mxu0 0.0
    %3125 = vmatprep.subr.mxu0 0.0
    %3126 = vmatpush1.msra.mxu0 0.0
    %3127 = vmatprep.subr.mxu0 0.0
    %3128 = vmatpush1.msra.mxu0 0.0
    %3129 = vmatprep.subr.mxu0 0.0
    %3130 = vmatpush1.msra.mxu0 0.0
    %3131 = vmatprep.subr.mxu0 0.0
    %3132 = vmatpush1.msra.mxu0 0.0
    %3133 = vmatprep.subr.mxu0 0.0
    %3134 = vmatpush1.msra.mxu0 0.0
    %3135 = vmatprep.subr.mxu0 0.0
    %3136 = vmatpush1.msra.mxu0 0.0
    %3137 = vmatprep.subr.mxu0 0.0
    %3138 = vmatpush1.msra.mxu0 0.0
    %3139 = vmatprep.subr.mxu0 0.0
    %3140 = vmatpush1.msra.mxu0 0.0
    %3141 = vmatprep.subr.mxu0 0.0
    %3142 = vmatpush1.msra.mxu0 0.0
    %3143 = vmatprep.subr.mxu0 0.0
    %3144 = vmatpush1.msra.mxu0 0.0
    %3145 = vmatprep.subr.mxu0 0.0
    %3146 = vmatpush1.msra.mxu0 0.0
    %3147 = vmatprep.subr.mxu0 0.0
    %3148 = vmatpush1.msra.mxu0 0.0
    %3149 = vmatprep.subr.mxu0 0.0
    %3150 = vmatpush1.msra.mxu0 0.0
    %3151 = vmatprep.subr.mxu0 0.0
    %3152 = vmatpush1.msra.mxu0 0.0
    %3153 = vmatprep.subr.mxu0 0.0
    %3154 = vmatpush1.msra.mxu0 0.0
    %3155 = vmatprep.subr.mxu0 0.0
    %3156 = vmatpush1.msra.mxu0 0.0
    %3157 = vmatprep.subr.mxu0 0.0
    %3158 = vmatpush1.msra.mxu0 0.0
    %3159 = vmatprep.subr.mxu0 0.0
    %3160 = vmatpush1.msra.mxu0 0.0
    %3161 = vmatprep.subr.mxu0 0.0
    %3162 = vmatpush1.msra.mxu0 0.0
    %3163 = vmatprep.subr.mxu0 0.0
    %3164 = vmatpush1.msra.mxu0 0.0
    %3165 = vmatprep.subr.mxu0 0.0
    %3166 = vmatpush1.msra.mxu0 0.0
    %3167 = vmatprep.subr.mxu0 0.0
    %3168 = vmatpush1.msra.mxu0 0.0
    %3169 = vmatprep.subr.mxu0 0.0
    %3170 = vmatpush1.msra.mxu0 0.0
    %3171 = vmatprep.subr.mxu0 0.0
    %3172 = vmatpush1.msra.mxu0 0.0
    %3173 = vmatprep.subr.mxu0 0.0
    %3174 = vmatpush1.msra.mxu0 0.0
    %3175 = vmatprep.subr.mxu0 0.0
    %3176 = vmatpush1.msra.mxu0 0.0
    %3177 = vmatprep.subr.mxu0 0.0
    %3178 = vmatpush1.msra.mxu0 0.0
    %3179 = vmatprep.subr.mxu0 0.0
    %3180 = vmatpush1.msra.mxu0 0.0
    %3181 = vmatprep.mubr.f32.mxu0 0.0
    %3182 = vmatmul.mubr.f32.gmra.mrb[0].mxu0 %v3106
    %v3183 = vpop.f32.mrb[0].mxu0
    %v3184 = vadd.f32 0.0, %v3183
    %v3185 = vpop.f32.mrb[0].mxu0
    %v3186 = vadd.f32 0.0, %v3185
    %3187 = vmatprep.mubr.f32.mxu0 0.0
    %3188 = vmatmul.mubr.f32.gmra.mrb[0].mxu0 %v3109
    %v3189 = vpop.f32.mrb[0].mxu0
    %v3190 = vadd.f32 0.0, %v3189
    %v3191 = vpop.f32.mrb[0].mxu0
    %v3192 = vadd.f32 0.0, %v3191
    %3193 = vmatprep.mubr.f32.mxu0 0.0
    %3194 = vmatmul.mubr.f32.gmra.mrb[0].mxu0 %v3112
    %v3195 = vpop.f32.mrb[0].mxu0
    %v3196 = vadd.f32 0.0, %v3195
    %v3197 = vpop.f32.mrb[0].mxu0
    %v3198 = vadd.f32 0.0, %v3197
    %3199 = vmatprep.mubr.f32.mxu0 0.0
    %3200 = vmatmul.mubr.f32.gmra.mrb[0].mxu0 %v3115
    %v3201 = vpop.f32.mrb[0].mxu0
    %v3202 = vadd.f32 0.0, %v3201
    %v3203 = vpop.f32.mrb[0].mxu0
    %v3204 = vadd.f32 0.0, %v3203
    %3205 = vdwg.mxu0
    %3206 = vmatprep.subr.mxu0 %v1594
    %3207 = vmatpush1.msra.mxu0 %v1592
    %3208 = vmatprep.subr.mxu0 0.0
    %3209 = vmatpush1.msra.mxu0 0.0
    %3210 = vmatprep.subr.mxu0 0.0
    %3211 = vmatpush1.msra.mxu0 0.0
    %3212 = vmatprep.subr.mxu0 0.0
    %3213 = vmatpush1.msra.mxu0 0.0
    %3214 = vmatprep.subr.mxu0 0.0
    %3215 = vmatpush1.msra.mxu0 0.0
    %3216 = vmatprep.subr.mxu0 0.0
    %3217 = vmatpush1.msra.mxu0 0.0
    %3218 = vmatprep.subr.mxu0 0.0
    %3219 = vmatpush1.msra.mxu0 0.0
    %3220 = vmatprep.subr.mxu0 0.0
    %3221 = vmatpush1.msra.mxu0 0.0
    %3222 = vmatprep.subr.mxu0 0.0
    %3223 = vmatpush1.msra.mxu0 0.0
    %3224 = vmatprep.subr.mxu0 0.0
    %3225 = vmatpush1.msra.mxu0 0.0
    %3226 = vmatprep.subr.mxu0 0.0
    %3227 = vmatpush1.msra.mxu0 0.0
    %3228 = vmatprep.subr.mxu0 0.0
    %3229 = vmatpush1.msra.mxu0 0.0
    %3230 = vmatprep.subr.mxu0 0.0
    %3231 = vmatpush1.msra.mxu0 0.0
    %3232 = vmatprep.subr.mxu0 0.0
    %3233 = vmatpush1.msra.mxu0 0.0
    %3234 = vmatprep.subr.mxu0 0.0
    %3235 = vmatpush1.msra.mxu0 0.0
    %3236 = vmatprep.subr.mxu0 0.0
    %3237 = vmatpush1.msra.mxu0 0.0
    %3238 = vmatprep.subr.mxu0 0.0
    %3239 = vmatpush1.msra.mxu0 0.0
    %3240 = vmatprep.subr.mxu0 0.0
    %3241 = vmatpush1.msra.mxu0 0.0
    %3242 = vmatprep.subr.mxu0 0.0
    %3243 = vmatpush1.msra.mxu0 0.0
    %3244 = vmatprep.subr.mxu0 0.0
    %3245 = vmatpush1.msra.mxu0 0.0
    %3246 = vmatprep.subr.mxu0 0.0
    %3247 = vmatpush1.msra.mxu0 0.0
    %3248 = vmatprep.subr.mxu0 0.0
    %3249 = vmatpush1.msra.mxu0 0.0
    %3250 = vmatprep.subr.mxu0 0.0
    %3251 = vmatpush1.msra.mxu0 0.0
    %3252 = vmatprep.subr.mxu0 0.0
    %3253 = vmatpush1.msra.mxu0 0.0
    %3254 = vmatprep.subr.mxu0 0.0
    %3255 = vmatpush1.msra.mxu0 0.0
    %3256 = vmatprep.subr.mxu0 0.0
    %3257 = vmatpush1.msra.mxu0 0.0
    %3258 = vmatprep.subr.mxu0 0.0
    %3259 = vmatpush1.msra.mxu0 0.0
    %3260 = vmatprep.subr.mxu0 0.0
    %3261 = vmatpush1.msra.mxu0 0.0
    %3262 = vmatprep.subr.mxu0 0.0
    %3263 = vmatpush1.msra.mxu0 0.0
    %3264 = vmatprep.subr.mxu0 0.0
    %3265 = vmatpush1.msra.mxu0 0.0
    %3266 = vmatprep.subr.mxu0 0.0
    %3267 = vmatpush1.msra.mxu0 0.0
    %3268 = vmatprep.subr.mxu0 0.0
    %3269 = vmatpush1.msra.mxu0 0.0
    %3270 = vmatprep.mubr.f32.mxu0 0.0
    %3271 = vmatmul.mubr.f32.gmra.mrb[0].mxu0 %v3106
    %v3272 = vpop.f32.mrb[0].mxu0
    %v3273 = vadd.f32 0.0, %v3272
    %v3274 = vpop.f32.mrb[0].mxu0
    %v3275 = vadd.f32 0.0, %v3274
    %3276 = vmatprep.mubr.f32.mxu0 0.0
    %3277 = vmatmul.mubr.f32.gmra.mrb[0].mxu0 %v3109
    %v3278 = vpop.f32.mrb[0].mxu0
    %v3279 = vadd.f32 0.0, %v3278
    %v3280 = vpop.f32.mrb[0].mxu0
    %v3281 = vadd.f32 0.0, %v3280
    %3282 = vmatprep.mubr.f32.mxu0 0.0
    %3283 = vmatmul.mubr.f32.gmra.mrb[0].mxu0 %v3112
    %v3284 = vpop.f32.mrb[0].mxu0
    %v3285 = vadd.f32 0.0, %v3284
    %v3286 = vpop.f32.mrb[0].mxu0
    %v3287 = vadd.f32 0.0, %v3286
    %3288 = vmatprep.mubr.f32.mxu0 0.0
    %3289 = vmatmul.mubr.f32.gmra.mrb[0].mxu0 %v3115
    %v3290 = vpop.f32.mrb[0].mxu0
    %v3291 = vadd.f32 0.0, %v3290
    %v3292 = vpop.f32.mrb[0].mxu0
    %v3293 = vadd.f32 0.0, %v3292
    %3294 = vdwg.mxu0
    %3295 = vmatprep.subr.mxu0 %v1598
    %3296 = vmatpush1.msra.mxu0 %v1596
    %3297 = vmatprep.subr.mxu0 0.0
    %3298 = vmatpush1.msra.mxu0 0.0
    %3299 = vmatprep.subr.mxu0 0.0
    %3300 = vmatpush1.msra.mxu0 0.0
    %3301 = vmatprep.subr.mxu0 0.0
    %3302 = vmatpush1.msra.mxu0 0.0
    %3303 = vmatprep.subr.mxu0 0.0
    %3304 = vmatpush1.msra.mxu0 0.0
    %3305 = vmatprep.subr.mxu0 0.0
    %3306 = vmatpush1.msra.mxu0 0.0
    %3307 = vmatprep.subr.mxu0 0.0
    %3308 = vmatpush1.msra.mxu0 0.0
    %3309 = vmatprep.subr.mxu0 0.0
    %3310 = vmatpush1.msra.mxu0 0.0
    %3311 = vmatprep.subr.mxu0 0.0
    %3312 = vmatpush1.msra.mxu0 0.0
    %3313 = vmatprep.subr.mxu0 0.0
    %3314 = vmatpush1.msra.mxu0 0.0
    %3315 = vmatprep.subr.mxu0 0.0
    %3316 = vmatpush1.msra.mxu0 0.0
    %3317 = vmatprep.subr.mxu0 0.0
    %3318 = vmatpush1.msra.mxu0 0.0
    %3319 = vmatprep.subr.mxu0 0.0
    %3320 = vmatpush1.msra.mxu0 0.0
    %3321 = vmatprep.subr.mxu0 0.0
    %3322 = vmatpush1.msra.mxu0 0.0
    %3323 = vmatprep.subr.mxu0 0.0
    %3324 = vmatpush1.msra.mxu0 0.0
    %3325 = vmatprep.subr.mxu0 0.0
    %3326 = vmatpush1.msra.mxu0 0.0
    %3327 = vmatprep.subr.mxu0 0.0
    %3328 = vmatpush1.msra.mxu0 0.0
    %3329 = vmatprep.subr.mxu0 0.0
    %3330 = vmatpush1.msra.mxu0 0.0
    %3331 = vmatprep.subr.mxu0 0.0
    %3332 = vmatpush1.msra.mxu0 0.0
    %3333 = vmatprep.subr.mxu0 0.0
    %3334 = vmatpush1.msra.mxu0 0.0
    %3335 = vmatprep.subr.mxu0 0.0
    %3336 = vmatpush1.msra.mxu0 0.0
    %3337 = vmatprep.subr.mxu0 0.0
    %3338 = vmatpush1.msra.mxu0 0.0
    %3339 = vmatprep.subr.mxu0 0.0
    %3340 = vmatpush1.msra.mxu0 0.0
    %3341 = vmatprep.subr.mxu0 0.0
    %3342 = vmatpush1.msra.mxu0 0.0
    %3343 = vmatprep.subr.mxu0 0.0
    %3344 = vmatpush1.msra.mxu0 0.0
    %3345 = vmatprep.subr.mxu0 0.0
    %3346 = vmatpush1.msra.mxu0 0.0
    %3347 = vmatprep.subr.mxu0 0.0
    %3348 = vmatpush1.msra.mxu0 0.0
    %3349 = vmatprep.subr.mxu0 0.0
    %3350 = vmatpush1.msra.mxu0 0.0
    %3351 = vmatprep.subr.mxu0 0.0
    %3352 = vmatpush1.msra.mxu0 0.0
    %3353 = vmatprep.subr.mxu0 0.0
    %3354 = vmatpush1.msra.mxu0 0.0
    %3355 = vmatprep.subr.mxu0 0.0
    %3356 = vmatpush1.msra.mxu0 0.0
    %3357 = vmatprep.subr.mxu0 0.0
    %3358 = vmatpush1.msra.mxu0 0.0
    %3359 = vmatprep.mubr.f32.mxu0 0.0
    %3360 = vmatmul.mubr.f32.gmra.mrb[0].mxu0 %v3106
    %v3361 = vpop.f32.mrb[0].mxu0
    %v3362 = vadd.f32 0.0, %v3361
    %v3363 = vpop.f32.mrb[0].mxu0
    %v3364 = vadd.f32 0.0, %v3363
    %3365 = vmatprep.mubr.f32.mxu0 0.0
    %3366 = vmatmul.mubr.f32.gmra.mrb[0].mxu0 %v3109
    %v3367 = vpop.f32.mrb[0].mxu0
    %v3368 = vadd.f32 0.0, %v3367
    %v3369 = vpop.f32.mrb[0].mxu0
    %v3370 = vadd.f32 0.0, %v3369
    %3371 = vmatprep.mubr.f32.mxu0 0.0
    %3372 = vmatmul.mubr.f32.gmra.mrb[0].mxu0 %v3112
    %v3373 = vpop.f32.mrb[0].mxu0
    %v3374 = vadd.f32 0.0, %v3373
    %v3375 = vpop.f32.mrb[0].mxu0
    %v3376 = vadd.f32 0.0, %v3375
    %3377 = vmatprep.mubr.f32.mxu0 0.0
    %3378 = vmatmul.mubr.f32.gmra.mrb[0].mxu0 %v3115
    %v3379 = vpop.f32.mrb[0].mxu0
    %v3380 = vadd.f32 0.0, %v3379
    %v3381 = vpop.f32.mrb[0].mxu0
    %v3382 = vadd.f32 0.0, %v3381
    %3383 = vdwg.mxu0
    %3384 = vmatprep.subr.mxu0 %v1602
    %3385 = vmatpush1.msra.mxu0 %v1600
    %3386 = vmatprep.subr.mxu0 0.0
    %3387 = vmatpush1.msra.mxu0 0.0
    %3388 = vmatprep.subr.mxu0 0.0
    %3389 = vmatpush1.msra.mxu0 0.0
    %3390 = vmatprep.subr.mxu0 0.0
    %3391 = vmatpush1.msra.mxu0 0.0
    %3392 = vmatprep.subr.mxu0 0.0
    %3393 = vmatpush1.msra.mxu0 0.0
    %3394 = vmatprep.subr.mxu0 0.0
    %3395 = vmatpush1.msra.mxu0 0.0
    %3396 = vmatprep.subr.mxu0 0.0
    %3397 = vmatpush1.msra.mxu0 0.0
    %3398 = vmatprep.subr.mxu0 0.0
    %3399 = vmatpush1.msra.mxu0 0.0
    %3400 = vmatprep.subr.mxu0 0.0
    %3401 = vmatpush1.msra.mxu0 0.0
    %3402 = vmatprep.subr.mxu0 0.0
    %3403 = vmatpush1.msra.mxu0 0.0
    %3404 = vmatprep.subr.mxu0 0.0
    %3405 = vmatpush1.msra.mxu0 0.0
    %3406 = vmatprep.subr.mxu0 0.0
    %3407 = vmatpush1.msra.mxu0 0.0
    %3408 = vmatprep.subr.mxu0 0.0
    %3409 = vmatpush1.msra.mxu0 0.0
    %3410 = vmatprep.subr.mxu0 0.0
    %3411 = vmatpush1.msra.mxu0 0.0
    %3412 = vmatprep.subr.mxu0 0.0
    %3413 = vmatpush1.msra.mxu0 0.0
    %3414 = vmatprep.subr.mxu0 0.0
    %3415 = vmatpush1.msra.mxu0 0.0
    %3416 = vmatprep.subr.mxu0 0.0
    %3417 = vmatpush1.msra.mxu0 0.0
    %3418 = vmatprep.subr.mxu0 0.0
    %3419 = vmatpush1.msra.mxu0 0.0
    %3420 = vmatprep.subr.mxu0 0.0
    %3421 = vmatpush1.msra.mxu0 0.0
    %3422 = vmatprep.subr.mxu0 0.0
    %3423 = vmatpush1.msra.mxu0 0.0
    %3424 = vmatprep.subr.mxu0 0.0
    %3425 = vmatpush1.msra.mxu0 0.0
    %3426 = vmatprep.subr.mxu0 0.0
    %3427 = vmatpush1.msra.mxu0 0.0
    %3428 = vmatprep.subr.mxu0 0.0
    %3429 = vmatpush1.msra.mxu0 0.0
    %3430 = vmatprep.subr.mxu0 0.0
    %3431 = vmatpush1.msra.mxu0 0.0
    %3432 = vmatprep.subr.mxu0 0.0
    %3433 = vmatpush1.msra.mxu0 0.0
    %3434 = vmatprep.subr.mxu0 0.0
    %3435 = vmatpush1.msra.mxu0 0.0
    %3436 = vmatprep.subr.mxu0 0.0
    %3437 = vmatpush1.msra.mxu0 0.0
    %3438 = vmatprep.subr.mxu0 0.0
    %3439 = vmatpush1.msra.mxu0 0.0
    %3440 = vmatprep.subr.mxu0 0.0
    %3441 = vmatpush1.msra.mxu0 0.0
    %3442 = vmatprep.subr.mxu0 0.0
    %3443 = vmatpush1.msra.mxu0 0.0
    %3444 = vmatprep.subr.mxu0 0.0
    %3445 = vmatpush1.msra.mxu0 0.0
    %3446 = vmatprep.subr.mxu0 0.0
    %3447 = vmatpush1.msra.mxu0 0.0
    %3448 = vmatprep.mubr.f32.mxu0 0.0
    %3449 = vmatmul.mubr.f32.gmra.mrb[0].mxu0 %v3106
    %v3450 = vpop.f32.mrb[0].mxu0
    %v3451 = vadd.f32 0.0, %v3450
    %v3452 = vpop.f32.mrb[0].mxu0
    %v3453 = vadd.f32 0.0, %v3452
    %3454 = vmatprep.mubr.f32.mxu0 0.0
    %3455 = vmatmul.mubr.f32.gmra.mrb[0].mxu0 %v3109
    %v3456 = vpop.f32.mrb[0].mxu0
    %v3457 = vadd.f32 0.0, %v3456
    %v3458 = vpop.f32.mrb[0].mxu0
    %v3459 = vadd.f32 0.0, %v3458
    %3460 = vmatprep.mubr.f32.mxu0 0.0
    %3461 = vmatmul.mubr.f32.gmra.mrb[0].mxu0 %v3112
    %v3462 = vpop.f32.mrb[0].mxu0
    %v3463 = vadd.f32 0.0, %v3462
    %v3464 = vpop.f32.mrb[0].mxu0
    %v3465 = vadd.f32 0.0, %v3464
    %3466 = vmatprep.mubr.f32.mxu0 0.0
    %3467 = vmatmul.mubr.f32.gmra.mrb[0].mxu0 %v3115
    %v3468 = vpop.f32.mrb[0].mxu0
    %v3469 = vadd.f32 0.0, %v3468
    %v3470 = vpop.f32.mrb[0].mxu0
    %v3471 = vadd.f32 0.0, %v3470
    %3472 = vdwg.mxu0
    %v3474 = vsel %vm2600, %v3097, 0
    %v3477 = vsel %vm2600, %v3098, 0
    %v3480 = vsel %vm2600, %v3099, 0
    %v3483 = vsel %vm2600, %v3100, 0
    %3485 = vmatprep.subr.mxu0 %v3066
    %3486 = vmatpush1.msra.mxu0 %v3065
    %3487 = vmatprep.subr.mxu0 %v3074
    %3488 = vmatpush1.msra.mxu0 %v3073
    %3489 = vmatprep.subr.mxu0 %v3082
    %3490 = vmatpush1.msra.mxu0 %v3081
    %3491 = vmatprep.subr.mxu0 %v3090
    %3492 = vmatpush1.msra.mxu0 %v3089
    %3493 = vmatprep.subr.mxu0 0.0
    %3494 = vmatpush1.msra.mxu0 0.0
    %3495 = vmatprep.subr.mxu0 0.0
    %3496 = vmatpush1.msra.mxu0 0.0
    %3497 = vmatprep.subr.mxu0 0.0
    %3498 = vmatpush1.msra.mxu0 0.0
    %3499 = vmatprep.subr.mxu0 0.0
    %3500 = vmatpush1.msra.mxu0 0.0
    %3501 = vmatprep.subr.mxu0 0.0
    %3502 = vmatpush1.msra.mxu0 0.0
    %3503 = vmatprep.subr.mxu0 0.0
    %3504 = vmatpush1.msra.mxu0 0.0
    %3505 = vmatprep.subr.mxu0 0.0
    %3506 = vmatpush1.msra.mxu0 0.0
    %3507 = vmatprep.subr.mxu0 0.0
    %3508 = vmatpush1.msra.mxu0 0.0
    %3509 = vmatprep.subr.mxu0 0.0
    %3510 = vmatpush1.msra.mxu0 0.0
    %3511 = vmatprep.subr.mxu0 0.0
    %3512 = vmatpush1.msra.mxu0 0.0
    %3513 = vmatprep.subr.mxu0 0.0
    %3514 = vmatpush1.msra.mxu0 0.0
    %3515 = vmatprep.subr.mxu0 0.0
    %3516 = vmatpush1.msra.mxu0 0.0
    %3517 = vmatprep.subr.mxu0 0.0
    %3518 = vmatpush1.msra.mxu0 0.0
    %3519 = vmatprep.subr.mxu0 0.0
    %3520 = vmatpush1.msra.mxu0 0.0
    %3521 = vmatprep.subr.mxu0 0.0
    %3522 = vmatpush1.msra.mxu0 0.0
    %3523 = vmatprep.subr.mxu0 0.0
    %3524 = vmatpush1.msra.mxu0 0.0
    %3525 = vmatprep.subr.mxu0 0.0
    %3526 = vmatpush1.msra.mxu0 0.0
    %3527 = vmatprep.subr.mxu0 0.0
    %3528 = vmatpush1.msra.mxu0 0.0
    %3529 = vmatprep.subr.mxu0 0.0
    %3530 = vmatpush1.msra.mxu0 0.0
    %3531 = vmatprep.subr.mxu0 0.0
    %3532 = vmatpush1.msra.mxu0 0.0
    %3533 = vmatprep.subr.mxu0 0.0
    %3534 = vmatpush1.msra.mxu0 0.0
    %3535 = vmatprep.subr.mxu0 0.0
    %3536 = vmatpush1.msra.mxu0 0.0
    %3537 = vmatprep.subr.mxu0 0.0
    %3538 = vmatpush1.msra.mxu0 0.0
    %3539 = vmatprep.subr.mxu0 0.0
    %3540 = vmatpush1.msra.mxu0 0.0
    %3541 = vmatprep.subr.mxu0 0.0
    %3542 = vmatpush1.msra.mxu0 0.0
    %3543 = vmatprep.subr.mxu0 0.0
    %3544 = vmatpush1.msra.mxu0 0.0
    %3545 = vmatprep.subr.mxu0 0.0
    %3546 = vmatpush1.msra.mxu0 0.0
    %3547 = vmatprep.subr.mxu0 0.0
    %3548 = vmatpush1.msra.mxu0 0.0
    %3549 = vmatprep.mubr.f32.mxu0 0.0
    %3550 = vmatmul.mubr.f32.gmra.mrb[0].mxu0 %v3474
    %v3551 = vpop.f32.mrb[0].mxu0
    %v3552 = vadd.f32 %v3184, %v3551
    %v3553 = vpop.f32.mrb[0].mxu0
    %v3554 = vadd.f32 %v3186, %v3553
    %3555 = vmatprep.mubr.f32.mxu0 0.0
    %3556 = vmatmul.mubr.f32.gmra.mrb[0].mxu0 %v3477
    %v3557 = vpop.f32.mrb[0].mxu0
    %v3558 = vadd.f32 %v3190, %v3557
    %v3559 = vpop.f32.mrb[0].mxu0
    %v3560 = vadd.f32 %v3192, %v3559
    %3561 = vmatprep.mubr.f32.mxu0 0.0
    %3562 = vmatmul.mubr.f32.gmra.mrb[0].mxu0 %v3480
    %v3563 = vpop.f32.mrb[0].mxu0
    %v3564 = vadd.f32 %v3196, %v3563
    %v3565 = vpop.f32.mrb[0].mxu0
    %v3566 = vadd.f32 %v3198, %v3565
    %3567 = vmatprep.mubr.f32.mxu0 0.0
    %3568 = vmatmul.mubr.f32.gmra.mrb[0].mxu0 %v3483
    %v3569 = vpop.f32.mrb[0].mxu0
    %v3570 = vadd.f32 %v3202, %v3569
    %v3571 = vpop.f32.mrb[0].mxu0
    %v3572 = vadd.f32 %v3204, %v3571
    %3573 = vdwg.mxu0
    %3574 = vmatprep.subr.mxu0 %v3068
    %3575 = vmatpush1.msra.mxu0 %v3067
    %3576 = vmatprep.subr.mxu0 %v3076
    %3577 = vmatpush1.msra.mxu0 %v3075
    %3578 = vmatprep.subr.mxu0 %v3084
    %3579 = vmatpush1.msra.mxu0 %v3083
    %3580 = vmatprep.subr.mxu0 %v3092
    %3581 = vmatpush1.msra.mxu0 %v3091
    %3582 = vmatprep.subr.mxu0 0.0
    %3583 = vmatpush1.msra.mxu0 0.0
    %3584 = vmatprep.subr.mxu0 0.0
    %3585 = vmatpush1.msra.mxu0 0.0
    %3586 = vmatprep.subr.mxu0 0.0
    %3587 = vmatpush1.msra.mxu0 0.0
    %3588 = vmatprep.subr.mxu0 0.0
    %3589 = vmatpush1.msra.mxu0 0.0
    %3590 = vmatprep.subr.mxu0 0.0
    %3591 = vmatpush1.msra.mxu0 0.0
    %3592 = vmatprep.subr.mxu0 0.0
    %3593 = vmatpush1.msra.mxu0 0.0
    %3594 = vmatprep.subr.mxu0 0.0
    %3595 = vmatpush1.msra.mxu0 0.0
    %3596 = vmatprep.subr.mxu0 0.0
    %3597 = vmatpush1.msra.mxu0 0.0
    %3598 = vmatprep.subr.mxu0 0.0
    %3599 = vmatpush1.msra.mxu0 0.0
    %3600 = vmatprep.subr.mxu0 0.0
    %3601 = vmatpush1.msra.mxu0 0.0
    %3602 = vmatprep.subr.mxu0 0.0
    %3603 = vmatpush1.msra.mxu0 0.0
    %3604 = vmatprep.subr.mxu0 0.0
    %3605 = vmatpush1.msra.mxu0 0.0
    %3606 = vmatprep.subr.mxu0 0.0
    %3607 = vmatpush1.msra.mxu0 0.0
    %3608 = vmatprep.subr.mxu0 0.0
    %3609 = vmatpush1.msra.mxu0 0.0
    %3610 = vmatprep.subr.mxu0 0.0
    %3611 = vmatpush1.msra.mxu0 0.0
    %3612 = vmatprep.subr.mxu0 0.0
    %3613 = vmatpush1.msra.mxu0 0.0
    %3614 = vmatprep.subr.mxu0 0.0
    %3615 = vmatpush1.msra.mxu0 0.0
    %3616 = vmatprep.subr.mxu0 0.0
    %3617 = vmatpush1.msra.mxu0 0.0
    %3618 = vmatprep.subr.mxu0 0.0
    %3619 = vmatpush1.msra.mxu0 0.0
    %3620 = vmatprep.subr.mxu0 0.0
    %3621 = vmatpush1.msra.mxu0 0.0
    %3622 = vmatprep.subr.mxu0 0.0
    %3623 = vmatpush1.msra.mxu0 0.0
    %3624 = vmatprep.subr.mxu0 0.0
    %3625 = vmatpush1.msra.mxu0 0.0
    %3626 = vmatprep.subr.mxu0 0.0
    %3627 = vmatpush1.msra.mxu0 0.0
    %3628 = vmatprep.subr.mxu0 0.0
    %3629 = vmatpush1.msra.mxu0 0.0
    %3630 = vmatprep.subr.mxu0 0.0
    %3631 = vmatpush1.msra.mxu0 0.0
    %3632 = vmatprep.subr.mxu0 0.0
    %3633 = vmatpush1.msra.mxu0 0.0
    %3634 = vmatprep.subr.mxu0 0.0
    %3635 = vmatpush1.msra.mxu0 0.0
    %3636 = vmatprep.subr.mxu0 0.0
    %3637 = vmatpush1.msra.mxu0 0.0
    %3638 = vmatprep.mubr.f32.mxu0 0.0
    %3639 = vmatmul.mubr.f32.gmra.mrb[0].mxu0 %v3474
    %v3640 = vpop.f32.mrb[0].mxu0
    %v3641 = vadd.f32 %v3273, %v3640
    %v3642 = vpop.f32.mrb[0].mxu0
    %v3643 = vadd.f32 %v3275, %v3642
    %3644 = vmatprep.mubr.f32.mxu0 0.0
    %3645 = vmatmul.mubr.f32.gmra.mrb[0].mxu0 %v3477
    %v3646 = vpop.f32.mrb[0].mxu0
    %v3647 = vadd.f32 %v3279, %v3646
    %v3648 = vpop.f32.mrb[0].mxu0
    %v3649 = vadd.f32 %v3281, %v3648
    %3650 = vmatprep.mubr.f32.mxu0 0.0
    %3651 = vmatmul.mubr.f32.gmra.mrb[0].mxu0 %v3480
    %v3652 = vpop.f32.mrb[0].mxu0
    %v3653 = vadd.f32 %v3285, %v3652
    %v3654 = vpop.f32.mrb[0].mxu0
    %v3655 = vadd.f32 %v3287, %v3654
    %3656 = vmatprep.mubr.f32.mxu0 0.0
    %3657 = vmatmul.mubr.f32.gmra.mrb[0].mxu0 %v3483
    %v3658 = vpop.f32.mrb[0].mxu0
    %v3659 = vadd.f32 %v3291, %v3658
    %v3660 = vpop.f32.mrb[0].mxu0
    %v3661 = vadd.f32 %v3293, %v3660
    %3662 = vdwg.mxu0
    %3663 = vmatprep.subr.mxu0 %v3070
    %3664 = vmatpush1.msra.mxu0 %v3069
    %3665 = vmatprep.subr.mxu0 %v3078
    %3666 = vmatpush1.msra.mxu0 %v3077
    %3667 = vmatprep.subr.mxu0 %v3086
    %3668 = vmatpush1.msra.mxu0 %v3085
    %3669 = vmatprep.subr.mxu0 %v3094
    %3670 = vmatpush1.msra.mxu0 %v3093
    %3671 = vmatprep.subr.mxu0 0.0
    %3672 = vmatpush1.msra.mxu0 0.0
    %3673 = vmatprep.subr.mxu0 0.0
    %3674 = vmatpush1.msra.mxu0 0.0
    %3675 = vmatprep.subr.mxu0 0.0
    %3676 = vmatpush1.msra.mxu0 0.0
    %3677 = vmatprep.subr.mxu0 0.0
    %3678 = vmatpush1.msra.mxu0 0.0
    %3679 = vmatprep.subr.mxu0 0.0
    %3680 = vmatpush1.msra.mxu0 0.0
    %3681 = vmatprep.subr.mxu0 0.0
    %3682 = vmatpush1.msra.mxu0 0.0
    %3683 = vmatprep.subr.mxu0 0.0
    %3684 = vmatpush1.msra.mxu0 0.0
    %3685 = vmatprep.subr.mxu0 0.0
    %3686 = vmatpush1.msra.mxu0 0.0
    %3687 = vmatprep.subr.mxu0 0.0
    %3688 = vmatpush1.msra.mxu0 0.0
    %3689 = vmatprep.subr.mxu0 0.0
    %3690 = vmatpush1.msra.mxu0 0.0
    %3691 = vmatprep.subr.mxu0 0.0
    %3692 = vmatpush1.msra.mxu0 0.0
    %3693 = vmatprep.subr.mxu0 0.0
    %3694 = vmatpush1.msra.mxu0 0.0
    %3695 = vmatprep.subr.mxu0 0.0
    %3696 = vmatpush1.msra.mxu0 0.0
    %3697 = vmatprep.subr.mxu0 0.0
    %3698 = vmatpush1.msra.mxu0 0.0
    %3699 = vmatprep.subr.mxu0 0.0
    %3700 = vmatpush1.msra.mxu0 0.0
    %3701 = vmatprep.subr.mxu0 0.0
    %3702 = vmatpush1.msra.mxu0 0.0
    %3703 = vmatprep.subr.mxu0 0.0
    %3704 = vmatpush1.msra.mxu0 0.0
    %3705 = vmatprep.subr.mxu0 0.0
    %3706 = vmatpush1.msra.mxu0 0.0
    %3707 = vmatprep.subr.mxu0 0.0
    %3708 = vmatpush1.msra.mxu0 0.0
    %3709 = vmatprep.subr.mxu0 0.0
    %3710 = vmatpush1.msra.mxu0 0.0
    %3711 = vmatprep.subr.mxu0 0.0
    %3712 = vmatpush1.msra.mxu0 0.0
    %3713 = vmatprep.subr.mxu0 0.0
    %3714 = vmatpush1.msra.mxu0 0.0
    %3715 = vmatprep.subr.mxu0 0.0
    %3716 = vmatpush1.msra.mxu0 0.0
    %3717 = vmatprep.subr.mxu0 0.0
    %3718 = vmatpush1.msra.mxu0 0.0
    %3719 = vmatprep.subr.mxu0 0.0
    %3720 = vmatpush1.msra.mxu0 0.0
    %3721 = vmatprep.subr.mxu0 0.0
    %3722 = vmatpush1.msra.mxu0 0.0
    %3723 = vmatprep.subr.mxu0 0.0
    %3724 = vmatpush1.msra.mxu0 0.0
    %3725 = vmatprep.subr.mxu0 0.0
    %3726 = vmatpush1.msra.mxu0 0.0
    %3727 = vmatprep.mubr.f32.mxu0 0.0
    %3728 = vmatmul.mubr.f32.gmra.mrb[0].mxu0 %v3474
    %v3729 = vpop.f32.mrb[0].mxu0
    %v3730 = vadd.f32 %v3362, %v3729
    %v3731 = vpop.f32.mrb[0].mxu0
    %v3732 = vadd.f32 %v3364, %v3731
    %3733 = vmatprep.mubr.f32.mxu0 0.0
    %3734 = vmatmul.mubr.f32.gmra.mrb[0].mxu0 %v3477
    %v3735 = vpop.f32.mrb[0].mxu0
    %v3736 = vadd.f32 %v3368, %v3735
    %v3737 = vpop.f32.mrb[0].mxu0
    %v3738 = vadd.f32 %v3370, %v3737
    %3739 = vmatprep.mubr.f32.mxu0 0.0
    %3740 = vmatmul.mubr.f32.gmra.mrb[0].mxu0 %v3480
    %v3741 = vpop.f32.mrb[0].mxu0
    %v3742 = vadd.f32 %v3374, %v3741
    %v3743 = vpop.f32.mrb[0].mxu0
    %v3744 = vadd.f32 %v3376, %v3743
    %3745 = vmatprep.mubr.f32.mxu0 0.0
    %3746 = vmatmul.mubr.f32.gmra.mrb[0].mxu0 %v3483
    %v3747 = vpop.f32.mrb[0].mxu0
    %v3748 = vadd.f32 %v3380, %v3747
    %v3749 = vpop.f32.mrb[0].mxu0
    %v3750 = vadd.f32 %v3382, %v3749
    %3751 = vdwg.mxu0
    %3752 = vmatprep.subr.mxu0 %v3072
    %3753 = vmatpush1.msra.mxu0 %v3071
    %3754 = vmatprep.subr.mxu0 %v3080
    %3755 = vmatpush1.msra.mxu0 %v3079
    %3756 = vmatprep.subr.mxu0 %v3088
    %3757 = vmatpush1.msra.mxu0 %v3087
    %3758 = vmatprep.subr.mxu0 %v3096
    %3759 = vmatpush1.msra.mxu0 %v3095
    %3760 = vmatprep.subr.mxu0 0.0
    %3761 = vmatpush1.msra.mxu0 0.0
    %3762 = vmatprep.subr.mxu0 0.0
    %3763 = vmatpush1.msra.mxu0 0.0
    %3764 = vmatprep.subr.mxu0 0.0
    %3765 = vmatpush1.msra.mxu0 0.0
    %3766 = vmatprep.subr.mxu0 0.0
    %3767 = vmatpush1.msra.mxu0 0.0
    %3768 = vmatprep.subr.mxu0 0.0
    %3769 = vmatpush1.msra.mxu0 0.0
    %3770 = vmatprep.subr.mxu0 0.0
    %3771 = vmatpush1.msra.mxu0 0.0
    %3772 = vmatprep.subr.mxu0 0.0
    %3773 = vmatpush1.msra.mxu0 0.0
    %3774 = vmatprep.subr.mxu0 0.0
    %3775 = vmatpush1.msra.mxu0 0.0
    %3776 = vmatprep.subr.mxu0 0.0
    %3777 = vmatpush1.msra.mxu0 0.0
    %3778 = vmatprep.subr.mxu0 0.0
    %3779 = vmatpush1.msra.mxu0 0.0
    %3780 = vmatprep.subr.mxu0 0.0
    %3781 = vmatpush1.msra.mxu0 0.0
    %3782 = vmatprep.subr.mxu0 0.0
    %3783 = vmatpush1.msra.mxu0 0.0
    %3784 = vmatprep.subr.mxu0 0.0
    %3785 = vmatpush1.msra.mxu0 0.0
    %3786 = vmatprep.subr.mxu0 0.0
    %3787 = vmatpush1.msra.mxu0 0.0
    %3788 = vmatprep.subr.mxu0 0.0
    %3789 = vmatpush1.msra.mxu0 0.0
    %3790 = vmatprep.subr.mxu0 0.0
    %3791 = vmatpush1.msra.mxu0 0.0
    %3792 = vmatprep.subr.mxu0 0.0
    %3793 = vmatpush1.msra.mxu0 0.0
    %3794 = vmatprep.subr.mxu0 0.0
    %3795 = vmatpush1.msra.mxu0 0.0
    %3796 = vmatprep.subr.mxu0 0.0
    %3797 = vmatpush1.msra.mxu0 0.0
    %3798 = vmatprep.subr.mxu0 0.0
    %3799 = vmatpush1.msra.mxu0 0.0
    %3800 = vmatprep.subr.mxu0 0.0
    %3801 = vmatpush1.msra.mxu0 0.0
    %3802 = vmatprep.subr.mxu0 0.0
    %3803 = vmatpush1.msra.mxu0 0.0
    %3804 = vmatprep.subr.mxu0 0.0
    %3805 = vmatpush1.msra.mxu0 0.0
    %3806 = vmatprep.subr.mxu0 0.0
    %3807 = vmatpush1.msra.mxu0 0.0
    %3808 = vmatprep.subr.mxu0 0.0
    %3809 = vmatpush1.msra.mxu0 0.0
    %3810 = vmatprep.subr.mxu0 0.0
    %3811 = vmatpush1.msra.mxu0 0.0
    %3812 = vmatprep.subr.mxu0 0.0
    %3813 = vmatpush1.msra.mxu0 0.0
    %3814 = vmatprep.subr.mxu0 0.0
    %3815 = vmatpush1.msra.mxu0 0.0
    %3816 = vmatprep.mubr.f32.mxu0 0.0
    %3817 = vmatmul.mubr.f32.gmra.mrb[0].mxu0 %v3474
    %v3818 = vpop.f32.mrb[0].mxu0
    %v3819 = vadd.f32 %v3451, %v3818
    %v3820 = vpop.f32.mrb[0].mxu0
    %v3821 = vadd.f32 %v3453, %v3820
    %3822 = vmatprep.mubr.f32.mxu0 0.0
    %3823 = vmatmul.mubr.f32.gmra.mrb[0].mxu0 %v3477
    %v3824 = vpop.f32.mrb[0].mxu0
    %v3825 = vadd.f32 %v3457, %v3824
    %v3826 = vpop.f32.mrb[0].mxu0
    %v3827 = vadd.f32 %v3459, %v3826
    %3828 = vmatprep.mubr.f32.mxu0 0.0
    %3829 = vmatmul.mubr.f32.gmra.mrb[0].mxu0 %v3480
    %v3830 = vpop.f32.mrb[0].mxu0
    %v3831 = vadd.f32 %v3463, %v3830
    %v3832 = vpop.f32.mrb[0].mxu0
    %v3833 = vadd.f32 %v3465, %v3832
    %3834 = vmatprep.mubr.f32.mxu0 0.0
    %3835 = vmatmul.mubr.f32.gmra.mrb[0].mxu0 %v3483
    %v3836 = vpop.f32.mrb[0].mxu0
    %v3837 = vadd.f32 %v3469, %v3836
    %v3838 = vpop.f32.mrb[0].mxu0
    %v3839 = vadd.f32 %v3471, %v3838
    %3840 = vdwg.mxu0
    %v3841 = vld [vmem:[%s11] sm:$0xff]
    %v3842 = vld [vmem:[%s11 + $0x8] sm:$0xff]
    %v3843 = vld [vmem:[%s11 + $0x10] sm:$0xff]
    %v3844 = vld [vmem:[%s11 + $0x18] sm:$0xff]
    %v3846 = vsel %vm1183, %v3841, 0
    %v3849 = vsel %vm1183, %v3842, 0
    %v3852 = vsel %vm1183, %v3843, 0
    %v3855 = vsel %vm1183, %v3844, 0
    %3857 = vmatprep.subr.mxu0 %v1198
    %3858 = vmatpush1.msra.mxu0 %v1196
    %3859 = vmatprep.subr.mxu0 0.0
    %3860 = vmatpush1.msra.mxu0 0.0
    %3861 = vmatprep.subr.mxu0 0.0
    %3862 = vmatpush1.msra.mxu0 0.0
    %3863 = vmatprep.subr.mxu0 0.0
    %3864 = vmatpush1.msra.mxu0 0.0
    %3865 = vmatprep.subr.mxu0 0.0
    %3866 = vmatpush1.msra.mxu0 0.0
    %3867 = vmatprep.subr.mxu0 0.0
    %3868 = vmatpush1.msra.mxu0 0.0
    %3869 = vmatprep.subr.mxu0 0.0
    %3870 = vmatpush1.msra.mxu0 0.0
    %3871 = vmatprep.subr.mxu0 0.0
    %3872 = vmatpush1.msra.mxu0 0.0
    %3873 = vmatprep.subr.mxu0 0.0
    %3874 = vmatpush1.msra.mxu0 0.0
    %3875 = vmatprep.subr.mxu0 0.0
    %3876 = vmatpush1.msra.mxu0 0.0
    %3877 = vmatprep.subr.mxu0 0.0
    %3878 = vmatpush1.msra.mxu0 0.0
    %3879 = vmatprep.subr.mxu0 0.0
    %3880 = vmatpush1.msra.mxu0 0.0
    %3881 = vmatprep.subr.mxu0 0.0
    %3882 = vmatpush1.msra.mxu0 0.0
    %3883 = vmatprep.subr.mxu0 0.0
    %3884 = vmatpush1.msra.mxu0 0.0
    %3885 = vmatprep.subr.mxu0 0.0
    %3886 = vmatpush1.msra.mxu0 0.0
    %3887 = vmatprep.subr.mxu0 0.0
    %3888 = vmatpush1.msra.mxu0 0.0
    %3889 = vmatprep.subr.mxu0 0.0
    %3890 = vmatpush1.msra.mxu0 0.0
    %3891 = vmatprep.subr.mxu0 0.0
    %3892 = vmatpush1.msra.mxu0 0.0
    %3893 = vmatprep.subr.mxu0 0.0
    %3894 = vmatpush1.msra.mxu0 0.0
    %3895 = vmatprep.subr.mxu0 0.0
    %3896 = vmatpush1.msra.mxu0 0.0
    %3897 = vmatprep.subr.mxu0 0.0
    %3898 = vmatpush1.msra.mxu0 0.0
    %3899 = vmatprep.subr.mxu0 0.0
    %3900 = vmatpush1.msra.mxu0 0.0
    %3901 = vmatprep.subr.mxu0 0.0
    %3902 = vmatpush1.msra.mxu0 0.0
    %3903 = vmatprep.subr.mxu0 0.0
    %3904 = vmatpush1.msra.mxu0 0.0
    %3905 = vmatprep.subr.mxu0 0.0
    %3906 = vmatpush1.msra.mxu0 0.0
    %3907 = vmatprep.subr.mxu0 0.0
    %3908 = vmatpush1.msra.mxu0 0.0
    %3909 = vmatprep.subr.mxu0 0.0
    %3910 = vmatpush1.msra.mxu0 0.0
    %3911 = vmatprep.subr.mxu0 0.0
    %3912 = vmatpush1.msra.mxu0 0.0
    %3913 = vmatprep.subr.mxu0 0.0
    %3914 = vmatpush1.msra.mxu0 0.0
    %3915 = vmatprep.subr.mxu0 0.0
    %3916 = vmatpush1.msra.mxu0 0.0
    %3917 = vmatprep.subr.mxu0 0.0
    %3918 = vmatpush1.msra.mxu0 0.0
    %3919 = vmatprep.subr.mxu0 0.0
    %3920 = vmatpush1.msra.mxu0 0.0
    %3921 = vmatprep.mubr.f32.mxu0 0.0
    %3922 = vmatmul.mubr.f32.gmra.mrb[0].mxu0 %v3846
    %v3923 = vpop.f32.mrb[0].mxu0
    %v3924 = vadd.f32 0.0, %v3923
    %v3925 = vpop.f32.mrb[0].mxu0
    %v3926 = vadd.f32 0.0, %v3925
    %3927 = vmatprep.mubr.f32.mxu0 0.0
    %3928 = vmatmul.mubr.f32.gmra.mrb[0].mxu0 %v3849
    %v3929 = vpop.f32.mrb[0].mxu0
    %v3930 = vadd.f32 0.0, %v3929
    %v3931 = vpop.f32.mrb[0].mxu0
    %v3932 = vadd.f32 0.0, %v3931
    %3933 = vmatprep.mubr.f32.mxu0 0.0
    %3934 = vmatmul.mubr.f32.gmra.mrb[0].mxu0 %v3852
    %v3935 = vpop.f32.mrb[0].mxu0
    %v3936 = vadd.f32 0.0, %v3935
    %v3937 = vpop.f32.mrb[0].mxu0
    %v3938 = vadd.f32 0.0, %v3937
    %3939 = vmatprep.mubr.f32.mxu0 0.0
    %3940 = vmatmul.mubr.f32.gmra.mrb[0].mxu0 %v3855
    %v3941 = vpop.f32.mrb[0].mxu0
    %v3942 = vadd.f32 0.0, %v3941
    %v3943 = vpop.f32.mrb[0].mxu0
    %v3944 = vadd.f32 0.0, %v3943
    %3945 = vdwg.mxu0
    %3946 = vmatprep.subr.mxu0 %v1202
    %3947 = vmatpush1.msra.mxu0 %v1200
    %3948 = vmatprep.subr.mxu0 0.0
    %3949 = vmatpush1.msra.mxu0 0.0
    %3950 = vmatprep.subr.mxu0 0.0
    %3951 = vmatpush1.msra.mxu0 0.0
    %3952 = vmatprep.subr.mxu0 0.0
    %3953 = vmatpush1.msra.mxu0 0.0
    %3954 = vmatprep.subr.mxu0 0.0
    %3955 = vmatpush1.msra.mxu0 0.0
    %3956 = vmatprep.subr.mxu0 0.0
    %3957 = vmatpush1.msra.mxu0 0.0
    %3958 = vmatprep.subr.mxu0 0.0
    %3959 = vmatpush1.msra.mxu0 0.0
    %3960 = vmatprep.subr.mxu0 0.0
    %3961 = vmatpush1.msra.mxu0 0.0
    %3962 = vmatprep.subr.mxu0 0.0
    %3963 = vmatpush1.msra.mxu0 0.0
    %3964 = vmatprep.subr.mxu0 0.0
    %3965 = vmatpush1.msra.mxu0 0.0
    %3966 = vmatprep.subr.mxu0 0.0
    %3967 = vmatpush1.msra.mxu0 0.0
    %3968 = vmatprep.subr.mxu0 0.0
    %3969 = vmatpush1.msra.mxu0 0.0
    %3970 = vmatprep.subr.mxu0 0.0
    %3971 = vmatpush1.msra.mxu0 0.0
    %3972 = vmatprep.subr.mxu0 0.0
    %3973 = vmatpush1.msra.mxu0 0.0
    %3974 = vmatprep.subr.mxu0 0.0
    %3975 = vmatpush1.msra.mxu0 0.0
    %3976 = vmatprep.subr.mxu0 0.0
    %3977 = vmatpush1.msra.mxu0 0.0
    %3978 = vmatprep.subr.mxu0 0.0
    %3979 = vmatpush1.msra.mxu0 0.0
    %3980 = vmatprep.subr.mxu0 0.0
    %3981 = vmatpush1.msra.mxu0 0.0
    %3982 = vmatprep.subr.mxu0 0.0
    %3983 = vmatpush1.msra.mxu0 0.0
    %3984 = vmatprep.subr.mxu0 0.0
    %3985 = vmatpush1.msra.mxu0 0.0
    %3986 = vmatprep.subr.mxu0 0.0
    %3987 = vmatpush1.msra.mxu0 0.0
    %3988 = vmatprep.subr.mxu0 0.0
    %3989 = vmatpush1.msra.mxu0 0.0
    %3990 = vmatprep.subr.mxu0 0.0
    %3991 = vmatpush1.msra.mxu0 0.0
    %3992 = vmatprep.subr.mxu0 0.0
    %3993 = vmatpush1.msra.mxu0 0.0
    %3994 = vmatprep.subr.mxu0 0.0
    %3995 = vmatpush1.msra.mxu0 0.0
    %3996 = vmatprep.subr.mxu0 0.0
    %3997 = vmatpush1.msra.mxu0 0.0
    %3998 = vmatprep.subr.mxu0 0.0
    %3999 = vmatpush1.msra.mxu0 0.0
    %4000 = vmatprep.subr.mxu0 0.0
    %4001 = vmatpush1.msra.mxu0 0.0
    %4002 = vmatprep.subr.mxu0 0.0
    %4003 = vmatpush1.msra.mxu0 0.0
    %4004 = vmatprep.subr.mxu0 0.0
    %4005 = vmatpush1.msra.mxu0 0.0
    %4006 = vmatprep.subr.mxu0 0.0
    %4007 = vmatpush1.msra.mxu0 0.0
    %4008 = vmatprep.subr.mxu0 0.0
    %4009 = vmatpush1.msra.mxu0 0.0
    %4010 = vmatprep.mubr.f32.mxu0 0.0
    %4011 = vmatmul.mubr.f32.gmra.mrb[0].mxu0 %v3846
    %v4012 = vpop.f32.mrb[0].mxu0
    %v4013 = vadd.f32 0.0, %v4012
    %v4014 = vpop.f32.mrb[0].mxu0
    %v4015 = vadd.f32 0.0, %v4014
    %4016 = vmatprep.mubr.f32.mxu0 0.0
    %4017 = vmatmul.mubr.f32.gmra.mrb[0].mxu0 %v3849
    %v4018 = vpop.f32.mrb[0].mxu0
    %v4019 = vadd.f32 0.0, %v4018
    %v4020 = vpop.f32.mrb[0].mxu0
    %v4021 = vadd.f32 0.0, %v4020
    %4022 = vmatprep.mubr.f32.mxu0 0.0
    %4023 = vmatmul.mubr.f32.gmra.mrb[0].mxu0 %v3852
    %v4024 = vpop.f32.mrb[0].mxu0
    %v4025 = vadd.f32 0.0, %v4024
    %v4026 = vpop.f32.mrb[0].mxu0
    %v4027 = vadd.f32 0.0, %v4026
    %4028 = vmatprep.mubr.f32.mxu0 0.0
    %4029 = vmatmul.mubr.f32.gmra.mrb[0].mxu0 %v3855
    %v4030 = vpop.f32.mrb[0].mxu0
    %v4031 = vadd.f32 0.0, %v4030
    %v4032 = vpop.f32.mrb[0].mxu0
    %v4033 = vadd.f32 0.0, %v4032
    %4034 = vdwg.mxu0
    %4035 = vmatprep.subr.mxu0 %v1206
    %4036 = vmatpush1.msra.mxu0 %v1204
    %4037 = vmatprep.subr.mxu0 0.0
    %4038 = vmatpush1.msra.mxu0 0.0
    %4039 = vmatprep.subr.mxu0 0.0
    %4040 = vmatpush1.msra.mxu0 0.0
    %4041 = vmatprep.subr.mxu0 0.0
    %4042 = vmatpush1.msra.mxu0 0.0
    %4043 = vmatprep.subr.mxu0 0.0
    %4044 = vmatpush1.msra.mxu0 0.0
    %4045 = vmatprep.subr.mxu0 0.0
    %4046 = vmatpush1.msra.mxu0 0.0
    %4047 = vmatprep.subr.mxu0 0.0
    %4048 = vmatpush1.msra.mxu0 0.0
    %4049 = vmatprep.subr.mxu0 0.0
    %4050 = vmatpush1.msra.mxu0 0.0
    %4051 = vmatprep.subr.mxu0 0.0
    %4052 = vmatpush1.msra.mxu0 0.0
    %4053 = vmatprep.subr.mxu0 0.0
    %4054 = vmatpush1.msra.mxu0 0.0
    %4055 = vmatprep.subr.mxu0 0.0
    %4056 = vmatpush1.msra.mxu0 0.0
    %4057 = vmatprep.subr.mxu0 0.0
    %4058 = vmatpush1.msra.mxu0 0.0
    %4059 = vmatprep.subr.mxu0 0.0
    %4060 = vmatpush1.msra.mxu0 0.0
    %4061 = vmatprep.subr.mxu0 0.0
    %4062 = vmatpush1.msra.mxu0 0.0
    %4063 = vmatprep.subr.mxu0 0.0
    %4064 = vmatpush1.msra.mxu0 0.0
    %4065 = vmatprep.subr.mxu0 0.0
    %4066 = vmatpush1.msra.mxu0 0.0
    %4067 = vmatprep.subr.mxu0 0.0
    %4068 = vmatpush1.msra.mxu0 0.0
    %4069 = vmatprep.subr.mxu0 0.0
    %4070 = vmatpush1.msra.mxu0 0.0
    %4071 = vmatprep.subr.mxu0 0.0
    %4072 = vmatpush1.msra.mxu0 0.0
    %4073 = vmatprep.subr.mxu0 0.0
    %4074 = vmatpush1.msra.mxu0 0.0
    %4075 = vmatprep.subr.mxu0 0.0
    %4076 = vmatpush1.msra.mxu0 0.0
    %4077 = vmatprep.subr.mxu0 0.0
    %4078 = vmatpush1.msra.mxu0 0.0
    %4079 = vmatprep.subr.mxu0 0.0
    %4080 = vmatpush1.msra.mxu0 0.0
    %4081 = vmatprep.subr.mxu0 0.0
    %4082 = vmatpush1.msra.mxu0 0.0
    %4083 = vmatprep.subr.mxu0 0.0
    %4084 = vmatpush1.msra.mxu0 0.0
    %4085 = vmatprep.subr.mxu0 0.0
    %4086 = vmatpush1.msra.mxu0 0.0
    %4087 = vmatprep.subr.mxu0 0.0
    %4088 = vmatpush1.msra.mxu0 0.0
    %4089 = vmatprep.subr.mxu0 0.0
    %4090 = vmatpush1.msra.mxu0 0.0
    %4091 = vmatprep.subr.mxu0 0.0
    %4092 = vmatpush1.msra.mxu0 0.0
    %4093 = vmatprep.subr.mxu0 0.0
    %4094 = vmatpush1.msra.mxu0 0.0
    %4095 = vmatprep.subr.mxu0 0.0
    %4096 = vmatpush1.msra.mxu0 0.0
    %4097 = vmatprep.subr.mxu0 0.0
    %4098 = vmatpush1.msra.mxu0 0.0
    %4099 = vmatprep.mubr.f32.mxu0 0.0
    %4100 = vmatmul.mubr.f32.gmra.mrb[0].mxu0 %v3846
    %v4101 = vpop.f32.mrb[0].mxu0
    %v4102 = vadd.f32 0.0, %v4101
    %v4103 = vpop.f32.mrb[0].mxu0
    %v4104 = vadd.f32 0.0, %v4103
    %4105 = vmatprep.mubr.f32.mxu0 0.0
    %4106 = vmatmul.mubr.f32.gmra.mrb[0].mxu0 %v3849
    %v4107 = vpop.f32.mrb[0].mxu0
    %v4108 = vadd.f32 0.0, %v4107
    %v4109 = vpop.f32.mrb[0].mxu0
    %v4110 = vadd.f32 0.0, %v4109
    %4111 = vmatprep.mubr.f32.mxu0 0.0
    %4112 = vmatmul.mubr.f32.gmra.mrb[0].mxu0 %v3852
    %v4113 = vpop.f32.mrb[0].mxu0
    %v4114 = vadd.f32 0.0, %v4113
    %v4115 = vpop.f32.mrb[0].mxu0
    %v4116 = vadd.f32 0.0, %v4115
    %4117 = vmatprep.mubr.f32.mxu0 0.0
    %4118 = vmatmul.mubr.f32.gmra.mrb[0].mxu0 %v3855
    %v4119 = vpop.f32.mrb[0].mxu0
    %v4120 = vadd.f32 0.0, %v4119
    %v4121 = vpop.f32.mrb[0].mxu0
    %v4122 = vadd.f32 0.0, %v4121
    %4123 = vdwg.mxu0
    %4124 = vmatprep.subr.mxu0 %v1210
    %4125 = vmatpush1.msra.mxu0 %v1208
    %4126 = vmatprep.subr.mxu0 0.0
    %4127 = vmatpush1.msra.mxu0 0.0
    %4128 = vmatprep.subr.mxu0 0.0
    %4129 = vmatpush1.msra.mxu0 0.0
    %4130 = vmatprep.subr.mxu0 0.0
    %4131 = vmatpush1.msra.mxu0 0.0
    %4132 = vmatprep.subr.mxu0 0.0
    %4133 = vmatpush1.msra.mxu0 0.0
    %4134 = vmatprep.subr.mxu0 0.0
    %4135 = vmatpush1.msra.mxu0 0.0
    %4136 = vmatprep.subr.mxu0 0.0
    %4137 = vmatpush1.msra.mxu0 0.0
    %4138 = vmatprep.subr.mxu0 0.0
    %4139 = vmatpush1.msra.mxu0 0.0
    %4140 = vmatprep.subr.mxu0 0.0
    %4141 = vmatpush1.msra.mxu0 0.0
    %4142 = vmatprep.subr.mxu0 0.0
    %4143 = vmatpush1.msra.mxu0 0.0
    %4144 = vmatprep.subr.mxu0 0.0
    %4145 = vmatpush1.msra.mxu0 0.0
    %4146 = vmatprep.subr.mxu0 0.0
    %4147 = vmatpush1.msra.mxu0 0.0
    %4148 = vmatprep.subr.mxu0 0.0
    %4149 = vmatpush1.msra.mxu0 0.0
    %4150 = vmatprep.subr.mxu0 0.0
    %4151 = vmatpush1.msra.mxu0 0.0
    %4152 = vmatprep.subr.mxu0 0.0
    %4153 = vmatpush1.msra.mxu0 0.0
    %4154 = vmatprep.subr.mxu0 0.0
    %4155 = vmatpush1.msra.mxu0 0.0
    %4156 = vmatprep.subr.mxu0 0.0
    %4157 = vmatpush1.msra.mxu0 0.0
    %4158 = vmatprep.subr.mxu0 0.0
    %4159 = vmatpush1.msra.mxu0 0.0
    %4160 = vmatprep.subr.mxu0 0.0
    %4161 = vmatpush1.msra.mxu0 0.0
    %4162 = vmatprep.subr.mxu0 0.0
    %4163 = vmatpush1.msra.mxu0 0.0
    %4164 = vmatprep.subr.mxu0 0.0
    %4165 = vmatpush1.msra.mxu0 0.0
    %4166 = vmatprep.subr.mxu0 0.0
    %4167 = vmatpush1.msra.mxu0 0.0
    %4168 = vmatprep.subr.mxu0 0.0
    %4169 = vmatpush1.msra.mxu0 0.0
    %4170 = vmatprep.subr.mxu0 0.0
    %4171 = vmatpush1.msra.mxu0 0.0
    %4172 = vmatprep.subr.mxu0 0.0
    %4173 = vmatpush1.msra.mxu0 0.0
    %4174 = vmatprep.subr.mxu0 0.0
    %4175 = vmatpush1.msra.mxu0 0.0
    %4176 = vmatprep.subr.mxu0 0.0
    %4177 = vmatpush1.msra.mxu0 0.0
    %4178 = vmatprep.subr.mxu0 0.0
    %4179 = vmatpush1.msra.mxu0 0.0
    %4180 = vmatprep.subr.mxu0 0.0
    %4181 = vmatpush1.msra.mxu0 0.0
    %4182 = vmatprep.subr.mxu0 0.0
    %4183 = vmatpush1.msra.mxu0 0.0
    %4184 = vmatprep.subr.mxu0 0.0
    %4185 = vmatpush1.msra.mxu0 0.0
    %4186 = vmatprep.subr.mxu0 0.0
    %4187 = vmatpush1.msra.mxu0 0.0
    %4188 = vmatprep.mubr.f32.mxu0 0.0
    %4189 = vmatmul.mubr.f32.gmra.mrb[0].mxu0 %v3846
    %v4190 = vpop.f32.mrb[0].mxu0
    %v4191 = vadd.f32 0.0, %v4190
    %v4192 = vpop.f32.mrb[0].mxu0
    %v4193 = vadd.f32 0.0, %v4192
    %4194 = vmatprep.mubr.f32.mxu0 0.0
    %4195 = vmatmul.mubr.f32.gmra.mrb[0].mxu0 %v3849
    %v4196 = vpop.f32.mrb[0].mxu0
    %v4197 = vadd.f32 0.0, %v4196
    %v4198 = vpop.f32.mrb[0].mxu0
    %v4199 = vadd.f32 0.0, %v4198
    %4200 = vmatprep.mubr.f32.mxu0 0.0
    %4201 = vmatmul.mubr.f32.gmra.mrb[0].mxu0 %v3852
    %v4202 = vpop.f32.mrb[0].mxu0
    %v4203 = vadd.f32 0.0, %v4202
    %v4204 = vpop.f32.mrb[0].mxu0
    %v4205 = vadd.f32 0.0, %v4204
    %4206 = vmatprep.mubr.f32.mxu0 0.0
    %4207 = vmatmul.mubr.f32.gmra.mrb[0].mxu0 %v3855
    %v4208 = vpop.f32.mrb[0].mxu0
    %v4209 = vadd.f32 0.0, %v4208
    %v4210 = vpop.f32.mrb[0].mxu0
    %v4211 = vadd.f32 0.0, %v4210
    %4212 = vdwg.mxu0
    %v4213 = vadd.f32 %v3552, %v3924
    %v4214 = vadd.f32 %v3554, %v3926
    %v4215 = vadd.f32 %v3641, %v4013
    %v4216 = vadd.f32 %v3643, %v4015
    %v4217 = vadd.f32 %v3730, %v4102
    %v4218 = vadd.f32 %v3732, %v4104
    %v4219 = vadd.f32 %v3819, %v4191
    %v4220 = vadd.f32 %v3821, %v4193
    %v4221 = vadd.f32 %v3558, %v3930
    %v4222 = vadd.f32 %v3560, %v3932
    %v4223 = vadd.f32 %v3647, %v4019
    %v4224 = vadd.f32 %v3649, %v4021
    %v4225 = vadd.f32 %v3736, %v4108
    %v4226 = vadd.f32 %v3738, %v4110
    %v4227 = vadd.f32 %v3825, %v4197
    %v4228 = vadd.f32 %v3827, %v4199
    %v4229 = vadd.f32 %v3564, %v3936
    %v4230 = vadd.f32 %v3566, %v3938
    %v4231 = vadd.f32 %v3653, %v4025
    %v4232 = vadd.f32 %v3655, %v4027
    %v4233 = vadd.f32 %v3742, %v4114
    %v4234 = vadd.f32 %v3744, %v4116
    %v4235 = vadd.f32 %v3831, %v4203
    %v4236 = vadd.f32 %v3833, %v4205
    %v4237 = vadd.f32 %v3570, %v3942
    %v4238 = vadd.f32 %v3572, %v3944
    %v4239 = vadd.f32 %v3659, %v4031
    %v4240 = vadd.f32 %v3661, %v4033
    %v4241 = vadd.f32 %v3748, %v4120
    %v4242 = vadd.f32 %v3750, %v4122
    %v4243 = vadd.f32 %v3837, %v4209
    %v4244 = vadd.f32 %v3839, %v4211
    %v4245 = vld [vmem:[%s12] sm:$0xff]
    %v4246 = vld [vmem:[%s12 + $0x8] sm:$0xff]
    %v4247 = vld [vmem:[%s12 + $0x10] sm:$0xff]
    %v4248 = vld [vmem:[%s12 + $0x18] sm:$0xff]
    %v4250 = vsel %vm1183, %v4245, 0
    %v4253 = vsel %vm1183, %v4246, 0
    %v4256 = vsel %vm1183, %v4247, 0
    %v4259 = vsel %vm1183, %v4248, 0
    %4261 = vmatprep.subr.mxu0 %v1986
    %4262 = vmatpush1.msra.mxu0 %v1984
    %4263 = vmatprep.subr.mxu0 0.0
    %4264 = vmatpush1.msra.mxu0 0.0
    %4265 = vmatprep.subr.mxu0 0.0
    %4266 = vmatpush1.msra.mxu0 0.0
    %4267 = vmatprep.subr.mxu0 0.0
    %4268 = vmatpush1.msra.mxu0 0.0
    %4269 = vmatprep.subr.mxu0 0.0
    %4270 = vmatpush1.msra.mxu0 0.0
    %4271 = vmatprep.subr.mxu0 0.0
    %4272 = vmatpush1.msra.mxu0 0.0
    %4273 = vmatprep.subr.mxu0 0.0
    %4274 = vmatpush1.msra.mxu0 0.0
    %4275 = vmatprep.subr.mxu0 0.0
    %4276 = vmatpush1.msra.mxu0 0.0
    %4277 = vmatprep.subr.mxu0 0.0
    %4278 = vmatpush1.msra.mxu0 0.0
    %4279 = vmatprep.subr.mxu0 0.0
    %4280 = vmatpush1.msra.mxu0 0.0
    %4281 = vmatprep.subr.mxu0 0.0
    %4282 = vmatpush1.msra.mxu0 0.0
    %4283 = vmatprep.subr.mxu0 0.0
    %4284 = vmatpush1.msra.mxu0 0.0
    %4285 = vmatprep.subr.mxu0 0.0
    %4286 = vmatpush1.msra.mxu0 0.0
    %4287 = vmatprep.subr.mxu0 0.0
    %4288 = vmatpush1.msra.mxu0 0.0
    %4289 = vmatprep.subr.mxu0 0.0
    %4290 = vmatpush1.msra.mxu0 0.0
    %4291 = vmatprep.subr.mxu0 0.0
    %4292 = vmatpush1.msra.mxu0 0.0
    %4293 = vmatprep.subr.mxu0 0.0
    %4294 = vmatpush1.msra.mxu0 0.0
    %4295 = vmatprep.subr.mxu0 0.0
    %4296 = vmatpush1.msra.mxu0 0.0
    %4297 = vmatprep.subr.mxu0 0.0
    %4298 = vmatpush1.msra.mxu0 0.0
    %4299 = vmatprep.subr.mxu0 0.0
    %4300 = vmatpush1.msra.mxu0 0.0
    %4301 = vmatprep.subr.mxu0 0.0
    %4302 = vmatpush1.msra.mxu0 0.0
    %4303 = vmatprep.subr.mxu0 0.0
    %4304 = vmatpush1.msra.mxu0 0.0
    %4305 = vmatprep.subr.mxu0 0.0
    %4306 = vmatpush1.msra.mxu0 0.0
    %4307 = vmatprep.subr.mxu0 0.0
    %4308 = vmatpush1.msra.mxu0 0.0
    %4309 = vmatprep.subr.mxu0 0.0
    %4310 = vmatpush1.msra.mxu0 0.0
    %4311 = vmatprep.subr.mxu0 0.0
    %4312 = vmatpush1.msra.mxu0 0.0
    %4313 = vmatprep.subr.mxu0 0.0
    %4314 = vmatpush1.msra.mxu0 0.0
    %4315 = vmatprep.subr.mxu0 0.0
    %4316 = vmatpush1.msra.mxu0 0.0
    %4317 = vmatprep.subr.mxu0 0.0
    %4318 = vmatpush1.msra.mxu0 0.0
    %4319 = vmatprep.subr.mxu0 0.0
    %4320 = vmatpush1.msra.mxu0 0.0
    %4321 = vmatprep.subr.mxu0 0.0
    %4322 = vmatpush1.msra.mxu0 0.0
    %4323 = vmatprep.subr.mxu0 0.0
    %4324 = vmatpush1.msra.mxu0 0.0
    %4325 = vmatprep.mubr.f32.mxu0 0.0
    %4326 = vmatmul.mubr.f32.gmra.mrb[0].mxu0 %v4250
    %v4327 = vpop.f32.mrb[0].mxu0
    %v4328 = vadd.f32 0.0, %v4327
    %v4329 = vpop.f32.mrb[0].mxu0
    %v4330 = vadd.f32 0.0, %v4329
    %4331 = vmatprep.mubr.f32.mxu0 0.0
    %4332 = vmatmul.mubr.f32.gmra.mrb[0].mxu0 %v4253
    %v4333 = vpop.f32.mrb[0].mxu0
    %v4334 = vadd.f32 0.0, %v4333
    %v4335 = vpop.f32.mrb[0].mxu0
    %v4336 = vadd.f32 0.0, %v4335
    %4337 = vmatprep.mubr.f32.mxu0 0.0
    %4338 = vmatmul.mubr.f32.gmra.mrb[0].mxu0 %v4256
    %v4339 = vpop.f32.mrb[0].mxu0
    %v4340 = vadd.f32 0.0, %v4339
    %v4341 = vpop.f32.mrb[0].mxu0
    %v4342 = vadd.f32 0.0, %v4341
    %4343 = vmatprep.mubr.f32.mxu0 0.0
    %4344 = vmatmul.mubr.f32.gmra.mrb[0].mxu0 %v4259
    %v4345 = vpop.f32.mrb[0].mxu0
    %v4346 = vadd.f32 0.0, %v4345
    %v4347 = vpop.f32.mrb[0].mxu0
    %v4348 = vadd.f32 0.0, %v4347
    %4349 = vdwg.mxu0
    %4350 = vmatprep.subr.mxu0 %v1990
    %4351 = vmatpush1.msra.mxu0 %v1988
    %4352 = vmatprep.subr.mxu0 0.0
    %4353 = vmatpush1.msra.mxu0 0.0
    %4354 = vmatprep.subr.mxu0 0.0
    %4355 = vmatpush1.msra.mxu0 0.0
    %4356 = vmatprep.subr.mxu0 0.0
    %4357 = vmatpush1.msra.mxu0 0.0
    %4358 = vmatprep.subr.mxu0 0.0
    %4359 = vmatpush1.msra.mxu0 0.0
    %4360 = vmatprep.subr.mxu0 0.0
    %4361 = vmatpush1.msra.mxu0 0.0
    %4362 = vmatprep.subr.mxu0 0.0
    %4363 = vmatpush1.msra.mxu0 0.0
    %4364 = vmatprep.subr.mxu0 0.0
    %4365 = vmatpush1.msra.mxu0 0.0
    %4366 = vmatprep.subr.mxu0 0.0
    %4367 = vmatpush1.msra.mxu0 0.0
    %4368 = vmatprep.subr.mxu0 0.0
    %4369 = vmatpush1.msra.mxu0 0.0
    %4370 = vmatprep.subr.mxu0 0.0
    %4371 = vmatpush1.msra.mxu0 0.0
    %4372 = vmatprep.subr.mxu0 0.0
    %4373 = vmatpush1.msra.mxu0 0.0
    %4374 = vmatprep.subr.mxu0 0.0
    %4375 = vmatpush1.msra.mxu0 0.0
    %4376 = vmatprep.subr.mxu0 0.0
    %4377 = vmatpush1.msra.mxu0 0.0
    %4378 = vmatprep.subr.mxu0 0.0
    %4379 = vmatpush1.msra.mxu0 0.0
    %4380 = vmatprep.subr.mxu0 0.0
    %4381 = vmatpush1.msra.mxu0 0.0
    %4382 = vmatprep.subr.mxu0 0.0
    %4383 = vmatpush1.msra.mxu0 0.0
    %4384 = vmatprep.subr.mxu0 0.0
    %4385 = vmatpush1.msra.mxu0 0.0
    %4386 = vmatprep.subr.mxu0 0.0
    %4387 = vmatpush1.msra.mxu0 0.0
    %4388 = vmatprep.subr.mxu0 0.0
    %4389 = vmatpush1.msra.mxu0 0.0
    %4390 = vmatprep.subr.mxu0 0.0
    %4391 = vmatpush1.msra.mxu0 0.0
    %4392 = vmatprep.subr.mxu0 0.0
    %4393 = vmatpush1.msra.mxu0 0.0
    %4394 = vmatprep.subr.mxu0 0.0
    %4395 = vmatpush1.msra.mxu0 0.0
    %4396 = vmatprep.subr.mxu0 0.0
    %4397 = vmatpush1.msra.mxu0 0.0
    %4398 = vmatprep.subr.mxu0 0.0
    %4399 = vmatpush1.msra.mxu0 0.0
    %4400 = vmatprep.subr.mxu0 0.0
    %4401 = vmatpush1.msra.mxu0 0.0
    %4402 = vmatprep.subr.mxu0 0.0
    %4403 = vmatpush1.msra.mxu0 0.0
    %4404 = vmatprep.subr.mxu0 0.0
    %4405 = vmatpush1.msra.mxu0 0.0
    %4406 = vmatprep.subr.mxu0 0.0
    %4407 = vmatpush1.msra.mxu0 0.0
    %4408 = vmatprep.subr.mxu0 0.0
    %4409 = vmatpush1.msra.mxu0 0.0
    %4410 = vmatprep.subr.mxu0 0.0
    %4411 = vmatpush1.msra.mxu0 0.0
    %4412 = vmatprep.subr.mxu0 0.0
    %4413 = vmatpush1.msra.mxu0 0.0
    %4414 = vmatprep.mubr.f32.mxu0 0.0
    %4415 = vmatmul.mubr.f32.gmra.mrb[0].mxu0 %v4250
    %v4416 = vpop.f32.mrb[0].mxu0
    %v4417 = vadd.f32 0.0, %v4416
    %v4418 = vpop.f32.mrb[0].mxu0
    %v4419 = vadd.f32 0.0, %v4418
    %4420 = vmatprep.mubr.f32.mxu0 0.0
    %4421 = vmatmul.mubr.f32.gmra.mrb[0].mxu0 %v4253
    %v4422 = vpop.f32.mrb[0].mxu0
    %v4423 = vadd.f32 0.0, %v4422
    %v4424 = vpop.f32.mrb[0].mxu0
    %v4425 = vadd.f32 0.0, %v4424
    %4426 = vmatprep.mubr.f32.mxu0 0.0
    %4427 = vmatmul.mubr.f32.gmra.mrb[0].mxu0 %v4256
    %v4428 = vpop.f32.mrb[0].mxu0
    %v4429 = vadd.f32 0.0, %v4428
    %v4430 = vpop.f32.mrb[0].mxu0
    %v4431 = vadd.f32 0.0, %v4430
    %4432 = vmatprep.mubr.f32.mxu0 0.0
    %4433 = vmatmul.mubr.f32.gmra.mrb[0].mxu0 %v4259
    %v4434 = vpop.f32.mrb[0].mxu0
    %v4435 = vadd.f32 0.0, %v4434
    %v4436 = vpop.f32.mrb[0].mxu0
    %v4437 = vadd.f32 0.0, %v4436
    %4438 = vdwg.mxu0
    %4439 = vmatprep.subr.mxu0 %v1994
    %4440 = vmatpush1.msra.mxu0 %v1992
    %4441 = vmatprep.subr.mxu0 0.0
    %4442 = vmatpush1.msra.mxu0 0.0
    %4443 = vmatprep.subr.mxu0 0.0
    %4444 = vmatpush1.msra.mxu0 0.0
    %4445 = vmatprep.subr.mxu0 0.0
    %4446 = vmatpush1.msra.mxu0 0.0
    %4447 = vmatprep.subr.mxu0 0.0
    %4448 = vmatpush1.msra.mxu0 0.0
    %4449 = vmatprep.subr.mxu0 0.0
    %4450 = vmatpush1.msra.mxu0 0.0
    %4451 = vmatprep.subr.mxu0 0.0
    %4452 = vmatpush1.msra.mxu0 0.0
    %4453 = vmatprep.subr.mxu0 0.0
    %4454 = vmatpush1.msra.mxu0 0.0
    %4455 = vmatprep.subr.mxu0 0.0
    %4456 = vmatpush1.msra.mxu0 0.0
    %4457 = vmatprep.subr.mxu0 0.0
    %4458 = vmatpush1.msra.mxu0 0.0
    %4459 = vmatprep.subr.mxu0 0.0
    %4460 = vmatpush1.msra.mxu0 0.0
    %4461 = vmatprep.subr.mxu0 0.0
    %4462 = vmatpush1.msra.mxu0 0.0
    %4463 = vmatprep.subr.mxu0 0.0
    %4464 = vmatpush1.msra.mxu0 0.0
    %4465 = vmatprep.subr.mxu0 0.0
    %4466 = vmatpush1.msra.mxu0 0.0
    %4467 = vmatprep.subr.mxu0 0.0
    %4468 = vmatpush1.msra.mxu0 0.0
    %4469 = vmatprep.subr.mxu0 0.0
    %4470 = vmatpush1.msra.mxu0 0.0
    %4471 = vmatprep.subr.mxu0 0.0
    %4472 = vmatpush1.msra.mxu0 0.0
    %4473 = vmatprep.subr.mxu0 0.0
    %4474 = vmatpush1.msra.mxu0 0.0
    %4475 = vmatprep.subr.mxu0 0.0
    %4476 = vmatpush1.msra.mxu0 0.0
    %4477 = vmatprep.subr.mxu0 0.0
    %4478 = vmatpush1.msra.mxu0 0.0
    %4479 = vmatprep.subr.mxu0 0.0
    %4480 = vmatpush1.msra.mxu0 0.0
    %4481 = vmatprep.subr.mxu0 0.0
    %4482 = vmatpush1.msra.mxu0 0.0
    %4483 = vmatprep.subr.mxu0 0.0
    %4484 = vmatpush1.msra.mxu0 0.0
    %4485 = vmatprep.subr.mxu0 0.0
    %4486 = vmatpush1.msra.mxu0 0.0
    %4487 = vmatprep.subr.mxu0 0.0
    %4488 = vmatpush1.msra.mxu0 0.0
    %4489 = vmatprep.subr.mxu0 0.0
    %4490 = vmatpush1.msra.mxu0 0.0
    %4491 = vmatprep.subr.mxu0 0.0
    %4492 = vmatpush1.msra.mxu0 0.0
    %4493 = vmatprep.subr.mxu0 0.0
    %4494 = vmatpush1.msra.mxu0 0.0
    %4495 = vmatprep.subr.mxu0 0.0
    %4496 = vmatpush1.msra.mxu0 0.0
    %4497 = vmatprep.subr.mxu0 0.0
    %4498 = vmatpush1.msra.mxu0 0.0
    %4499 = vmatprep.subr.mxu0 0.0
    %4500 = vmatpush1.msra.mxu0 0.0
    %4501 = vmatprep.subr.mxu0 0.0
    %4502 = vmatpush1.msra.mxu0 0.0
    %4503 = vmatprep.mubr.f32.mxu0 0.0
    %4504 = vmatmul.mubr.f32.gmra.mrb[0].mxu0 %v4250
    %v4505 = vpop.f32.mrb[0].mxu0
    %v4506 = vadd.f32 0.0, %v4505
    %v4507 = vpop.f32.mrb[0].mxu0
    %v4508 = vadd.f32 0.0, %v4507
    %4509 = vmatprep.mubr.f32.mxu0 0.0
    %4510 = vmatmul.mubr.f32.gmra.mrb[0].mxu0 %v4253
    %v4511 = vpop.f32.mrb[0].mxu0
    %v4512 = vadd.f32 0.0, %v4511
    %v4513 = vpop.f32.mrb[0].mxu0
    %v4514 = vadd.f32 0.0, %v4513
    %4515 = vmatprep.mubr.f32.mxu0 0.0
    %4516 = vmatmul.mubr.f32.gmra.mrb[0].mxu0 %v4256
    %v4517 = vpop.f32.mrb[0].mxu0
    %v4518 = vadd.f32 0.0, %v4517
    %v4519 = vpop.f32.mrb[0].mxu0
    %v4520 = vadd.f32 0.0, %v4519
    %4521 = vmatprep.mubr.f32.mxu0 0.0
    %4522 = vmatmul.mubr.f32.gmra.mrb[0].mxu0 %v4259
    %v4523 = vpop.f32.mrb[0].mxu0
    %v4524 = vadd.f32 0.0, %v4523
    %v4525 = vpop.f32.mrb[0].mxu0
    %v4526 = vadd.f32 0.0, %v4525
    %4527 = vdwg.mxu0
    %4528 = vmatprep.subr.mxu0 %v1998
    %4529 = vmatpush1.msra.mxu0 %v1996
    %4530 = vmatprep.subr.mxu0 0.0
    %4531 = vmatpush1.msra.mxu0 0.0
    %4532 = vmatprep.subr.mxu0 0.0
    %4533 = vmatpush1.msra.mxu0 0.0
    %4534 = vmatprep.subr.mxu0 0.0
    %4535 = vmatpush1.msra.mxu0 0.0
    %4536 = vmatprep.subr.mxu0 0.0
    %4537 = vmatpush1.msra.mxu0 0.0
    %4538 = vmatprep.subr.mxu0 0.0
    %4539 = vmatpush1.msra.mxu0 0.0
    %4540 = vmatprep.subr.mxu0 0.0
    %4541 = vmatpush1.msra.mxu0 0.0
    %4542 = vmatprep.subr.mxu0 0.0
    %4543 = vmatpush1.msra.mxu0 0.0
    %4544 = vmatprep.subr.mxu0 0.0
    %4545 = vmatpush1.msra.mxu0 0.0
    %4546 = vmatprep.subr.mxu0 0.0
    %4547 = vmatpush1.msra.mxu0 0.0
    %4548 = vmatprep.subr.mxu0 0.0
    %4549 = vmatpush1.msra.mxu0 0.0
    %4550 = vmatprep.subr.mxu0 0.0
    %4551 = vmatpush1.msra.mxu0 0.0
    %4552 = vmatprep.subr.mxu0 0.0
    %4553 = vmatpush1.msra.mxu0 0.0
    %4554 = vmatprep.subr.mxu0 0.0
    %4555 = vmatpush1.msra.mxu0 0.0
    %4556 = vmatprep.subr.mxu0 0.0
    %4557 = vmatpush1.msra.mxu0 0.0
    %4558 = vmatprep.subr.mxu0 0.0
    %4559 = vmatpush1.msra.mxu0 0.0
    %4560 = vmatprep.subr.mxu0 0.0
    %4561 = vmatpush1.msra.mxu0 0.0
    %4562 = vmatprep.subr.mxu0 0.0
    %4563 = vmatpush1.msra.mxu0 0.0
    %4564 = vmatprep.subr.mxu0 0.0
    %4565 = vmatpush1.msra.mxu0 0.0
    %4566 = vmatprep.subr.mxu0 0.0
    %4567 = vmatpush1.msra.mxu0 0.0
    %4568 = vmatprep.subr.mxu0 0.0
    %4569 = vmatpush1.msra.mxu0 0.0
    %4570 = vmatprep.subr.mxu0 0.0
    %4571 = vmatpush1.msra.mxu0 0.0
    %4572 = vmatprep.subr.mxu0 0.0
    %4573 = vmatpush1.msra.mxu0 0.0
    %4574 = vmatprep.subr.mxu0 0.0
    %4575 = vmatpush1.msra.mxu0 0.0
    %4576 = vmatprep.subr.mxu0 0.0
    %4577 = vmatpush1.msra.mxu0 0.0
    %4578 = vmatprep.subr.mxu0 0.0
    %4579 = vmatpush1.msra.mxu0 0.0
    %4580 = vmatprep.subr.mxu0 0.0
    %4581 = vmatpush1.msra.mxu0 0.0
    %4582 = vmatprep.subr.mxu0 0.0
    %4583 = vmatpush1.msra.mxu0 0.0
    %4584 = vmatprep.subr.mxu0 0.0
    %4585 = vmatpush1.msra.mxu0 0.0
    %4586 = vmatprep.subr.mxu0 0.0
    %4587 = vmatpush1.msra.mxu0 0.0
    %4588 = vmatprep.subr.mxu0 0.0
    %4589 = vmatpush1.msra.mxu0 0.0
    %4590 = vmatprep.subr.mxu0 0.0
    %4591 = vmatpush1.msra.mxu0 0.0
    %4592 = vmatprep.mubr.f32.mxu0 0.0
    %4593 = vmatmul.mubr.f32.gmra.mrb[0].mxu0 %v4250
    %v4594 = vpop.f32.mrb[0].mxu0
    %v4595 = vadd.f32 0.0, %v4594
    %v4596 = vpop.f32.mrb[0].mxu0
    %v4597 = vadd.f32 0.0, %v4596
    %4598 = vmatprep.mubr.f32.mxu0 0.0
    %4599 = vmatmul.mubr.f32.gmra.mrb[0].mxu0 %v4253
    %v4600 = vpop.f32.mrb[0].mxu0
    %v4601 = vadd.f32 0.0, %v4600
    %v4602 = vpop.f32.mrb[0].mxu0
    %v4603 = vadd.f32 0.0, %v4602
    %4604 = vmatprep.mubr.f32.mxu0 0.0
    %4605 = vmatmul.mubr.f32.gmra.mrb[0].mxu0 %v4256
    %v4606 = vpop.f32.mrb[0].mxu0
    %v4607 = vadd.f32 0.0, %v4606
    %v4608 = vpop.f32.mrb[0].mxu0
    %v4609 = vadd.f32 0.0, %v4608
    %4610 = vmatprep.mubr.f32.mxu0 0.0
    %4611 = vmatmul.mubr.f32.gmra.mrb[0].mxu0 %v4259
    %v4612 = vpop.f32.mrb[0].mxu0
    %v4613 = vadd.f32 0.0, %v4612
    %v4614 = vpop.f32.mrb[0].mxu0
    %v4615 = vadd.f32 0.0, %v4614
    %4616 = vdwg.mxu0
    %v4617 = vadd.f32 %v4213, %v4328
    %v4618 = vadd.f32 %v4214, %v4330
    %v4619 = vadd.f32 %v4215, %v4417
    %v4620 = vadd.f32 %v4216, %v4419
    %v4621 = vadd.f32 %v4217, %v4506
    %v4622 = vadd.f32 %v4218, %v4508
    %v4623 = vadd.f32 %v4219, %v4595
    %v4624 = vadd.f32 %v4220, %v4597
    %v4625 = vadd.f32 %v4221, %v4334
    %v4626 = vadd.f32 %v4222, %v4336
    %v4627 = vadd.f32 %v4223, %v4423
    %v4628 = vadd.f32 %v4224, %v4425
    %v4629 = vadd.f32 %v4225, %v4512
    %v4630 = vadd.f32 %v4226, %v4514
    %v4631 = vadd.f32 %v4227, %v4601
    %v4632 = vadd.f32 %v4228, %v4603
    %v4633 = vadd.f32 %v4229, %v4340
    %v4634 = vadd.f32 %v4230, %v4342
    %v4635 = vadd.f32 %v4231, %v4429
    %v4636 = vadd.f32 %v4232, %v4431
    %v4637 = vadd.f32 %v4233, %v4518
    %v4638 = vadd.f32 %v4234, %v4520
    %v4639 = vadd.f32 %v4235, %v4607
    %v4640 = vadd.f32 %v4236, %v4609
    %v4641 = vadd.f32 %v4237, %v4346
    %v4642 = vadd.f32 %v4238, %v4348
    %v4643 = vadd.f32 %v4239, %v4435
    %v4644 = vadd.f32 %v4240, %v4437
    %v4645 = vadd.f32 %v4241, %v4524
    %v4646 = vadd.f32 %v4242, %v4526
    %v4647 = vadd.f32 %v4243, %v4613
    %v4648 = vadd.f32 %v4244, %v4615
    %v4649 = vld [vmem:[%s13] sm:$0xff]
    %v4650 = vld [vmem:[%s13 + $0x8] sm:$0xff]
    %v4651 = vld [vmem:[%s13 + $0x10] sm:$0xff]
    %v4652 = vld [vmem:[%s13 + $0x18] sm:$0xff]
    %4654 = vset.pattern.permute.xlu0 0
    %4655 = vperm.xlu0 %4654, %v4649
    %v4656 = vpop.permute.xlu0 %4655
    %4659 = vset.pattern.permute.xlu0 0
    %4660 = vperm.xlu0 %4659, %v4650
    %v4661 = vpop.permute.xlu0 %4660
    %4664 = vset.pattern.permute.xlu0 0
    %4665 = vperm.xlu0 %4664, %v4651
    %v4666 = vpop.permute.xlu0 %4665
    %4669 = vset.pattern.permute.xlu0 0
    %4670 = vperm.xlu0 %4669, %v4652
    %v4671 = vpop.permute.xlu0 %4670
    %v4673 = vadd.f32 %v4617, %v4656
    %v4674 = vadd.f32 %v4618, %v4656
    %v4675 = vadd.f32 %v4619, %v4656
    %v4676 = vadd.f32 %v4620, %v4656
    %v4677 = vadd.f32 %v4621, %v4656
    %v4678 = vadd.f32 %v4622, %v4656
    %v4679 = vadd.f32 %v4623, %v4656
    %v4680 = vadd.f32 %v4624, %v4656
    %v4681 = vadd.f32 %v4625, %v4661
    %v4682 = vadd.f32 %v4626, %v4661
    %v4683 = vadd.f32 %v4627, %v4661
    %v4684 = vadd.f32 %v4628, %v4661
    %v4685 = vadd.f32 %v4629, %v4661
    %v4686 = vadd.f32 %v4630, %v4661
    %v4687 = vadd.f32 %v4631, %v4661
    %v4688 = vadd.f32 %v4632, %v4661
    %v4689 = vadd.f32 %v4633, %v4666
    %v4690 = vadd.f32 %v4634, %v4666
    %v4691 = vadd.f32 %v4635, %v4666
    %v4692 = vadd.f32 %v4636, %v4666
    %v4693 = vadd.f32 %v4637, %v4666
    %v4694 = vadd.f32 %v4638, %v4666
    %v4695 = vadd.f32 %v4639, %v4666
    %v4696 = vadd.f32 %v4640, %v4666
    %v4697 = vadd.f32 %v4641, %v4671
    %v4698 = vadd.f32 %v4642, %v4671
    %v4699 = vadd.f32 %v4643, %v4671
    %v4700 = vadd.f32 %v4644, %v4671
    %v4701 = vadd.f32 %v4645, %v4671
    %v4702 = vadd.f32 %v4646, %v4671
    %v4703 = vadd.f32 %v4647, %v4671
    %v4704 = vadd.f32 %v4648, %v4671
    %v4705 = vmul.f32 %v4673, 0.5
    %v4706 = vmul.f32 %v4674, 0.5
    %v4707 = vmul.f32 %v4675, 0.5
    %v4708 = vmul.f32 %v4676, 0.5
    %v4709 = vmul.f32 %v4677, 0.5
    %v4710 = vmul.f32 %v4678, 0.5
    %v4711 = vmul.f32 %v4679, 0.5
    %v4712 = vmul.f32 %v4680, 0.5
    %v4713 = vmul.f32 %v4681, 0.5
    %v4714 = vmul.f32 %v4682, 0.5
    %v4715 = vmul.f32 %v4683, 0.5
    %v4716 = vmul.f32 %v4684, 0.5
    %v4717 = vmul.f32 %v4685, 0.5
    %v4718 = vmul.f32 %v4686, 0.5
    %v4719 = vmul.f32 %v4687, 0.5
    %v4720 = vmul.f32 %v4688, 0.5
    %v4721 = vmul.f32 %v4689, 0.5
    %v4722 = vmul.f32 %v4690, 0.5
    %v4723 = vmul.f32 %v4691, 0.5
    %v4724 = vmul.f32 %v4692, 0.5
    %v4725 = vmul.f32 %v4693, 0.5
    %v4726 = vmul.f32 %v4694, 0.5
    %v4727 = vmul.f32 %v4695, 0.5
    %v4728 = vmul.f32 %v4696, 0.5
    %v4729 = vmul.f32 %v4697, 0.5
    %v4730 = vmul.f32 %v4698, 0.5
    %v4731 = vmul.f32 %v4699, 0.5
    %v4732 = vmul.f32 %v4700, 0.5
    %v4733 = vmul.f32 %v4701, 0.5
    %v4734 = vmul.f32 %v4702, 0.5
    %v4735 = vmul.f32 %v4703, 0.5
    %v4736 = vmul.f32 %v4704, 0.5
    %v4737 = vtanh.pop %v4705
    %v4738 = vtanh.pop %v4706
    %v4739 = vtanh.pop %v4707
    %v4740 = vtanh.pop %v4708
    %v4741 = vtanh.pop %v4709
    %v4742 = vtanh.pop %v4710
    %v4743 = vtanh.pop %v4711
    %v4744 = vtanh.pop %v4712
    %v4745 = vtanh.pop %v4713
    %v4746 = vtanh.pop %v4714
    %v4747 = vtanh.pop %v4715
    %v4748 = vtanh.pop %v4716
    %v4749 = vtanh.pop %v4717
    %v4750 = vtanh.pop %v4718
    %v4751 = vtanh.pop %v4719
    %v4752 = vtanh.pop %v4720
    %v4753 = vtanh.pop %v4721
    %v4754 = vtanh.pop %v4722
    %v4755 = vtanh.pop %v4723
    %v4756 = vtanh.pop %v4724
    %v4757 = vtanh.pop %v4725
    %v4758 = vtanh.pop %v4726
    %v4759 = vtanh.pop %v4727
    %v4760 = vtanh.pop %v4728
    %v4761 = vtanh.pop %v4729
    %v4762 = vtanh.pop %v4730
    %v4763 = vtanh.pop %v4731
    %v4764 = vtanh.pop %v4732
    %v4765 = vtanh.pop %v4733
    %v4766 = vtanh.pop %v4734
    %v4767 = vtanh.pop %v4735
    %v4768 = vtanh.pop %v4736
    %v4769 = vadd.f32 %v4737, 1.0
    %v4770 = vadd.f32 %v4738, 1.0
    %v4771 = vadd.f32 %v4739, 1.0
    %v4772 = vadd.f32 %v4740, 1.0
    %v4773 = vadd.f32 %v4741, 1.0
    %v4774 = vadd.f32 %v4742, 1.0
    %v4775 = vadd.f32 %v4743, 1.0
    %v4776 = vadd.f32 %v4744, 1.0
    %v4777 = vadd.f32 %v4745, 1.0
    %v4778 = vadd.f32 %v4746, 1.0
    %v4779 = vadd.f32 %v4747, 1.0
    %v4780 = vadd.f32 %v4748, 1.0
    %v4781 = vadd.f32 %v4749, 1.0
    %v4782 = vadd.f32 %v4750, 1.0
    %v4783 = vadd.f32 %v4751, 1.0
    %v4784 = vadd.f32 %v4752, 1.0
    %v4785 = vadd.f32 %v4753, 1.0
    %v4786 = vadd.f32 %v4754, 1.0
    %v4787 = vadd.f32 %v4755, 1.0
    %v4788 = vadd.f32 %v4756, 1.0
    %v4789 = vadd.f32 %v4757, 1.0
    %v4790 = vadd.f32 %v4758, 1.0
    %v4791 = vadd.f32 %v4759, 1.0
    %v4792 = vadd.f32 %v4760, 1.0
    %v4793 = vadd.f32 %v4761, 1.0
    %v4794 = vadd.f32 %v4762, 1.0
    %v4795 = vadd.f32 %v4763, 1.0
    %v4796 = vadd.f32 %v4764, 1.0
    %v4797 = vadd.f32 %v4765, 1.0
    %v4798 = vadd.f32 %v4766, 1.0
    %v4799 = vadd.f32 %v4767, 1.0
    %v4800 = vadd.f32 %v4768, 1.0
    %v4801 = vmul.f32 %v4705, %v4769
    %v4802 = vmul.f32 %v4706, %v4770
    %v4803 = vmul.f32 %v4707, %v4771
    %v4804 = vmul.f32 %v4708, %v4772
    %v4805 = vmul.f32 %v4709, %v4773
    %v4806 = vmul.f32 %v4710, %v4774
    %v4807 = vmul.f32 %v4711, %v4775
    %v4808 = vmul.f32 %v4712, %v4776
    %v4809 = vmul.f32 %v4713, %v4777
    %v4810 = vmul.f32 %v4714, %v4778
    %v4811 = vmul.f32 %v4715, %v4779
    %v4812 = vmul.f32 %v4716, %v4780
    %v4813 = vmul.f32 %v4717, %v4781
    %v4814 = vmul.f32 %v4718, %v4782
    %v4815 = vmul.f32 %v4719, %v4783
    %v4816 = vmul.f32 %v4720, %v4784
    %v4817 = vmul.f32 %v4721, %v4785
    %v4818 = vmul.f32 %v4722, %v4786
    %v4819 = vmul.f32 %v4723, %v4787
    %v4820 = vmul.f32 %v4724, %v4788
    %v4821 = vmul.f32 %v4725, %v4789
    %v4822 = vmul.f32 %v4726, %v4790
    %v4823 = vmul.f32 %v4727, %v4791
    %v4824 = vmul.f32 %v4728, %v4792
    %v4825 = vmul.f32 %v4729, %v4793
    %v4826 = vmul.f32 %v4730, %v4794
    %v4827 = vmul.f32 %v4731, %v4795
    %v4828 = vmul.f32 %v4732, %v4796
    %v4829 = vmul.f32 %v4733, %v4797
    %v4830 = vmul.f32 %v4734, %v4798
    %v4831 = vmul.f32 %v4735, %v4799
    %v4832 = vmul.f32 %v4736, %v4800
    %v4833 = vld [vmem:[%s14] sm:$0x1]
    %v4834 = vld [vmem:[#allocation2] sm:$0x1]
    %4836 = vset.pattern.permute.xlu0 0
    %4837 = vperm.xlu0 %4836, %v4834
    %v4838 = vpop.permute.xlu0 %4837
    %v4840 = vlaneseq
    %v4841 = vshrl.u32 %v4840, 7
    %v4842 = vsub.s32 0, %v4841
    %v4843 = vrot.slane %v4838, %v4842
    %v4845 = vsel %vm2600, %v4833, 0
    %4847 = vmatprep.subr.mxu0 %v4802
    %4848 = vmatpush1.msra.mxu0 %v4801
    %4849 = vmatprep.subr.mxu0 %v4810
    %4850 = vmatpush1.msra.mxu0 %v4809
    %4851 = vmatprep.subr.mxu0 %v4818
    %4852 = vmatpush1.msra.mxu0 %v4817
    %4853 = vmatprep.subr.mxu0 %v4826
    %4854 = vmatpush1.msra.mxu0 %v4825
    %4855 = vmatprep.subr.mxu0 0.0
    %4856 = vmatpush1.msra.mxu0 0.0
    %4857 = vmatprep.subr.mxu0 0.0
    %4858 = vmatpush1.msra.mxu0 0.0
    %4859 = vmatprep.subr.mxu0 0.0
    %4860 = vmatpush1.msra.mxu0 0.0
    %4861 = vmatprep.subr.mxu0 0.0
    %4862 = vmatpush1.msra.mxu0 0.0
    %4863 = vmatprep.subr.mxu0 0.0
    %4864 = vmatpush1.msra.mxu0 0.0
    %4865 = vmatprep.subr.mxu0 0.0
    %4866 = vmatpush1.msra.mxu0 0.0
    %4867 = vmatprep.subr.mxu0 0.0
    %4868 = vmatpush1.msra.mxu0 0.0
    %4869 = vmatprep.subr.mxu0 0.0
    %4870 = vmatpush1.msra.mxu0 0.0
    %4871 = vmatprep.subr.mxu0 0.0
    %4872 = vmatpush1.msra.mxu0 0.0
    %4873 = vmatprep.subr.mxu0 0.0
    %4874 = vmatpush1.msra.mxu0 0.0
    %4875 = vmatprep.subr.mxu0 0.0
    %4876 = vmatpush1.msra.mxu0 0.0
    %4877 = vmatprep.subr.mxu0 0.0
    %4878 = vmatpush1.msra.mxu0 0.0
    %4879 = vmatprep.subr.mxu0 0.0
    %4880 = vmatpush1.msra.mxu0 0.0
    %4881 = vmatprep.subr.mxu0 0.0
    %4882 = vmatpush1.msra.mxu0 0.0
    %4883 = vmatprep.subr.mxu0 0.0
    %4884 = vmatpush1.msra.mxu0 0.0
    %4885 = vmatprep.subr.mxu0 0.0
    %4886 = vmatpush1.msra.mxu0 0.0
    %4887 = vmatprep.subr.mxu0 0.0
    %4888 = vmatpush1.msra.mxu0 0.0
    %4889 = vmatprep.subr.mxu0 0.0
    %4890 = vmatpush1.msra.mxu0 0.0
    %4891 = vmatprep.subr.mxu0 0.0
    %4892 = vmatpush1.msra.mxu0 0.0
    %4893 = vmatprep.subr.mxu0 0.0
    %4894 = vmatpush1.msra.mxu0 0.0
    %4895 = vmatprep.subr.mxu0 0.0
    %4896 = vmatpush1.msra.mxu0 0.0
    %4897 = vmatprep.subr.mxu0 0.0
    %4898 = vmatpush1.msra.mxu0 0.0
    %4899 = vmatprep.subr.mxu0 0.0
    %4900 = vmatpush1.msra.mxu0 0.0
    %4901 = vmatprep.subr.mxu0 0.0
    %4902 = vmatpush1.msra.mxu0 0.0
    %4903 = vmatprep.subr.mxu0 0.0
    %4904 = vmatpush1.msra.mxu0 0.0
    %4905 = vmatprep.subr.mxu0 0.0
    %4906 = vmatpush1.msra.mxu0 0.0
    %4907 = vmatprep.subr.mxu0 0.0
    %4908 = vmatpush1.msra.mxu0 0.0
    %4909 = vmatprep.subr.mxu0 0.0
    %4910 = vmatpush1.msra.mxu0 0.0
    %4911 = vmatprep.mubr.f32.mxu0 0.0
    %4912 = vmatmul.mubr.f32.gmra.mrb[0].mxu0 %v4845
    %v4913 = vpop.f32.mrb[0].mxu0
    %v4914 = vadd.f32 %v4843, %v4913
    %v4915 = vpop.f32.mrb[0].mxu0
    %v4916 = vadd.f32 %v4843, %v4915
    %4917 = vdwg.mxu0
    %4918 = vmatprep.subr.mxu0 %v4804
    %4919 = vmatpush1.msra.mxu0 %v4803
    %4920 = vmatprep.subr.mxu0 %v4812
    %4921 = vmatpush1.msra.mxu0 %v4811
    %4922 = vmatprep.subr.mxu0 %v4820
    %4923 = vmatpush1.msra.mxu0 %v4819
    %4924 = vmatprep.subr.mxu0 %v4828
    %4925 = vmatpush1.msra.mxu0 %v4827
    %4926 = vmatprep.subr.mxu0 0.0
    %4927 = vmatpush1.msra.mxu0 0.0
    %4928 = vmatprep.subr.mxu0 0.0
    %4929 = vmatpush1.msra.mxu0 0.0
    %4930 = vmatprep.subr.mxu0 0.0
    %4931 = vmatpush1.msra.mxu0 0.0
    %4932 = vmatprep.subr.mxu0 0.0
    %4933 = vmatpush1.msra.mxu0 0.0
    %4934 = vmatprep.subr.mxu0 0.0
    %4935 = vmatpush1.msra.mxu0 0.0
    %4936 = vmatprep.subr.mxu0 0.0
    %4937 = vmatpush1.msra.mxu0 0.0
    %4938 = vmatprep.subr.mxu0 0.0
    %4939 = vmatpush1.msra.mxu0 0.0
    %4940 = vmatprep.subr.mxu0 0.0
    %4941 = vmatpush1.msra.mxu0 0.0
    %4942 = vmatprep.subr.mxu0 0.0
    %4943 = vmatpush1.msra.mxu0 0.0
    %4944 = vmatprep.subr.mxu0 0.0
    %4945 = vmatpush1.msra.mxu0 0.0
    %4946 = vmatprep.subr.mxu0 0.0
    %4947 = vmatpush1.msra.mxu0 0.0
    %4948 = vmatprep.subr.mxu0 0.0
    %4949 = vmatpush1.msra.mxu0 0.0
    %4950 = vmatprep.subr.mxu0 0.0
    %4951 = vmatpush1.msra.mxu0 0.0
    %4952 = vmatprep.subr.mxu0 0.0
    %4953 = vmatpush1.msra.mxu0 0.0
    %4954 = vmatprep.subr.mxu0 0.0
    %4955 = vmatpush1.msra.mxu0 0.0
    %4956 = vmatprep.subr.mxu0 0.0
    %4957 = vmatpush1.msra.mxu0 0.0
    %4958 = vmatprep.subr.mxu0 0.0
    %4959 = vmatpush1.msra.mxu0 0.0
    %4960 = vmatprep.subr.mxu0 0.0
    %4961 = vmatpush1.msra.mxu0 0.0
    %4962 = vmatprep.subr.mxu0 0.0
    %4963 = vmatpush1.msra.mxu0 0.0
    %4964 = vmatprep.subr.mxu0 0.0
    %4965 = vmatpush1.msra.mxu0 0.0
    %4966 = vmatprep.subr.mxu0 0.0
    %4967 = vmatpush1.msra.mxu0 0.0
    %4968 = vmatprep.subr.mxu0 0.0
    %4969 = vmatpush1.msra.mxu0 0.0
    %4970 = vmatprep.subr.mxu0 0.0
    %4971 = vmatpush1.msra.mxu0 0.0
    %4972 = vmatprep.subr.mxu0 0.0
    %4973 = vmatpush1.msra.mxu0 0.0
    %4974 = vmatprep.subr.mxu0 0.0
    %4975 = vmatpush1.msra.mxu0 0.0
    %4976 = vmatprep.subr.mxu0 0.0
    %4977 = vmatpush1.msra.mxu0 0.0
    %4978 = vmatprep.subr.mxu0 0.0
    %4979 = vmatpush1.msra.mxu0 0.0
    %4980 = vmatprep.subr.mxu0 0.0
    %4981 = vmatpush1.msra.mxu0 0.0
    %4982 = vmatprep.mubr.f32.mxu0 0.0
    %4983 = vmatmul.mubr.f32.gmra.mrb[0].mxu0 %v4845
    %v4984 = vpop.f32.mrb[0].mxu0
    %v4985 = vadd.f32 %v4843, %v4984
    %v4986 = vpop.f32.mrb[0].mxu0
    %v4987 = vadd.f32 %v4843, %v4986
    %4988 = vdwg.mxu0
    %4989 = vmatprep.subr.mxu0 %v4806
    %4990 = vmatpush1.msra.mxu0 %v4805
    %4991 = vmatprep.subr.mxu0 %v4814
    %4992 = vmatpush1.msra.mxu0 %v4813
    %4993 = vmatprep.subr.mxu0 %v4822
    %4994 = vmatpush1.msra.mxu0 %v4821
    %4995 = vmatprep.subr.mxu0 %v4830
    %4996 = vmatpush1.msra.mxu0 %v4829
    %4997 = vmatprep.subr.mxu0 0.0
    %4998 = vmatpush1.msra.mxu0 0.0
    %4999 = vmatprep.subr.mxu0 0.0
    %5000 = vmatpush1.msra.mxu0 0.0
    %5001 = vmatprep.subr.mxu0 0.0
    %5002 = vmatpush1.msra.mxu0 0.0
    %5003 = vmatprep.subr.mxu0 0.0
    %5004 = vmatpush1.msra.mxu0 0.0
    %5005 = vmatprep.subr.mxu0 0.0
    %5006 = vmatpush1.msra.mxu0 0.0
    %5007 = vmatprep.subr.mxu0 0.0
    %5008 = vmatpush1.msra.mxu0 0.0
    %5009 = vmatprep.subr.mxu0 0.0
    %5010 = vmatpush1.msra.mxu0 0.0
    %5011 = vmatprep.subr.mxu0 0.0
    %5012 = vmatpush1.msra.mxu0 0.0
    %5013 = vmatprep.subr.mxu0 0.0
    %5014 = vmatpush1.msra.mxu0 0.0
    %5015 = vmatprep.subr.mxu0 0.0
    %5016 = vmatpush1.msra.mxu0 0.0
    %5017 = vmatprep.subr.mxu0 0.0
    %5018 = vmatpush1.msra.mxu0 0.0
    %5019 = vmatprep.subr.mxu0 0.0
    %5020 = vmatpush1.msra.mxu0 0.0
    %5021 = vmatprep.subr.mxu0 0.0
    %5022 = vmatpush1.msra.mxu0 0.0
    %5023 = vmatprep.subr.mxu0 0.0
    %5024 = vmatpush1.msra.mxu0 0.0
    %5025 = vmatprep.subr.mxu0 0.0
    %5026 = vmatpush1.msra.mxu0 0.0
    %5027 = vmatprep.subr.mxu0 0.0
    %5028 = vmatpush1.msra.mxu0 0.0
    %5029 = vmatprep.subr.mxu0 0.0
    %5030 = vmatpush1.msra.mxu0 0.0
    %5031 = vmatprep.subr.mxu0 0.0
    %5032 = vmatpush1.msra.mxu0 0.0
    %5033 = vmatprep.subr.mxu0 0.0
    %5034 = vmatpush1.msra.mxu0 0.0
    %5035 = vmatprep.subr.mxu0 0.0
    %5036 = vmatpush1.msra.mxu0 0.0
    %5037 = vmatprep.subr.mxu0 0.0
    %5038 = vmatpush1.msra.mxu0 0.0
    %5039 = vmatprep.subr.mxu0 0.0
    %5040 = vmatpush1.msra.mxu0 0.0
    %5041 = vmatprep.subr.mxu0 0.0
    %5042 = vmatpush1.msra.mxu0 0.0
    %5043 = vmatprep.subr.mxu0 0.0
    %5044 = vmatpush1.msra.mxu0 0.0
    %5045 = vmatprep.subr.mxu0 0.0
    %5046 = vmatpush1.msra.mxu0 0.0
    %5047 = vmatprep.subr.mxu0 0.0
    %5048 = vmatpush1.msra.mxu0 0.0
    %5049 = vmatprep.subr.mxu0 0.0
    %5050 = vmatpush1.msra.mxu0 0.0
    %5051 = vmatprep.subr.mxu0 0.0
    %5052 = vmatpush1.msra.mxu0 0.0
    %5053 = vmatprep.mubr.f32.mxu0 0.0
    %5054 = vmatmul.mubr.f32.gmra.mrb[0].mxu0 %v4845
    %v5055 = vpop.f32.mrb[0].mxu0
    %v5056 = vadd.f32 %v4843, %v5055
    %v5057 = vpop.f32.mrb[0].mxu0
    %v5058 = vadd.f32 %v4843, %v5057
    %5059 = vdwg.mxu0
    %5060 = vmatprep.subr.mxu0 %v4808
    %5061 = vmatpush1.msra.mxu0 %v4807
    %5062 = vmatprep.subr.mxu0 %v4816
    %5063 = vmatpush1.msra.mxu0 %v4815
    %5064 = vmatprep.subr.mxu0 %v4824
    %5065 = vmatpush1.msra.mxu0 %v4823
    %5066 = vmatprep.subr.mxu0 %v4832
    %5067 = vmatpush1.msra.mxu0 %v4831
    %5068 = vmatprep.subr.mxu0 0.0
    %5069 = vmatpush1.msra.mxu0 0.0
    %5070 = vmatprep.subr.mxu0 0.0
    %5071 = vmatpush1.msra.mxu0 0.0
    %5072 = vmatprep.subr.mxu0 0.0
    %5073 = vmatpush1.msra.mxu0 0.0
    %5074 = vmatprep.subr.mxu0 0.0
    %5075 = vmatpush1.msra.mxu0 0.0
    %5076 = vmatprep.subr.mxu0 0.0
    %5077 = vmatpush1.msra.mxu0 0.0
    %5078 = vmatprep.subr.mxu0 0.0
    %5079 = vmatpush1.msra.mxu0 0.0
    %5080 = vmatprep.subr.mxu0 0.0
    %5081 = vmatpush1.msra.mxu0 0.0
    %5082 = vmatprep.subr.mxu0 0.0
    %5083 = vmatpush1.msra.mxu0 0.0
    %5084 = vmatprep.subr.mxu0 0.0
    %5085 = vmatpush1.msra.mxu0 0.0
    %5086 = vmatprep.subr.mxu0 0.0
    %5087 = vmatpush1.msra.mxu0 0.0
    %5088 = vmatprep.subr.mxu0 0.0
    %5089 = vmatpush1.msra.mxu0 0.0
    %5090 = vmatprep.subr.mxu0 0.0
    %5091 = vmatpush1.msra.mxu0 0.0
    %5092 = vmatprep.subr.mxu0 0.0
    %5093 = vmatpush1.msra.mxu0 0.0
    %5094 = vmatprep.subr.mxu0 0.0
    %5095 = vmatpush1.msra.mxu0 0.0
    %5096 = vmatprep.subr.mxu0 0.0
    %5097 = vmatpush1.msra.mxu0 0.0
    %5098 = vmatprep.subr.mxu0 0.0
    %5099 = vmatpush1.msra.mxu0 0.0
    %5100 = vmatprep.subr.mxu0 0.0
    %5101 = vmatpush1.msra.mxu0 0.0
    %5102 = vmatprep.subr.mxu0 0.0
    %5103 = vmatpush1.msra.mxu0 0.0
    %5104 = vmatprep.subr.mxu0 0.0
    %5105 = vmatpush1.msra.mxu0 0.0
    %5106 = vmatprep.subr.mxu0 0.0
    %5107 = vmatpush1.msra.mxu0 0.0
    %5108 = vmatprep.subr.mxu0 0.0
    %5109 = vmatpush1.msra.mxu0 0.0
    %5110 = vmatprep.subr.mxu0 0.0
    %5111 = vmatpush1.msra.mxu0 0.0
    %5112 = vmatprep.subr.mxu0 0.0
    %5113 = vmatpush1.msra.mxu0 0.0
    %5114 = vmatprep.subr.mxu0 0.0
    %5115 = vmatpush1.msra.mxu0 0.0
    %5116 = vmatprep.subr.mxu0 0.0
    %5117 = vmatpush1.msra.mxu0 0.0
    %5118 = vmatprep.subr.mxu0 0.0
    %5119 = vmatpush1.msra.mxu0 0.0
    %5120 = vmatprep.subr.mxu0 0.0
    %5121 = vmatpush1.msra.mxu0 0.0
    %5122 = vmatprep.subr.mxu0 0.0
    %5123 = vmatpush1.msra.mxu0 0.0
    %5124 = vmatprep.mubr.f32.mxu0 0.0
    %5125 = vmatmul.mubr.f32.gmra.mrb[0].mxu0 %v4845
    %v5126 = vpop.f32.mrb[0].mxu0
    %v5127 = vadd.f32 %v4843, %v5126
    %v5128 = vpop.f32.mrb[0].mxu0
    %v5129 = vadd.f32 %v4843, %v5128
    %5130 = vdwg.mxu0
    %v5131 = vsel %vm191, %v4914, %v327
    %v5132 = vsel %vm192, %v4916, %v328
    %v5133 = vsel %vm193, %v4985, %v329
    %v5134 = vsel %vm194, %v4987, %v330
    %v5135 = vsel %vm195, %v5056, %v331
    %v5136 = vsel %vm196, %v5058, %v332
    %v5137 = vsel %vm197, %v5127, %v333
    %v5138 = vsel %vm198, %v5129, %v334
    %v5147 = vcombine.low %v5131, %v5132
    %v5148 = vcombine.low %v5133, %v5134
    %v5149 = vcombine.low %v5135, %v5136
    %v5150 = vcombine.low %v5137, %v5138
    %v5152 = vunpack.c.l.s4 1966171168
    %v5153 = vunpack.c.0.s8 %v5152
    %v5154 = vlaneseq
    %v5155 = vshrl.u32 %v5154, 7
    %v5156 = vsub.s32 %v5153, %v5155
    %v5157 = vrot.slane %v5147, %v5156
    %v5159 = vunpack.c.l.s4 1966171168
    %v5160 = vunpack.c.0.s8 %v5159
    %v5161 = vlaneseq
    %v5162 = vshrl.u32 %v5161, 7
    %v5163 = vsub.s32 %v5160, %v5162
    %v5164 = vrot.slane %v5148, %v5163
    %v5166 = vunpack.c.l.s4 1966171168
    %v5167 = vunpack.c.0.s8 %v5166
    %v5168 = vlaneseq
    %v5169 = vshrl.u32 %v5168, 7
    %v5170 = vsub.s32 %v5167, %v5169
    %v5171 = vrot.slane %v5149, %v5170
    %v5173 = vunpack.c.l.s4 1966171168
    %v5174 = vunpack.c.0.s8 %v5173
    %v5175 = vlaneseq
    %v5176 = vshrl.u32 %v5175, 7
    %v5177 = vsub.s32 %v5174, %v5176
    %v5178 = vrot.slane %v5150, %v5177
    %v5179 = vcombine.low %v5157, %v5164
    %v5180 = vcombine.low %v5171, %v5178
    %v5182 = vunpack.c.l.s4 1966171168
    %v5183 = vunpack.c.0.s8 %v5182
    %v5184 = vlaneseq
    %v5185 = vshrl.u32 %v5184, 7
    %v5186 = vsub.s32 %v5183, %v5185
    %v5187 = vrot.slane %v5179, %v5186
    %v5189 = vunpack.c.l.s4 1966171168
    %v5190 = vunpack.c.0.s8 %v5189
    %v5191 = vlaneseq
    %v5192 = vshrl.u32 %v5191, 7
    %v5193 = vsub.s32 %v5190, %v5192
    %v5194 = vrot.slane %v5180, %v5193
    %v5195 = vcombine.low %v5187, %v5194
    %5197 = vst [vmem:[#allocation3] sm:$0xff] %v5195
    // Predicated region
    $region66: #{tpu_custom_call.1} parent=1 // pred_check
      _
    $region67: #{tpu_custom_call.1} parent=1 // pred_check_branch
      %5199 = sbr.rel (0) target = $region69
    $region68: #{tpu_custom_call.1} parent=1 // pred_region
      %s5201 = ssub.s32 128, 128
      %5202 = vsyncadd [#allocation4], %s5201
      %s5204 = sshll.u32 [#allocation3], 4
      %s5205 = int_to_ptr.vmem [resolvable:$true] %s5204
      %5207 = dma.vmem_to_hbm [thread:$0]  %s5205, 128, %s16, [#allocation4]
    $region69: #{tpu_custom_call.1} parent=1 // pred_fallthru
      _
    // Predicated region
    $region70: #{tpu_custom_call.1} parent=1 // pred_check
      _
    $region71: #{tpu_custom_call.1} parent=1 // pred_check_branch
      %5209 = sbr.rel (0) target = $region73
    $region72: #{tpu_custom_call.1} parent=1 // pred_region
      %5210 = dma.done [#allocation4], 128
    $region73: #{tpu_custom_call.1} parent=1 // pred_fallthru
      _
    %5211 = vsyncpa [#allocation4], 1

</llo_original>
